<compile_context>
chip_gen: v6e
topology: v6e:2x2x1
jax: 0.10.0
libtpu: 0.0.40
codegen_flags: <defaults>
</compile_context>

<pallas_src>
import functools

import jax
import jax.numpy as jnp
from jax.experimental import pallas as pl
from jax.experimental.pallas import tpu as pltpu


# --------------------------------------------------------------------------------------
# Kernel 1: encoder (K-reduction over n_items) + fused small middle layers
# --------------------------------------------------------------------------------------
def _encoder_kernel(x_ref, we1_ref, be1_ref, we2_ref, be2_ref, wd1_ref, bd1_ref,
                    d_ref, acc_ref, ss_ref, *, binary_x):
    k = pl.program_id(1)

    @pl.when(k == 0)
    def _():
        acc_ref[...] = jnp.zeros_like(acc_ref)
        ss_ref[...] = jnp.zeros_like(ss_ref)

    x = x_ref[...]                                # [TB, TK] bf16 (binary path) or f32
    xf = x.astype(jnp.float32)
    # Row-wise sum of squares, accumulated in f32 across the n_items (K) grid axis.
    if binary_x:
        # x*x == x for a 0/1 interaction matrix: skip the redundant vmul (VALU),
        # keep only the XLU lane-reduction.
        ss_ref[...] += jnp.sum(xf, axis=1, keepdims=True)
    else:
        ss_ref[...] += jnp.sum(xf * xf, axis=1, keepdims=True)
    # Partial x @ We1, bf16 MXU inputs with f32 accumulation.
    acc_ref[...] += jnp.dot(x.astype(jnp.bfloat16), we1_ref[...],
                            preferred_element_type=jnp.float32)

    @pl.when(k == pl.num_programs(1) - 1)
    def _():
        # (x / max(||x||, eps)) @ W == (x @ W) / max(||x||, eps)
        inv_norm = pl.reciprocal(
            jnp.maximum(jnp.sqrt(ss_ref[...]), 1e-12), approx=False)  # exact; finalize-only
        h = jnp.tanh(acc_ref[...] * inv_norm + be1_ref[...])          # [TB, hidden]
        z = jnp.tanh(jnp.dot(h.astype(jnp.bfloat16), we2_ref[...],
                             preferred_element_type=jnp.float32) + be2_ref[...])
        d = jnp.tanh(jnp.dot(z.astype(jnp.bfloat16), wd1_ref[...],
                             preferred_element_type=jnp.float32) + bd1_ref[...])
        d_ref[...] = d.astype(d_ref.dtype)


# --------------------------------------------------------------------------------------
# Kernel 2: decoder output layer (lane-dense N tiling over n_items)
# --------------------------------------------------------------------------------------
def _decoder_kernel(d_ref, wd2_ref, bd2_ref, out_ref):
    out_ref[...] = (
        jnp.dot(d_ref[...], wd2_ref[...], preferred_element_type=jnp.float32)
        + bd2_ref[...]).astype(out_ref.dtype)


def multidae_forward(x, params, *, tb=None, tk=4096, tn=2048,
                     binary_x=True, out_dtype=jnp.float32):
    """x: [B, n_items].  params: bf16 weights pre-transposed to [in, out], f32 biases [1, out].

    binary_x=True streams X in bf16 (exact for 0/1 implicit feedback) and uses sum(x)
    instead of sum(x*x) for the row norms.  Set binary_x=False for count/rating inputs
    (X stays in its original dtype for the norm; only the MXU operand is cast to bf16).
    """
    B, n_items = x.shape
    hidden = params["we1"].shape[1]
    latent = params["we2"].shape[1]

    if tb is None:
        # v5e/v6e (single TC): larger tb -> fewer We1 re-streams; tb>=256 fills v6e/v7x MXU.
        # v7x (2 TCs): keep B // tb >= 2 so the "parallel" batch axis can be sharded.
        tb = min(B, 512)
    tb = min(tb, B)
    tk = min(tk, n_items)
    tn = min(tn, n_items)
    assert B % tb == 0 and n_items % tk == 0 and n_items % tn == 0, (
        "B and n_items must be divisible by the chosen tiles")

    if binary_x:
        # Exact for a 0/1 interaction matrix; halves kernel-1's dominant HBM stream and
        # halves the double-buffered X tile in VMEM.
        x = x.astype(jnp.bfloat16)

    enc_kernel = functools.partial(_encoder_kernel, binary_x=binary_x)

    # ---- Kernel 1: encoder + small middle layers (K-reduction over n_items) ----------
    d = pl.pallas_call(
        enc_kernel,
        out_shape=jax.ShapeDtypeStruct((B, hidden), jnp.bfloat16),
        grid_spec=pltpu.PrefetchScalarGridSpec(
            num_scalar_prefetch=0,
            grid=(B // tb, n_items // tk),
            in_specs=[
                pl.BlockSpec((tb, tk), lambda b, k: (b, k)),          # X tile (bf16 stream)
                pl.BlockSpec((tk, hidden), lambda b, k: (k, 0)),      # We1 tile (streamed)
                pl.BlockSpec((1, hidden), lambda b, k: (0, 0)),       # be1
                pl.BlockSpec((hidden, latent), lambda b, k: (0, 0)),  # We2 (VMEM-resident)
                pl.BlockSpec((1, latent), lambda b, k: (0, 0)),       # be2
                pl.BlockSpec((latent, hidden), lambda b, k: (0, 0)),  # Wd1 (VMEM-resident)
                pl.BlockSpec((1, hidden), lambda b, k: (0, 0)),       # bd1
            ],
            out_specs=pl.BlockSpec((tb, hidden), lambda b, k: (b, 0)),
            scratch_shapes=[
                pltpu.VMEM((tb, hidden), jnp.float32),  # x @ We1 accumulator
                pltpu.VMEM((tb, 1), jnp.float32),       # row sum-of-squares accumulator
            ]),
        compiler_params=pltpu.CompilerParams(
            dimension_semantics=("parallel", "arbitrary"),
            vmem_limit_bytes=64 << 20),
    )(x, params["we1"], params["be1"], params["we2"], params["be2"],
      params["wd1"], params["bd1"])

    # ---- Kernel 2: decoder output layer (Wd2 on the outer axis -> streamed once) -----
    out = pl.pallas_call(
        _decoder_kernel,
        out_shape=jax.ShapeDtypeStruct((B, n_items), out_dtype),
        grid_spec=pltpu.PrefetchScalarGridSpec(
            num_scalar_prefetch=0,
            grid=(n_items // tn, B // tb),
            in_specs=[
                pl.BlockSpec((tb, hidden), lambda n, b: (b, 0)),      # d tile (small, re-streamed)
                pl.BlockSpec((hidden, tn), lambda n, b: (0, n)),      # Wd2 tile (streamed once)
                pl.BlockSpec((1, tn), lambda n, b: (0, n)),           # bd2 tile
            ],
            out_specs=pl.BlockSpec((tb, tn), lambda n, b: (b, n)),    # lane-dense f32/bf16 write
        ),
        compiler_params=pltpu.CompilerParams(
            dimension_semantics=("parallel", "parallel"),
            vmem_limit_bytes=64 << 20),
    )(d, params["wd2"], params["bd2"])

    return out


# --------------------------------------------------------------------------------------
# Parameter construction matching the PyTorch module's init
# --------------------------------------------------------------------------------------
def _xavier_uniform(key, fan_in, fan_out):
    limit = jnp.sqrt(6.0 / (fan_in + fan_out))
    return jax.random.uniform(key, (fan_in, fan_out), jnp.float32, -limit, limit)


def _kaiming_uniform_linear(key, fan_in, fan_out):
    # default nn.Linear init (kaiming_uniform a=sqrt(5)) -> U(-1/sqrt(fan_in), 1/sqrt(fan_in))
    bound = 1.0 / jnp.sqrt(fan_in)
    return jax.random.uniform(key, (fan_in, fan_out), jnp.float32, -bound, bound)


def make_params(key, n_items, hidden, latent):
    ks = jax.random.split(key, 8)
    # DAEEncoder: init_weights -> xavier_uniform weights, bias ~ N(0, 0.001)
    we1 = _xavier_uniform(ks[0], n_items, hidden)
    be1 = 0.001 * jax.random.normal(ks[1], (1, hidden), jnp.float32)
    we2 = _xavier_uniform(ks[2], hidden, latent)
    be2 = 0.001 * jax.random.normal(ks[3], (1, latent), jnp.float32)
    # Decoder: default nn.Linear init
    wd1 = _kaiming_uniform_linear(ks[4], latent, hidden)
    bd1 = (1.0 / jnp.sqrt(latent)) * (
        2.0 * jax.random.uniform(ks[5], (1, hidden), jnp.float32) - 1.0)
    wd2 = _kaiming_uniform_linear(ks[6], hidden, n_items)
    bd2 = (1.0 / jnp.sqrt(hidden)) * (
        2.0 * jax.random.uniform(ks[7], (1, n_items), jnp.float32) - 1.0)
    # Weights stored as bf16 in HBM (halves the dominant We1/Wd2 traffic); biases stay f32.
    # TODO(synk): on v7x, fp8 storage (+ per-tensor scale) for We1/Wd2 would halve this again.
    return dict(
        we1=we1.astype(jnp.bfloat16), be1=be1,
        we2=we2.astype(jnp.bfloat16), be2=be2,
        wd1=wd1.astype(jnp.bfloat16), bd1=bd1,
        wd2=wd2.astype(jnp.bfloat16), bd2=bd2,
    )


def _reference_forward(x, p):
    we1 = p["we1"].astype(jnp.float32)
    we2 = p["we2"].astype(jnp.float32)
    wd1 = p["wd1"].astype(jnp.float32)
    wd2 = p["wd2"].astype(jnp.float32)
    norm = jnp.sqrt(jnp.sum(x * x, axis=1, keepdims=True))
    h = x / jnp.maximum(norm, 1e-12)
    h = jnp.tanh(h @ we1 + p["be1"])
    z = jnp.tanh(h @ we2 + p["be2"])
    d = jnp.tanh(z @ wd1 + p["bd1"])
    return d @ wd2 + p["bd2"]


if __name__ == "__main__":
    # Small MultiDAE-consistent shapes: q_dims=[n_items, hidden, latent], p_dims reversed.
    B, n_items, hidden, latent = 256, 1024, 256, 128

    key = jax.random.PRNGKey(0)
    kx, kp = jax.random.split(key)
    # Implicit-feedback-style binary user-item interaction matrix.
    x = jax.random.bernoulli(kx, 0.1, (B, n_items)).astype(jnp.float32)
    params = make_params(kp, n_items, hidden, latent)

    out = multidae_forward(x, params)
    jax.block_until_ready(out)

    ref = _reference_forward(x, params)
    max_err = jnp.max(jnp.abs(out - ref))
    assert jnp.allclose(out, ref, atol=1e-2, rtol=2e-2), f"max abs err = {max_err}"

    print("KERNEL_OK")
</pallas_src>

<mosaic_0001>
module attributes {stable_mosaic.version = 11 : i64} {
  func.func @_encoder_kernel(%arg0: i32, %arg1: i32, %arg2: memref<256x1024xbf16, #tpu.memory_space<vmem>>, %arg3: memref<1024x256xbf16, #tpu.memory_space<vmem>>, %arg4: memref<1x256xf32, #tpu.memory_space<vmem>>, %arg5: memref<256x128xbf16, #tpu.memory_space<vmem>>, %arg6: memref<1x128xf32, #tpu.memory_space<vmem>>, %arg7: memref<128x256xbf16, #tpu.memory_space<vmem>>, %arg8: memref<1x256xf32, #tpu.memory_space<vmem>>, %arg9: memref<256x256xbf16, #tpu.memory_space<vmem>>, %arg10: memref<256x256xf32, #tpu.memory_space<vmem>>, %arg11: memref<256x1xf32, #tpu.memory_space<vmem>>) attributes {dimension_semantics = [#tpu.dimension_semantics<parallel>, #tpu.dimension_semantics<arbitrary>], iteration_bounds = array<i64: 1, 1>, scalar_prefetch = 0 : i64, scratch_operands = 2 : i64, tpu.core_type = #tpu.core_type<tc>, window_params = [{transform_indices = @transform_0, window_bounds = array<i64: 256, 1024>}, {transform_indices = @transform_1, window_bounds = array<i64: 1024, 256>}, {pipeline_mode = #tpu.pipeline_mode<synchronous>, transform_indices = @transform_2, window_bounds = array<i64: 1, 256>}, {pipeline_mode = #tpu.pipeline_mode<synchronous>, transform_indices = @transform_3, window_bounds = array<i64: 256, 128>}, {pipeline_mode = #tpu.pipeline_mode<synchronous>, transform_indices = @transform_4, window_bounds = array<i64: 1, 128>}, {pipeline_mode = #tpu.pipeline_mode<synchronous>, transform_indices = @transform_5, window_bounds = array<i64: 128, 256>}, {pipeline_mode = #tpu.pipeline_mode<synchronous>, transform_indices = @transform_6, window_bounds = array<i64: 1, 256>}, {transform_indices = @transform_7, window_bounds = array<i64: 256, 256>}]} {
    %c0_i32 = arith.constant 0 : i32
    %0 = arith.cmpi eq, %arg1, %c0_i32 : i32
    %1 = arith.extui %0 : i1 to i32
    %c0_i32_0 = arith.constant 0 : i32
    %2 = arith.cmpi ne, %1, %c0_i32_0 : i32
    scf.if %2 {
      %cst_15 = arith.constant 0.000000e+00 : f32
      %18 = vector.broadcast %cst_15 : f32 to vector<256x256xf32>
      %c0_16 = arith.constant 0 : index
      %c0_17 = arith.constant 0 : index
      %19 = vector.load %arg10[%c0_16, %c0_17] : memref<256x256xf32, #tpu.memory_space<vmem>>, vector<256x256xf32>
      tpu.vector_store %arg10[%c0_16, %c0_17], %18 {strides = array<i32>} : memref<256x256xf32, #tpu.memory_space<vmem>>, vector<256x256xf32>,
      %cst_18 = arith.constant 0.000000e+00 : f32
      %20 = vector.broadcast %cst_18 : f32 to vector<256x1xf32>
      %c0_19 = arith.constant 0 : index
      %c0_20 = arith.constant 0 : index
      %21 = vector.load %arg11[%c0_19, %c0_20] : memref<256x1xf32, #tpu.memory_space<vmem>>, vector<256x1xf32>
      tpu.vector_store %arg11[%c0_19, %c0_20], %20 {strides = array<i32>} : memref<256x1xf32, #tpu.memory_space<vmem>>, vector<256x1xf32>,
    } else {
    }
    %c0 = arith.constant 0 : index
    %c0_1 = arith.constant 0 : index
    %3 = vector.load %arg2[%c0, %c0_1] : memref<256x1024xbf16, #tpu.memory_space<vmem>>, vector<256x1024xbf16>
    %4 = arith.extf %3 : vector<256x1024xbf16> to vector<256x1024xf32>
    %c0_2 = arith.constant 0 : index
    %c0_3 = arith.constant 0 : index
    %5 = vector.load %arg11[%c0_2, %c0_3] : memref<256x1xf32, #tpu.memory_space<vmem>>, vector<256x1xf32>
    %cst = arith.constant dense<0.000000e+00> : vector<256xf32>
    %6 = vector.multi_reduction <add>, %4, %cst [1] : vector<256x1024xf32> to vector<256xf32>
    %7 = vector.shape_cast %6 : vector<256xf32> to vector<256x1xf32>
    %8 = arith.addf %5, %7 : vector<256x1xf32>
    %c0_4 = arith.constant 0 : index
    %c0_5 = arith.constant 0 : index
    %9 = vector.load %arg11[%c0_4, %c0_5] : memref<256x1xf32, #tpu.memory_space<vmem>>, vector<256x1xf32>
    tpu.vector_store %arg11[%c0_4, %c0_5], %8 {strides = array<i32>} : memref<256x1xf32, #tpu.memory_space<vmem>>, vector<256x1xf32>,
    %c0_6 = arith.constant 0 : index
    %c0_7 = arith.constant 0 : index
    %10 = vector.load %arg10[%c0_6, %c0_7] : memref<256x256xf32, #tpu.memory_space<vmem>>, vector<256x256xf32>
    %c0_8 = arith.constant 0 : index
    %c0_9 = arith.constant 0 : index
    %11 = vector.load %arg3[%c0_8, %c0_9] : memref<1024x256xbf16, #tpu.memory_space<vmem>>, vector<1024x256xbf16>
    %cst_10 = arith.constant dense<0.000000e+00> : vector<256x256xf32>
    %12 = tpu.matmul %3, %11, %cst_10 {dimension_numbers = #tpu.dot_dimension_numbers<[1], [0], [0], [1], [0, 0, 1, 1], [], []>} : vector<256x1024xbf16>, vector<1024x256xbf16>, vector<256x256xf32> -> vector<256x256xf32>
    %13 = arith.addf %10, %12 : vector<256x256xf32>
    %c0_11 = arith.constant 0 : index
    %c0_12 = arith.constant 0 : index
    %14 = vector.load %arg10[%c0_11, %c0_12] : memref<256x256xf32, #tpu.memory_space<vmem>>, vector<256x256xf32>
    tpu.vector_store %arg10[%c0_11, %c0_12], %13 {strides = array<i32>} : memref<256x256xf32, #tpu.memory_space<vmem>>, vector<256x256xf32>,
    %c0_i32_13 = arith.constant 0 : i32
    %15 = arith.cmpi eq, %arg1, %c0_i32_13 : i32
    %16 = arith.extui %15 : i1 to i32
    %c0_i32_14 = arith.constant 0 : i32
    %17 = arith.cmpi ne, %16, %c0_i32_14 : i32
    scf.if %17 {
      %c0_15 = arith.constant 0 : index
      %c0_16 = arith.constant 0 : index
      %18 = vector.load %arg11[%c0_15, %c0_16] : memref<256x1xf32, #tpu.memory_space<vmem>>, vector<256x1xf32>
      %19 = math.sqrt %18 : vector<256x1xf32>
      %cst_17 = arith.constant 9.99999996E-13 : f32
      %20 = vector.broadcast %cst_17 : f32 to vector<256x1xf32>
      %21 = arith.maximumf %19, %20 : vector<256x1xf32>
      %22 = tpu.reciprocal %21 : vector<256x1xf32> -> vector<256x1xf32>
      %c0_18 = arith.constant 0 : index
      %c0_19 = arith.constant 0 : index
      %23 = vector.load %arg10[%c0_18, %c0_19] : memref<256x256xf32, #tpu.memory_space<vmem>>, vector<256x256xf32>
      %24 = vector.broadcast %22 : vector<256x1xf32> to vector<256x256xf32>
      %25 = arith.mulf %23, %24 : vector<256x256xf32>
      %c0_20 = arith.constant 0 : index
      %c0_21 = arith.constant 0 : index
      %26 = vector.load %arg4[%c0_20, %c0_21] : memref<1x256xf32, #tpu.memory_space<vmem>>, vector<1x256xf32>
      %27 = vector.broadcast %26 : vector<1x256xf32> to vector<256x256xf32>
      %28 = arith.addf %25, %27 : vector<256x256xf32>
      %29 = math.tanh %28 : vector<256x256xf32>
      %30 = arith.truncf %29 : vector<256x256xf32> to vector<256x256xbf16>
      %c0_22 = arith.constant 0 : index
      %c0_23 = arith.constant 0 : index
      %31 = vector.load %arg5[%c0_22, %c0_23] : memref<256x128xbf16, #tpu.memory_space<vmem>>, vector<256x128xbf16>
      %cst_24 = arith.constant dense<0.000000e+00> : vector<256x128xf32>
      %32 = tpu.matmul %30, %31, %cst_24 {dimension_numbers = #tpu.dot_dimension_numbers<[1], [0], [0], [1], [0, 0, 1, 1], [], []>} : vector<256x256xbf16>, vector<256x128xbf16>, vector<256x128xf32> -> vector<256x128xf32>
      %c0_25 = arith.constant 0 : index
      %c0_26 = arith.constant 0 : index
      %33 = vector.load %arg6[%c0_25, %c0_26] : memref<1x128xf32, #tpu.memory_space<vmem>>, vector<1x128xf32>
      %34 = vector.broadcast %33 : vector<1x128xf32> to vector<256x128xf32>
      %35 = arith.addf %32, %34 : vector<256x128xf32>
      %36 = math.tanh %35 : vector<256x128xf32>
      %37 = arith.truncf %36 : vector<256x128xf32> to vector<256x128xbf16>
      %c0_27 = arith.constant 0 : index
      %c0_28 = arith.constant 0 : index
      %38 = vector.load %arg7[%c0_27, %c0_28] : memref<128x256xbf16, #tpu.memory_space<vmem>>, vector<128x256xbf16>
      %cst_29 = arith.constant dense<0.000000e+00> : vector<256x256xf32>
      %39 = tpu.matmul %37, %38, %cst_29 {dimension_numbers = #tpu.dot_dimension_numbers<[1], [0], [0], [1], [0, 0, 1, 1], [], []>} : vector<256x128xbf16>, vector<128x256xbf16>, vector<256x256xf32> -> vector<256x256xf32>
      %c0_30 = arith.constant 0 : index
      %c0_31 = arith.constant 0 : index
      %40 = vector.load %arg8[%c0_30, %c0_31] : memref<1x256xf32, #tpu.memory_space<vmem>>, vector<1x256xf32>
      %41 = vector.broadcast %40 : vector<1x256xf32> to vector<256x256xf32>
      %42 = arith.addf %39, %41 : vector<256x256xf32>
      %43 = math.tanh %42 : vector<256x256xf32>
      %44 = arith.truncf %43 : vector<256x256xf32> to vector<256x256xbf16>
      %c0_32 = arith.constant 0 : index
      %c0_33 = arith.constant 0 : index
      %45 = vector.load %arg9[%c0_32, %c0_33] : memref<256x256xbf16, #tpu.memory_space<vmem>>, vector<256x256xbf16>
      tpu.vector_store %arg9[%c0_32, %c0_33], %44 {strides = array<i32>} : memref<256x256xbf16, #tpu.memory_space<vmem>>, vector<256x256xbf16>,
    } else {
    }
    return
  }
  func.func @transform_0(%arg0: i32, %arg1: i32) -> (i32, i32) {
    %c0_i32 = arith.constant 0 : i32
    return %arg0, %arg1 : i32, i32
  }
  func.func @transform_1(%arg0: i32, %arg1: i32) -> (i32, i32) {
    %c0_i32 = arith.constant 0 : i32
    %c0_i32_0 = arith.constant 0 : i32
    return %arg1, %c0_i32 : i32, i32
  }
  func.func @transform_2(%arg0: i32, %arg1: i32) -> (i32, i32) {
    %c0_i32 = arith.constant 0 : i32
    %c0_i32_0 = arith.constant 0 : i32
    %c0_i32_1 = arith.constant 0 : i32
    return %c0_i32, %c0_i32_0 : i32, i32
  }
  func.func @transform_3(%arg0: i32, %arg1: i32) -> (i32, i32) {
    %c0_i32 = arith.constant 0 : i32
    %c0_i32_0 = arith.constant 0 : i32
    %c0_i32_1 = arith.constant 0 : i32
    return %c0_i32, %c0_i32_0 : i32, i32
  }
  func.func @transform_4(%arg0: i32, %arg1: i32) -> (i32, i32) {
    %c0_i32 = arith.constant 0 : i32
    %c0_i32_0 = arith.constant 0 : i32
    %c0_i32_1 = arith.constant 0 : i32
    return %c0_i32, %c0_i32_0 : i32, i32
  }
  func.func @transform_5(%arg0: i32, %arg1: i32) -> (i32, i32) {
    %c0_i32 = arith.constant 0 : i32
    %c0_i32_0 = arith.constant 0 : i32
    %c0_i32_1 = arith.constant 0 : i32
    return %c0_i32, %c0_i32_0 : i32, i32
  }
  func.func @transform_6(%arg0: i32, %arg1: i32) -> (i32, i32) {
    %c0_i32 = arith.constant 0 : i32
    %c0_i32_0 = arith.constant 0 : i32
    %c0_i32_1 = arith.constant 0 : i32
    return %c0_i32, %c0_i32_0 : i32, i32
  }
  func.func @transform_7(%arg0: i32, %arg1: i32) -> (i32, i32) {
    %c0_i32 = arith.constant 0 : i32
    %c0_i32_0 = arith.constant 0 : i32
    return %arg0, %c0_i32 : i32, i32
  }
}

</mosaic_0001>

<llo_original>
// kernel: tpu_custom_call.1
$region0: #{tpu_custom_call.1}
  #allocation0 [shape = 'u32[]', space=smem, size = 0x4, offset = 0x4, fixed_abs, tag = 'smem constant byte address 0x4 - core index']
  #allocation1 [shape = 'u32[144,128]{1,0:T(1,128)}', space=vmem, size = 0x12000, scoped, tag = 'internal scratch']
  #allocation2 [shape = 'f32[256,256]{1,0:T(8,128)}', space=vmem, size = 0x40000, scoped, tag = 'scratch operand']
  #allocation3 [shape = 'f32[256,1]{1,0:T(8,128)}', space=vmem, size = 0x20000, scoped, tag = 'scratch operand']
  %s0 = inlined_call_operand.hbm [shape: bf16[256,1024], index: 0, kind: input, shape index: {}]
  %s1 = inlined_call_operand.hbm [shape: bf16[1024,256], index: 1, kind: input, shape index: {}]
  %s2 = inlined_call_operand.vmem [shape: f32[1,256], index: 2, kind: input, shape index: {}]
  %s3 = inlined_call_operand.hbm [shape: bf16[256,128], index: 3, kind: input, shape index: {}]
  %s4 = inlined_call_operand.vmem [shape: f32[1,128], index: 4, kind: input, shape index: {}]
  %s5 = inlined_call_operand.hbm [shape: bf16[128,256], index: 5, kind: input, shape index: {}]
  %s6 = inlined_call_operand.vmem [shape: f32[1,256], index: 6, kind: input, shape index: {}]
  %s7 = inlined_call_operand.hbm [shape: bf16[256,256], index: 7, kind: output, shape index: {}]
  %s8 = sld [smem:[#allocation0]]
  $region62: #{tpu_custom_call.1} parent=0
    _
  %s10 = ssub.s32 1, %s8
  %s11 = scalar_select 0, %s10, %s8
  $region1: #{tpu_custom_call.1} parent=0
    #allocation4 [shape = 'u8[524288]{0}', space=vmem, size = 0x80000, scoped, tag = 'input window, operand 0, single buffered']
    #allocation5 [shape = 's32[1]{0}', space=sflag, size = 0x4, scoped, tag = 'scoped memory for tpu_custom_call.1']
    #allocation6 [shape = 's32[1]{0}', space=sflag, size = 0x4, scoped, tag = 'scoped memory for tpu_custom_call.1']
    #allocation7 [shape = 'u8[524288]{0}', space=vmem, size = 0x80000, scoped, tag = 'input window, operand 1, single buffered']
    #allocation8 [shape = 's32[1]{0}', space=sflag, size = 0x4, scoped, tag = 'scoped memory for tpu_custom_call.1']
    #allocation9 [shape = 'u8[65536]{0}', space=vmem, size = 0x10000, scoped, tag = 'input window, operand 3, single buffered']
    #allocation10 [shape = 'u8[65536]{0}', space=vmem, size = 0x10000, scoped, tag = 'input window, operand 5, single buffered']
    #allocation11 [shape = 's32[1]{0}', space=sflag, size = 0x4, scoped, tag = 'scoped memory for tpu_custom_call.1']
    #allocation12 [shape = 'u8[131072]{0}', space=vmem, size = 0x20000, scoped, tag = 'output window, operand 0, single buffered']
    %12 = vsyncpa [#allocation5], 0
    %13 = vsyncpa [#allocation8], 0
    %14 = vsyncpa [#allocation11], 0
    %15 = vsyncpa [#allocation6], 0
    // Predicated region
    $region2: #{tpu_custom_call.1} parent=1 // pred_check
      _
    $region3: #{tpu_custom_call.1} parent=1 // pred_check_branch
      %17 = sbr.rel (0) target = $region5
    $region4: #{tpu_custom_call.1} parent=1 // pred_region
      %s19 = ssub.s32 16384, 16384
      %20 = vsyncadd [#allocation5], %s19
      %s21 = sshll.u32 [#allocation4], 4
      %s22 = int_to_ptr.vmem [resolvable:$true] %s21
      %27 = dma.hbm_to_vmem [thread:$0]  %s0, 16384, %s22, [#allocation5], 512, 512, 32
    $region5: #{tpu_custom_call.1} parent=1 // pred_fallthru
      _
    // Predicated region
    $region6: #{tpu_custom_call.1} parent=1 // pred_check
      _
    $region7: #{tpu_custom_call.1} parent=1 // pred_check_branch
      %29 = sbr.rel (0) target = $region9
    $region8: #{tpu_custom_call.1} parent=1 // pred_region
      %s31 = ssub.s32 16384, 16384
      %32 = vsyncadd [#allocation8], %s31
      %s33 = sshll.u32 [#allocation7], 4
      %s34 = int_to_ptr.vmem [resolvable:$true] %s33
      %39 = dma.hbm_to_vmem [thread:$0]  %s1, 16384, %s34, [#allocation8], 128, 128, 8
    $region9: #{tpu_custom_call.1} parent=1 // pred_fallthru
      _
    // Predicated region
    $region10: #{tpu_custom_call.1} parent=1 // pred_check
      _
    $region11: #{tpu_custom_call.1} parent=1 // pred_check_branch
      %41 = sbr.rel (0) target = $region13
    $region12: #{tpu_custom_call.1} parent=1 // pred_region
      _
    $region13: #{tpu_custom_call.1} parent=1 // pred_fallthru
      _
    // Predicated region
    $region14: #{tpu_custom_call.1} parent=1 // pred_check
      _
    $region15: #{tpu_custom_call.1} parent=1 // pred_check_branch
      %43 = sbr.rel (0) target = $region17
    $region16: #{tpu_custom_call.1} parent=1 // pred_region
      %s45 = ssub.s32 2048, 2048
      %46 = vsyncadd [#allocation8], %s45
      %s47 = sshll.u32 [#allocation9], 4
      %s48 = int_to_ptr.vmem [resolvable:$true] %s47
      %53 = dma.hbm_to_vmem [thread:$0]  %s3, 2048, %s48, [#allocation8], 64, 64, 4
    $region17: #{tpu_custom_call.1} parent=1 // pred_fallthru
      _
    // Predicated region
    $region18: #{tpu_custom_call.1} parent=1 // pred_check
      _
    $region19: #{tpu_custom_call.1} parent=1 // pred_check_branch
      %55 = sbr.rel (0) target = $region21
    $region20: #{tpu_custom_call.1} parent=1 // pred_region
      _
    $region21: #{tpu_custom_call.1} parent=1 // pred_fallthru
      _
    // Predicated region
    $region22: #{tpu_custom_call.1} parent=1 // pred_check
      _
    $region23: #{tpu_custom_call.1} parent=1 // pred_check_branch
      %57 = sbr.rel (0) target = $region25
    $region24: #{tpu_custom_call.1} parent=1 // pred_region
      %s59 = ssub.s32 2048, 2048
      %60 = vsyncadd [#allocation11], %s59
      %s61 = sshll.u32 [#allocation10], 4
      %s62 = int_to_ptr.vmem [resolvable:$true] %s61
      %67 = dma.hbm_to_vmem [thread:$0]  %s5, 2048, %s62, [#allocation11], 128, 128, 8
    $region25: #{tpu_custom_call.1} parent=1 // pred_fallthru
      _
    // Predicated region
    $region26: #{tpu_custom_call.1} parent=1 // pred_check
      _
    $region27: #{tpu_custom_call.1} parent=1 // pred_check_branch
      %69 = sbr.rel (0) target = $region29
    $region28: #{tpu_custom_call.1} parent=1 // pred_region
      _
    $region29: #{tpu_custom_call.1} parent=1 // pred_fallthru
      _
    // Predicated region
    $region30: #{tpu_custom_call.1} parent=1 // pred_check
      _
    $region31: #{tpu_custom_call.1} parent=1 // pred_check_branch
      %71 = sbr.rel (0) target = $region33
    $region32: #{tpu_custom_call.1} parent=1 // pred_region
      %72 = dma.done [#allocation5], 16384
    $region33: #{tpu_custom_call.1} parent=1 // pred_fallthru
      _
    // Predicated region
    $region34: #{tpu_custom_call.1} parent=1 // pred_check
      _
    $region35: #{tpu_custom_call.1} parent=1 // pred_check_branch
      %74 = sbr.rel (0) target = $region37
    $region36: #{tpu_custom_call.1} parent=1 // pred_region
      %75 = dma.done [#allocation8], 16384
    $region37: #{tpu_custom_call.1} parent=1 // pred_fallthru
      _
    // Predicated region
    $region38: #{tpu_custom_call.1} parent=1 // pred_check
      _
    $region39: #{tpu_custom_call.1} parent=1 // pred_check_branch
      %77 = sbr.rel (0) target = $region41
    $region40: #{tpu_custom_call.1} parent=1 // pred_region
      %78 = dma.done [#allocation8], 2048
    $region41: #{tpu_custom_call.1} parent=1 // pred_fallthru
      _
    // Predicated region
    $region42: #{tpu_custom_call.1} parent=1 // pred_check
      _
    $region43: #{tpu_custom_call.1} parent=1 // pred_check_branch
      %80 = sbr.rel (0) target = $region45
    $region44: #{tpu_custom_call.1} parent=1 // pred_region
      %81 = dma.done [#allocation11], 2048
    $region45: #{tpu_custom_call.1} parent=1 // pred_fallthru
      _
    %p83 = scmp.eq.s32.totalorder 0, 0
    // Predicated region
    $region46: #{tpu_custom_call.1} parent=1 // pred_check
      %p84 = pneg %p83
    $region47: #{tpu_custom_call.1} parent=1 // pred_check_branch
      %86 = sbr.rel (%p84) target = $region49
    $region48: #{tpu_custom_call.1} parent=1 // pred_region
      %87 = vst [vmem:[#allocation2] sm:$0xff] 0.0
      %88 = vst [vmem:[#allocation2 + $0x8] sm:$0xff] 0.0
      %89 = vst [vmem:[#allocation2 + $0x10] sm:$0xff] 0.0
      %90 = vst [vmem:[#allocation2 + $0x18] sm:$0xff] 0.0
      %91 = vst [vmem:[#allocation2 + $0x20] sm:$0xff] 0.0
      %92 = vst [vmem:[#allocation2 + $0x28] sm:$0xff] 0.0
      %93 = vst [vmem:[#allocation2 + $0x30] sm:$0xff] 0.0
      %94 = vst [vmem:[#allocation2 + $0x38] sm:$0xff] 0.0
      %95 = vst [vmem:[#allocation2 + $0x40] sm:$0xff] 0.0
      %96 = vst [vmem:[#allocation2 + $0x48] sm:$0xff] 0.0
      %97 = vst [vmem:[#allocation2 + $0x50] sm:$0xff] 0.0
      %98 = vst [vmem:[#allocation2 + $0x58] sm:$0xff] 0.0
      %99 = vst [vmem:[#allocation2 + $0x60] sm:$0xff] 0.0
      %100 = vst [vmem:[#allocation2 + $0x68] sm:$0xff] 0.0
      %101 = vst [vmem:[#allocation2 + $0x70] sm:$0xff] 0.0
      %102 = vst [vmem:[#allocation2 + $0x78] sm:$0xff] 0.0
      %103 = vst [vmem:[#allocation2 + $0x80] sm:$0xff] 0.0
      %104 = vst [vmem:[#allocation2 + $0x88] sm:$0xff] 0.0
      %105 = vst [vmem:[#allocation2 + $0x90] sm:$0xff] 0.0
      %106 = vst [vmem:[#allocation2 + $0x98] sm:$0xff] 0.0
      %107 = vst [vmem:[#allocation2 + $0xa0] sm:$0xff] 0.0
      %108 = vst [vmem:[#allocation2 + $0xa8] sm:$0xff] 0.0
      %109 = vst [vmem:[#allocation2 + $0xb0] sm:$0xff] 0.0
      %110 = vst [vmem:[#allocation2 + $0xb8] sm:$0xff] 0.0
      %111 = vst [vmem:[#allocation2 + $0xc0] sm:$0xff] 0.0
      %112 = vst [vmem:[#allocation2 + $0xc8] sm:$0xff] 0.0
      %113 = vst [vmem:[#allocation2 + $0xd0] sm:$0xff] 0.0
      %114 = vst [vmem:[#allocation2 + $0xd8] sm:$0xff] 0.0
      %115 = vst [vmem:[#allocation2 + $0xe0] sm:$0xff] 0.0
      %116 = vst [vmem:[#allocation2 + $0xe8] sm:$0xff] 0.0
      %117 = vst [vmem:[#allocation2 + $0xf0] sm:$0xff] 0.0
      %118 = vst [vmem:[#allocation2 + $0xf8] sm:$0xff] 0.0
      %119 = vst [vmem:[#allocation2 + $0x100] sm:$0xff] 0.0
      %120 = vst [vmem:[#allocation2 + $0x108] sm:$0xff] 0.0
      %121 = vst [vmem:[#allocation2 + $0x110] sm:$0xff] 0.0
      %122 = vst [vmem:[#allocation2 + $0x118] sm:$0xff] 0.0
      %123 = vst [vmem:[#allocation2 + $0x120] sm:$0xff] 0.0
      %124 = vst [vmem:[#allocation2 + $0x128] sm:$0xff] 0.0
      %125 = vst [vmem:[#allocation2 + $0x130] sm:$0xff] 0.0
      %126 = vst [vmem:[#allocation2 + $0x138] sm:$0xff] 0.0
      %127 = vst [vmem:[#allocation2 + $0x140] sm:$0xff] 0.0
      %128 = vst [vmem:[#allocation2 + $0x148] sm:$0xff] 0.0
      %129 = vst [vmem:[#allocation2 + $0x150] sm:$0xff] 0.0
      %130 = vst [vmem:[#allocation2 + $0x158] sm:$0xff] 0.0
      %131 = vst [vmem:[#allocation2 + $0x160] sm:$0xff] 0.0
      %132 = vst [vmem:[#allocation2 + $0x168] sm:$0xff] 0.0
      %133 = vst [vmem:[#allocation2 + $0x170] sm:$0xff] 0.0
      %134 = vst [vmem:[#allocation2 + $0x178] sm:$0xff] 0.0
      %135 = vst [vmem:[#allocation2 + $0x180] sm:$0xff] 0.0
      %136 = vst [vmem:[#allocation2 + $0x188] sm:$0xff] 0.0
      %137 = vst [vmem:[#allocation2 + $0x190] sm:$0xff] 0.0
      %138 = vst [vmem:[#allocation2 + $0x198] sm:$0xff] 0.0
      %139 = vst [vmem:[#allocation2 + $0x1a0] sm:$0xff] 0.0
      %140 = vst [vmem:[#allocation2 + $0x1a8] sm:$0xff] 0.0
      %141 = vst [vmem:[#allocation2 + $0x1b0] sm:$0xff] 0.0
      %142 = vst [vmem:[#allocation2 + $0x1b8] sm:$0xff] 0.0
      %143 = vst [vmem:[#allocation2 + $0x1c0] sm:$0xff] 0.0
      %144 = vst [vmem:[#allocation2 + $0x1c8] sm:$0xff] 0.0
      %145 = vst [vmem:[#allocation2 + $0x1d0] sm:$0xff] 0.0
      %146 = vst [vmem:[#allocation2 + $0x1d8] sm:$0xff] 0.0
      %147 = vst [vmem:[#allocation2 + $0x1e0] sm:$0xff] 0.0
      %148 = vst [vmem:[#allocation2 + $0x1e8] sm:$0xff] 0.0
      %149 = vst [vmem:[#allocation2 + $0x1f0] sm:$0xff] 0.0
      %150 = vst [vmem:[#allocation2 + $0x1f8] sm:$0xff] 0.0
      %vm151 = vcmask 7168
      %152 = vst.msk [vmem:[#allocation3] sm:$0xff] %vm151, 0.0
      %153 = vst.msk [vmem:[#allocation3 + $0x8] sm:$0xff] %vm151, 0.0
      %154 = vst.msk [vmem:[#allocation3 + $0x10] sm:$0xff] %vm151, 0.0
      %155 = vst.msk [vmem:[#allocation3 + $0x18] sm:$0xff] %vm151, 0.0
      %156 = vst.msk [vmem:[#allocation3 + $0x20] sm:$0xff] %vm151, 0.0
      %157 = vst.msk [vmem:[#allocation3 + $0x28] sm:$0xff] %vm151, 0.0
      %158 = vst.msk [vmem:[#allocation3 + $0x30] sm:$0xff] %vm151, 0.0
      %159 = vst.msk [vmem:[#allocation3 + $0x38] sm:$0xff] %vm151, 0.0
      %160 = vst.msk [vmem:[#allocation3 + $0x40] sm:$0xff] %vm151, 0.0
      %161 = vst.msk [vmem:[#allocation3 + $0x48] sm:$0xff] %vm151, 0.0
      %162 = vst.msk [vmem:[#allocation3 + $0x50] sm:$0xff] %vm151, 0.0
      %163 = vst.msk [vmem:[#allocation3 + $0x58] sm:$0xff] %vm151, 0.0
      %164 = vst.msk [vmem:[#allocation3 + $0x60] sm:$0xff] %vm151, 0.0
      %165 = vst.msk [vmem:[#allocation3 + $0x68] sm:$0xff] %vm151, 0.0
      %166 = vst.msk [vmem:[#allocation3 + $0x70] sm:$0xff] %vm151, 0.0
      %167 = vst.msk [vmem:[#allocation3 + $0x78] sm:$0xff] %vm151, 0.0
      %168 = vst.msk [vmem:[#allocation3 + $0x80] sm:$0xff] %vm151, 0.0
      %169 = vst.msk [vmem:[#allocation3 + $0x88] sm:$0xff] %vm151, 0.0
      %170 = vst.msk [vmem:[#allocation3 + $0x90] sm:$0xff] %vm151, 0.0
      %171 = vst.msk [vmem:[#allocation3 + $0x98] sm:$0xff] %vm151, 0.0
      %172 = vst.msk [vmem:[#allocation3 + $0xa0] sm:$0xff] %vm151, 0.0
      %173 = vst.msk [vmem:[#allocation3 + $0xa8] sm:$0xff] %vm151, 0.0
      %174 = vst.msk [vmem:[#allocation3 + $0xb0] sm:$0xff] %vm151, 0.0
      %175 = vst.msk [vmem:[#allocation3 + $0xb8] sm:$0xff] %vm151, 0.0
      %176 = vst.msk [vmem:[#allocation3 + $0xc0] sm:$0xff] %vm151, 0.0
      %177 = vst.msk [vmem:[#allocation3 + $0xc8] sm:$0xff] %vm151, 0.0
      %178 = vst.msk [vmem:[#allocation3 + $0xd0] sm:$0xff] %vm151, 0.0
      %179 = vst.msk [vmem:[#allocation3 + $0xd8] sm:$0xff] %vm151, 0.0
      %180 = vst.msk [vmem:[#allocation3 + $0xe0] sm:$0xff] %vm151, 0.0
      %181 = vst.msk [vmem:[#allocation3 + $0xe8] sm:$0xff] %vm151, 0.0
      %182 = vst.msk [vmem:[#allocation3 + $0xf0] sm:$0xff] %vm151, 0.0
      %183 = vst.msk [vmem:[#allocation3 + $0xf8] sm:$0xff] %vm151, 0.0
    $region49: #{tpu_custom_call.1} parent=1 // pred_fallthru
      _
    %v184 = vld [vmem:[#allocation4] sm:$0xff]
    %v185 = vld [vmem:[#allocation4 + $0x8] sm:$0xff]
    %v186 = vld [vmem:[#allocation4 + $0x10] sm:$0xff]
    %v187 = vld [vmem:[#allocation4 + $0x18] sm:$0xff]
    %v188 = vld [vmem:[#allocation4 + $0x20] sm:$0xff]
    %v189 = vld [vmem:[#allocation4 + $0x28] sm:$0xff]
    %v190 = vld [vmem:[#allocation4 + $0x30] sm:$0xff]
    %v191 = vld [vmem:[#allocation4 + $0x38] sm:$0xff]
    %v192 = vld [vmem:[#allocation4 + $0x40] sm:$0xff]
    %v193 = vld [vmem:[#allocation4 + $0x48] sm:$0xff]
    %v194 = vld [vmem:[#allocation4 + $0x50] sm:$0xff]
    %v195 = vld [vmem:[#allocation4 + $0x58] sm:$0xff]
    %v196 = vld [vmem:[#allocation4 + $0x60] sm:$0xff]
    %v197 = vld [vmem:[#allocation4 + $0x68] sm:$0xff]
    %v198 = vld [vmem:[#allocation4 + $0x70] sm:$0xff]
    %v199 = vld [vmem:[#allocation4 + $0x78] sm:$0xff]
    %v200 = vld [vmem:[#allocation4 + $0x80] sm:$0xff]
    %v201 = vld [vmem:[#allocation4 + $0x88] sm:$0xff]
    %v202 = vld [vmem:[#allocation4 + $0x90] sm:$0xff]
    %v203 = vld [vmem:[#allocation4 + $0x98] sm:$0xff]
    %v204 = vld [vmem:[#allocation4 + $0xa0] sm:$0xff]
    %v205 = vld [vmem:[#allocation4 + $0xa8] sm:$0xff]
    %v206 = vld [vmem:[#allocation4 + $0xb0] sm:$0xff]
    %v207 = vld [vmem:[#allocation4 + $0xb8] sm:$0xff]
    %v208 = vld [vmem:[#allocation4 + $0xc0] sm:$0xff]
    %v209 = vld [vmem:[#allocation4 + $0xc8] sm:$0xff]
    %v210 = vld [vmem:[#allocation4 + $0xd0] sm:$0xff]
    %v211 = vld [vmem:[#allocation4 + $0xd8] sm:$0xff]
    %v212 = vld [vmem:[#allocation4 + $0xe0] sm:$0xff]
    %v213 = vld [vmem:[#allocation4 + $0xe8] sm:$0xff]
    %v214 = vld [vmem:[#allocation4 + $0xf0] sm:$0xff]
    %v215 = vld [vmem:[#allocation4 + $0xf8] sm:$0xff]
    %v216 = vld [vmem:[#allocation4 + $0x100] sm:$0xff]
    %v217 = vld [vmem:[#allocation4 + $0x108] sm:$0xff]
    %v218 = vld [vmem:[#allocation4 + $0x110] sm:$0xff]
    %v219 = vld [vmem:[#allocation4 + $0x118] sm:$0xff]
    %v220 = vld [vmem:[#allocation4 + $0x120] sm:$0xff]
    %v221 = vld [vmem:[#allocation4 + $0x128] sm:$0xff]
    %v222 = vld [vmem:[#allocation4 + $0x130] sm:$0xff]
    %v223 = vld [vmem:[#allocation4 + $0x138] sm:$0xff]
    %v224 = vld [vmem:[#allocation4 + $0x140] sm:$0xff]
    %v225 = vld [vmem:[#allocation4 + $0x148] sm:$0xff]
    %v226 = vld [vmem:[#allocation4 + $0x150] sm:$0xff]
    %v227 = vld [vmem:[#allocation4 + $0x158] sm:$0xff]
    %v228 = vld [vmem:[#allocation4 + $0x160] sm:$0xff]
    %v229 = vld [vmem:[#allocation4 + $0x168] sm:$0xff]
    %v230 = vld [vmem:[#allocation4 + $0x170] sm:$0xff]
    %v231 = vld [vmem:[#allocation4 + $0x178] sm:$0xff]
    %v232 = vld [vmem:[#allocation4 + $0x180] sm:$0xff]
    %v233 = vld [vmem:[#allocation4 + $0x188] sm:$0xff]
    %v234 = vld [vmem:[#allocation4 + $0x190] sm:$0xff]
    %v235 = vld [vmem:[#allocation4 + $0x198] sm:$0xff]
    %v236 = vld [vmem:[#allocation4 + $0x1a0] sm:$0xff]
    %v237 = vld [vmem:[#allocation4 + $0x1a8] sm:$0xff]
    %v238 = vld [vmem:[#allocation4 + $0x1b0] sm:$0xff]
    %v239 = vld [vmem:[#allocation4 + $0x1b8] sm:$0xff]
    %v240 = vld [vmem:[#allocation4 + $0x1c0] sm:$0xff]
    %v241 = vld [vmem:[#allocation4 + $0x1c8] sm:$0xff]
    %v242 = vld [vmem:[#allocation4 + $0x1d0] sm:$0xff]
    %v243 = vld [vmem:[#allocation4 + $0x1d8] sm:$0xff]
    %v244 = vld [vmem:[#allocation4 + $0x1e0] sm:$0xff]
    %v245 = vld [vmem:[#allocation4 + $0x1e8] sm:$0xff]
    %v246 = vld [vmem:[#allocation4 + $0x1f0] sm:$0xff]
    %v247 = vld [vmem:[#allocation4 + $0x1f8] sm:$0xff]
    %v248 = vld [vmem:[#allocation4 + $0x200] sm:$0xff]
    %v249 = vld [vmem:[#allocation4 + $0x208] sm:$0xff]
    %v250 = vld [vmem:[#allocation4 + $0x210] sm:$0xff]
    %v251 = vld [vmem:[#allocation4 + $0x218] sm:$0xff]
    %v252 = vld [vmem:[#allocation4 + $0x220] sm:$0xff]
    %v253 = vld [vmem:[#allocation4 + $0x228] sm:$0xff]
    %v254 = vld [vmem:[#allocation4 + $0x230] sm:$0xff]
    %v255 = vld [vmem:[#allocation4 + $0x238] sm:$0xff]
    %v256 = vld [vmem:[#allocation4 + $0x240] sm:$0xff]
    %v257 = vld [vmem:[#allocation4 + $0x248] sm:$0xff]
    %v258 = vld [vmem:[#allocation4 + $0x250] sm:$0xff]
    %v259 = vld [vmem:[#allocation4 + $0x258] sm:$0xff]
    %v260 = vld [vmem:[#allocation4 + $0x260] sm:$0xff]
    %v261 = vld [vmem:[#allocation4 + $0x268] sm:$0xff]
    %v262 = vld [vmem:[#allocation4 + $0x270] sm:$0xff]
    %v263 = vld [vmem:[#allocation4 + $0x278] sm:$0xff]
    %v264 = vld [vmem:[#allocation4 + $0x280] sm:$0xff]
    %v265 = vld [vmem:[#allocation4 + $0x288] sm:$0xff]
    %v266 = vld [vmem:[#allocation4 + $0x290] sm:$0xff]
    %v267 = vld [vmem:[#allocation4 + $0x298] sm:$0xff]
    %v268 = vld [vmem:[#allocation4 + $0x2a0] sm:$0xff]
    %v269 = vld [vmem:[#allocation4 + $0x2a8] sm:$0xff]
    %v270 = vld [vmem:[#allocation4 + $0x2b0] sm:$0xff]
    %v271 = vld [vmem:[#allocation4 + $0x2b8] sm:$0xff]
    %v272 = vld [vmem:[#allocation4 + $0x2c0] sm:$0xff]
    %v273 = vld [vmem:[#allocation4 + $0x2c8] sm:$0xff]
    %v274 = vld [vmem:[#allocation4 + $0x2d0] sm:$0xff]
    %v275 = vld [vmem:[#allocation4 + $0x2d8] sm:$0xff]
    %v276 = vld [vmem:[#allocation4 + $0x2e0] sm:$0xff]
    %v277 = vld [vmem:[#allocation4 + $0x2e8] sm:$0xff]
    %v278 = vld [vmem:[#allocation4 + $0x2f0] sm:$0xff]
    %v279 = vld [vmem:[#allocation4 + $0x2f8] sm:$0xff]
    %v280 = vld [vmem:[#allocation4 + $0x300] sm:$0xff]
    %v281 = vld [vmem:[#allocation4 + $0x308] sm:$0xff]
    %v282 = vld [vmem:[#allocation4 + $0x310] sm:$0xff]
    %v283 = vld [vmem:[#allocation4 + $0x318] sm:$0xff]
    %v284 = vld [vmem:[#allocation4 + $0x320] sm:$0xff]
    %v285 = vld [vmem:[#allocation4 + $0x328] sm:$0xff]
    %v286 = vld [vmem:[#allocation4 + $0x330] sm:$0xff]
    %v287 = vld [vmem:[#allocation4 + $0x338] sm:$0xff]
    %v288 = vld [vmem:[#allocation4 + $0x340] sm:$0xff]
    %v289 = vld [vmem:[#allocation4 + $0x348] sm:$0xff]
    %v290 = vld [vmem:[#allocation4 + $0x350] sm:$0xff]
    %v291 = vld [vmem:[#allocation4 + $0x358] sm:$0xff]
    %v292 = vld [vmem:[#allocation4 + $0x360] sm:$0xff]
    %v293 = vld [vmem:[#allocation4 + $0x368] sm:$0xff]
    %v294 = vld [vmem:[#allocation4 + $0x370] sm:$0xff]
    %v295 = vld [vmem:[#allocation4 + $0x378] sm:$0xff]
    %v296 = vld [vmem:[#allocation4 + $0x380] sm:$0xff]
    %v297 = vld [vmem:[#allocation4 + $0x388] sm:$0xff]
    %v298 = vld [vmem:[#allocation4 + $0x390] sm:$0xff]
    %v299 = vld [vmem:[#allocation4 + $0x398] sm:$0xff]
    %v300 = vld [vmem:[#allocation4 + $0x3a0] sm:$0xff]
    %v301 = vld [vmem:[#allocation4 + $0x3a8] sm:$0xff]
    %v302 = vld [vmem:[#allocation4 + $0x3b0] sm:$0xff]
    %v303 = vld [vmem:[#allocation4 + $0x3b8] sm:$0xff]
    %v304 = vld [vmem:[#allocation4 + $0x3c0] sm:$0xff]
    %v305 = vld [vmem:[#allocation4 + $0x3c8] sm:$0xff]
    %v306 = vld [vmem:[#allocation4 + $0x3d0] sm:$0xff]
    %v307 = vld [vmem:[#allocation4 + $0x3d8] sm:$0xff]
    %v308 = vld [vmem:[#allocation4 + $0x3e0] sm:$0xff]
    %v309 = vld [vmem:[#allocation4 + $0x3e8] sm:$0xff]
    %v310 = vld [vmem:[#allocation4 + $0x3f0] sm:$0xff]
    %v311 = vld [vmem:[#allocation4 + $0x3f8] sm:$0xff]
    %v312 = vunpack.c.l.bf16 %v184
    %v313 = vunpack.c.h.bf16 %v184
    %v314 = vunpack.c.l.bf16 %v185
    %v315 = vunpack.c.h.bf16 %v185
    %v316 = vunpack.c.l.bf16 %v186
    %v317 = vunpack.c.h.bf16 %v186
    %v318 = vunpack.c.l.bf16 %v187
    %v319 = vunpack.c.h.bf16 %v187
    %v320 = vunpack.c.l.bf16 %v188
    %v321 = vunpack.c.h.bf16 %v188
    %v322 = vunpack.c.l.bf16 %v189
    %v323 = vunpack.c.h.bf16 %v189
    %v324 = vunpack.c.l.bf16 %v190
    %v325 = vunpack.c.h.bf16 %v190
    %v326 = vunpack.c.l.bf16 %v191
    %v327 = vunpack.c.h.bf16 %v191
    %v328 = vunpack.c.l.bf16 %v192
    %v329 = vunpack.c.h.bf16 %v192
    %v330 = vunpack.c.l.bf16 %v193
    %v331 = vunpack.c.h.bf16 %v193
    %v332 = vunpack.c.l.bf16 %v194
    %v333 = vunpack.c.h.bf16 %v194
    %v334 = vunpack.c.l.bf16 %v195
    %v335 = vunpack.c.h.bf16 %v195
    %v336 = vunpack.c.l.bf16 %v196
    %v337 = vunpack.c.h.bf16 %v196
    %v338 = vunpack.c.l.bf16 %v197
    %v339 = vunpack.c.h.bf16 %v197
    %v340 = vunpack.c.l.bf16 %v198
    %v341 = vunpack.c.h.bf16 %v198
    %v342 = vunpack.c.l.bf16 %v199
    %v343 = vunpack.c.h.bf16 %v199
    %v344 = vunpack.c.l.bf16 %v200
    %v345 = vunpack.c.h.bf16 %v200
    %v346 = vunpack.c.l.bf16 %v201
    %v347 = vunpack.c.h.bf16 %v201
    %v348 = vunpack.c.l.bf16 %v202
    %v349 = vunpack.c.h.bf16 %v202
    %v350 = vunpack.c.l.bf16 %v203
    %v351 = vunpack.c.h.bf16 %v203
    %v352 = vunpack.c.l.bf16 %v204
    %v353 = vunpack.c.h.bf16 %v204
    %v354 = vunpack.c.l.bf16 %v205
    %v355 = vunpack.c.h.bf16 %v205
    %v356 = vunpack.c.l.bf16 %v206
    %v357 = vunpack.c.h.bf16 %v206
    %v358 = vunpack.c.l.bf16 %v207
    %v359 = vunpack.c.h.bf16 %v207
    %v360 = vunpack.c.l.bf16 %v208
    %v361 = vunpack.c.h.bf16 %v208
    %v362 = vunpack.c.l.bf16 %v209
    %v363 = vunpack.c.h.bf16 %v209
    %v364 = vunpack.c.l.bf16 %v210
    %v365 = vunpack.c.h.bf16 %v210
    %v366 = vunpack.c.l.bf16 %v211
    %v367 = vunpack.c.h.bf16 %v211
    %v368 = vunpack.c.l.bf16 %v212
    %v369 = vunpack.c.h.bf16 %v212
    %v370 = vunpack.c.l.bf16 %v213
    %v371 = vunpack.c.h.bf16 %v213
    %v372 = vunpack.c.l.bf16 %v214
    %v373 = vunpack.c.h.bf16 %v214
    %v374 = vunpack.c.l.bf16 %v215
    %v375 = vunpack.c.h.bf16 %v215
    %v376 = vunpack.c.l.bf16 %v216
    %v377 = vunpack.c.h.bf16 %v216
    %v378 = vunpack.c.l.bf16 %v217
    %v379 = vunpack.c.h.bf16 %v217
    %v380 = vunpack.c.l.bf16 %v218
    %v381 = vunpack.c.h.bf16 %v218
    %v382 = vunpack.c.l.bf16 %v219
    %v383 = vunpack.c.h.bf16 %v219
    %v384 = vunpack.c.l.bf16 %v220
    %v385 = vunpack.c.h.bf16 %v220
    %v386 = vunpack.c.l.bf16 %v221
    %v387 = vunpack.c.h.bf16 %v221
    %v388 = vunpack.c.l.bf16 %v222
    %v389 = vunpack.c.h.bf16 %v222
    %v390 = vunpack.c.l.bf16 %v223
    %v391 = vunpack.c.h.bf16 %v223
    %v392 = vunpack.c.l.bf16 %v224
    %v393 = vunpack.c.h.bf16 %v224
    %v394 = vunpack.c.l.bf16 %v225
    %v395 = vunpack.c.h.bf16 %v225
    %v396 = vunpack.c.l.bf16 %v226
    %v397 = vunpack.c.h.bf16 %v226
    %v398 = vunpack.c.l.bf16 %v227
    %v399 = vunpack.c.h.bf16 %v227
    %v400 = vunpack.c.l.bf16 %v228
    %v401 = vunpack.c.h.bf16 %v228
    %v402 = vunpack.c.l.bf16 %v229
    %v403 = vunpack.c.h.bf16 %v229
    %v404 = vunpack.c.l.bf16 %v230
    %v405 = vunpack.c.h.bf16 %v230
    %v406 = vunpack.c.l.bf16 %v231
    %v407 = vunpack.c.h.bf16 %v231
    %v408 = vunpack.c.l.bf16 %v232
    %v409 = vunpack.c.h.bf16 %v232
    %v410 = vunpack.c.l.bf16 %v233
    %v411 = vunpack.c.h.bf16 %v233
    %v412 = vunpack.c.l.bf16 %v234
    %v413 = vunpack.c.h.bf16 %v234
    %v414 = vunpack.c.l.bf16 %v235
    %v415 = vunpack.c.h.bf16 %v235
    %v416 = vunpack.c.l.bf16 %v236
    %v417 = vunpack.c.h.bf16 %v236
    %v418 = vunpack.c.l.bf16 %v237
    %v419 = vunpack.c.h.bf16 %v237
    %v420 = vunpack.c.l.bf16 %v238
    %v421 = vunpack.c.h.bf16 %v238
    %v422 = vunpack.c.l.bf16 %v239
    %v423 = vunpack.c.h.bf16 %v239
    %v424 = vunpack.c.l.bf16 %v240
    %v425 = vunpack.c.h.bf16 %v240
    %v426 = vunpack.c.l.bf16 %v241
    %v427 = vunpack.c.h.bf16 %v241
    %v428 = vunpack.c.l.bf16 %v242
    %v429 = vunpack.c.h.bf16 %v242
    %v430 = vunpack.c.l.bf16 %v243
    %v431 = vunpack.c.h.bf16 %v243
    %v432 = vunpack.c.l.bf16 %v244
    %v433 = vunpack.c.h.bf16 %v244
    %v434 = vunpack.c.l.bf16 %v245
    %v435 = vunpack.c.h.bf16 %v245
    %v436 = vunpack.c.l.bf16 %v246
    %v437 = vunpack.c.h.bf16 %v246
    %v438 = vunpack.c.l.bf16 %v247
    %v439 = vunpack.c.h.bf16 %v247
    %v440 = vunpack.c.l.bf16 %v248
    %v441 = vunpack.c.h.bf16 %v248
    %v442 = vunpack.c.l.bf16 %v249
    %v443 = vunpack.c.h.bf16 %v249
    %v444 = vunpack.c.l.bf16 %v250
    %v445 = vunpack.c.h.bf16 %v250
    %v446 = vunpack.c.l.bf16 %v251
    %v447 = vunpack.c.h.bf16 %v251
    %v448 = vunpack.c.l.bf16 %v252
    %v449 = vunpack.c.h.bf16 %v252
    %v450 = vunpack.c.l.bf16 %v253
    %v451 = vunpack.c.h.bf16 %v253
    %v452 = vunpack.c.l.bf16 %v254
    %v453 = vunpack.c.h.bf16 %v254
    %v454 = vunpack.c.l.bf16 %v255
    %v455 = vunpack.c.h.bf16 %v255
    %v456 = vunpack.c.l.bf16 %v256
    %v457 = vunpack.c.h.bf16 %v256
    %v458 = vunpack.c.l.bf16 %v257
    %v459 = vunpack.c.h.bf16 %v257
    %v460 = vunpack.c.l.bf16 %v258
    %v461 = vunpack.c.h.bf16 %v258
    %v462 = vunpack.c.l.bf16 %v259
    %v463 = vunpack.c.h.bf16 %v259
    %v464 = vunpack.c.l.bf16 %v260
    %v465 = vunpack.c.h.bf16 %v260
    %v466 = vunpack.c.l.bf16 %v261
    %v467 = vunpack.c.h.bf16 %v261
    %v468 = vunpack.c.l.bf16 %v262
    %v469 = vunpack.c.h.bf16 %v262
    %v470 = vunpack.c.l.bf16 %v263
    %v471 = vunpack.c.h.bf16 %v263
    %v472 = vunpack.c.l.bf16 %v264
    %v473 = vunpack.c.h.bf16 %v264
    %v474 = vunpack.c.l.bf16 %v265
    %v475 = vunpack.c.h.bf16 %v265
    %v476 = vunpack.c.l.bf16 %v266
    %v477 = vunpack.c.h.bf16 %v266
    %v478 = vunpack.c.l.bf16 %v267
    %v479 = vunpack.c.h.bf16 %v267
    %v480 = vunpack.c.l.bf16 %v268
    %v481 = vunpack.c.h.bf16 %v268
    %v482 = vunpack.c.l.bf16 %v269
    %v483 = vunpack.c.h.bf16 %v269
    %v484 = vunpack.c.l.bf16 %v270
    %v485 = vunpack.c.h.bf16 %v270
    %v486 = vunpack.c.l.bf16 %v271
    %v487 = vunpack.c.h.bf16 %v271
    %v488 = vunpack.c.l.bf16 %v272
    %v489 = vunpack.c.h.bf16 %v272
    %v490 = vunpack.c.l.bf16 %v273
    %v491 = vunpack.c.h.bf16 %v273
    %v492 = vunpack.c.l.bf16 %v274
    %v493 = vunpack.c.h.bf16 %v274
    %v494 = vunpack.c.l.bf16 %v275
    %v495 = vunpack.c.h.bf16 %v275
    %v496 = vunpack.c.l.bf16 %v276
    %v497 = vunpack.c.h.bf16 %v276
    %v498 = vunpack.c.l.bf16 %v277
    %v499 = vunpack.c.h.bf16 %v277
    %v500 = vunpack.c.l.bf16 %v278
    %v501 = vunpack.c.h.bf16 %v278
    %v502 = vunpack.c.l.bf16 %v279
    %v503 = vunpack.c.h.bf16 %v279
    %v504 = vunpack.c.l.bf16 %v280
    %v505 = vunpack.c.h.bf16 %v280
    %v506 = vunpack.c.l.bf16 %v281
    %v507 = vunpack.c.h.bf16 %v281
    %v508 = vunpack.c.l.bf16 %v282
    %v509 = vunpack.c.h.bf16 %v282
    %v510 = vunpack.c.l.bf16 %v283
    %v511 = vunpack.c.h.bf16 %v283
    %v512 = vunpack.c.l.bf16 %v284
    %v513 = vunpack.c.h.bf16 %v284
    %v514 = vunpack.c.l.bf16 %v285
    %v515 = vunpack.c.h.bf16 %v285
    %v516 = vunpack.c.l.bf16 %v286
    %v517 = vunpack.c.h.bf16 %v286
    %v518 = vunpack.c.l.bf16 %v287
    %v519 = vunpack.c.h.bf16 %v287
    %v520 = vunpack.c.l.bf16 %v288
    %v521 = vunpack.c.h.bf16 %v288
    %v522 = vunpack.c.l.bf16 %v289
    %v523 = vunpack.c.h.bf16 %v289
    %v524 = vunpack.c.l.bf16 %v290
    %v525 = vunpack.c.h.bf16 %v290
    %v526 = vunpack.c.l.bf16 %v291
    %v527 = vunpack.c.h.bf16 %v291
    %v528 = vunpack.c.l.bf16 %v292
    %v529 = vunpack.c.h.bf16 %v292
    %v530 = vunpack.c.l.bf16 %v293
    %v531 = vunpack.c.h.bf16 %v293
    %v532 = vunpack.c.l.bf16 %v294
    %v533 = vunpack.c.h.bf16 %v294
    %v534 = vunpack.c.l.bf16 %v295
    %v535 = vunpack.c.h.bf16 %v295
    %v536 = vunpack.c.l.bf16 %v296
    %v537 = vunpack.c.h.bf16 %v296
    %v538 = vunpack.c.l.bf16 %v297
    %v539 = vunpack.c.h.bf16 %v297
    %v540 = vunpack.c.l.bf16 %v298
    %v541 = vunpack.c.h.bf16 %v298
    %v542 = vunpack.c.l.bf16 %v299
    %v543 = vunpack.c.h.bf16 %v299
    %v544 = vunpack.c.l.bf16 %v300
    %v545 = vunpack.c.h.bf16 %v300
    %v546 = vunpack.c.l.bf16 %v301
    %v547 = vunpack.c.h.bf16 %v301
    %v548 = vunpack.c.l.bf16 %v302
    %v549 = vunpack.c.h.bf16 %v302
    %v550 = vunpack.c.l.bf16 %v303
    %v551 = vunpack.c.h.bf16 %v303
    %v552 = vunpack.c.l.bf16 %v304
    %v553 = vunpack.c.h.bf16 %v304
    %v554 = vunpack.c.l.bf16 %v305
    %v555 = vunpack.c.h.bf16 %v305
    %v556 = vunpack.c.l.bf16 %v306
    %v557 = vunpack.c.h.bf16 %v306
    %v558 = vunpack.c.l.bf16 %v307
    %v559 = vunpack.c.h.bf16 %v307
    %v560 = vunpack.c.l.bf16 %v308
    %v561 = vunpack.c.h.bf16 %v308
    %v562 = vunpack.c.l.bf16 %v309
    %v563 = vunpack.c.h.bf16 %v309
    %v564 = vunpack.c.l.bf16 %v310
    %v565 = vunpack.c.h.bf16 %v310
    %v566 = vunpack.c.l.bf16 %v311
    %v567 = vunpack.c.h.bf16 %v311
    %v568 = vld [vmem:[#allocation3] sm:$0xff]
    %v569 = vld [vmem:[#allocation3 + $0x8] sm:$0xff]
    %v570 = vld [vmem:[#allocation3 + $0x10] sm:$0xff]
    %v571 = vld [vmem:[#allocation3 + $0x18] sm:$0xff]
    %v572 = vld [vmem:[#allocation3 + $0x20] sm:$0xff]
    %v573 = vld [vmem:[#allocation3 + $0x28] sm:$0xff]
    %v574 = vld [vmem:[#allocation3 + $0x30] sm:$0xff]
    %v575 = vld [vmem:[#allocation3 + $0x38] sm:$0xff]
    %v576 = vld [vmem:[#allocation3 + $0x40] sm:$0xff]
    %v577 = vld [vmem:[#allocation3 + $0x48] sm:$0xff]
    %v578 = vld [vmem:[#allocation3 + $0x50] sm:$0xff]
    %v579 = vld [vmem:[#allocation3 + $0x58] sm:$0xff]
    %v580 = vld [vmem:[#allocation3 + $0x60] sm:$0xff]
    %v581 = vld [vmem:[#allocation3 + $0x68] sm:$0xff]
    %v582 = vld [vmem:[#allocation3 + $0x70] sm:$0xff]
    %v583 = vld [vmem:[#allocation3 + $0x78] sm:$0xff]
    %v584 = vld [vmem:[#allocation3 + $0x80] sm:$0xff]
    %v585 = vld [vmem:[#allocation3 + $0x88] sm:$0xff]
    %v586 = vld [vmem:[#allocation3 + $0x90] sm:$0xff]
    %v587 = vld [vmem:[#allocation3 + $0x98] sm:$0xff]
    %v588 = vld [vmem:[#allocation3 + $0xa0] sm:$0xff]
    %v589 = vld [vmem:[#allocation3 + $0xa8] sm:$0xff]
    %v590 = vld [vmem:[#allocation3 + $0xb0] sm:$0xff]
    %v591 = vld [vmem:[#allocation3 + $0xb8] sm:$0xff]
    %v592 = vld [vmem:[#allocation3 + $0xc0] sm:$0xff]
    %v593 = vld [vmem:[#allocation3 + $0xc8] sm:$0xff]
    %v594 = vld [vmem:[#allocation3 + $0xd0] sm:$0xff]
    %v595 = vld [vmem:[#allocation3 + $0xd8] sm:$0xff]
    %v596 = vld [vmem:[#allocation3 + $0xe0] sm:$0xff]
    %v597 = vld [vmem:[#allocation3 + $0xe8] sm:$0xff]
    %v598 = vld [vmem:[#allocation3 + $0xf0] sm:$0xff]
    %v599 = vld [vmem:[#allocation3 + $0xf8] sm:$0xff]
    %v600 = vadd.f32 %v312, %v313
    %v601 = vadd.f32 %v600, %v314
    %v602 = vadd.f32 %v601, %v315
    %v603 = vadd.f32 %v602, %v316
    %v604 = vadd.f32 %v603, %v317
    %v605 = vadd.f32 %v604, %v318
    %v606 = vadd.f32 %v605, %v319
    %607 = vadd.xlane.f32.xlu0 %v606
    %v608 = vpop.xlane.xlu0 %607
    %v609 = vadd.f32 %v320, %v321
    %v610 = vadd.f32 %v609, %v322
    %v611 = vadd.f32 %v610, %v323
    %v612 = vadd.f32 %v611, %v324
    %v613 = vadd.f32 %v612, %v325
    %v614 = vadd.f32 %v613, %v326
    %v615 = vadd.f32 %v614, %v327
    %616 = vadd.xlane.f32.xlu0 %v615
    %v617 = vpop.xlane.xlu0 %616
    %v618 = vadd.f32 %v328, %v329
    %v619 = vadd.f32 %v618, %v330
    %v620 = vadd.f32 %v619, %v331
    %v621 = vadd.f32 %v620, %v332
    %v622 = vadd.f32 %v621, %v333
    %v623 = vadd.f32 %v622, %v334
    %v624 = vadd.f32 %v623, %v335
    %625 = vadd.xlane.f32.xlu0 %v624
    %v626 = vpop.xlane.xlu0 %625
    %v627 = vadd.f32 %v336, %v337
    %v628 = vadd.f32 %v627, %v338
    %v629 = vadd.f32 %v628, %v339
    %v630 = vadd.f32 %v629, %v340
    %v631 = vadd.f32 %v630, %v341
    %v632 = vadd.f32 %v631, %v342
    %v633 = vadd.f32 %v632, %v343
    %634 = vadd.xlane.f32.xlu0 %v633
    %v635 = vpop.xlane.xlu0 %634
    %v636 = vadd.f32 %v344, %v345
    %v637 = vadd.f32 %v636, %v346
    %v638 = vadd.f32 %v637, %v347
    %v639 = vadd.f32 %v638, %v348
    %v640 = vadd.f32 %v639, %v349
    %v641 = vadd.f32 %v640, %v350
    %v642 = vadd.f32 %v641, %v351
    %643 = vadd.xlane.f32.xlu0 %v642
    %v644 = vpop.xlane.xlu0 %643
    %v645 = vadd.f32 %v352, %v353
    %v646 = vadd.f32 %v645, %v354
    %v647 = vadd.f32 %v646, %v355
    %v648 = vadd.f32 %v647, %v356
    %v649 = vadd.f32 %v648, %v357
    %v650 = vadd.f32 %v649, %v358
    %v651 = vadd.f32 %v650, %v359
    %652 = vadd.xlane.f32.xlu0 %v651
    %v653 = vpop.xlane.xlu0 %652
    %v654 = vadd.f32 %v360, %v361
    %v655 = vadd.f32 %v654, %v362
    %v656 = vadd.f32 %v655, %v363
    %v657 = vadd.f32 %v656, %v364
    %v658 = vadd.f32 %v657, %v365
    %v659 = vadd.f32 %v658, %v366
    %v660 = vadd.f32 %v659, %v367
    %661 = vadd.xlane.f32.xlu0 %v660
    %v662 = vpop.xlane.xlu0 %661
    %v663 = vadd.f32 %v368, %v369
    %v664 = vadd.f32 %v663, %v370
    %v665 = vadd.f32 %v664, %v371
    %v666 = vadd.f32 %v665, %v372
    %v667 = vadd.f32 %v666, %v373
    %v668 = vadd.f32 %v667, %v374
    %v669 = vadd.f32 %v668, %v375
    %670 = vadd.xlane.f32.xlu0 %v669
    %v671 = vpop.xlane.xlu0 %670
    %v672 = vadd.f32 %v376, %v377
    %v673 = vadd.f32 %v672, %v378
    %v674 = vadd.f32 %v673, %v379
    %v675 = vadd.f32 %v674, %v380
    %v676 = vadd.f32 %v675, %v381
    %v677 = vadd.f32 %v676, %v382
    %v678 = vadd.f32 %v677, %v383
    %679 = vadd.xlane.f32.xlu0 %v678
    %v680 = vpop.xlane.xlu0 %679
    %v681 = vadd.f32 %v384, %v385
    %v682 = vadd.f32 %v681, %v386
    %v683 = vadd.f32 %v682, %v387
    %v684 = vadd.f32 %v683, %v388
    %v685 = vadd.f32 %v684, %v389
    %v686 = vadd.f32 %v685, %v390
    %v687 = vadd.f32 %v686, %v391
    %688 = vadd.xlane.f32.xlu0 %v687
    %v689 = vpop.xlane.xlu0 %688
    %v690 = vadd.f32 %v392, %v393
    %v691 = vadd.f32 %v690, %v394
    %v692 = vadd.f32 %v691, %v395
    %v693 = vadd.f32 %v692, %v396
    %v694 = vadd.f32 %v693, %v397
    %v695 = vadd.f32 %v694, %v398
    %v696 = vadd.f32 %v695, %v399
    %697 = vadd.xlane.f32.xlu0 %v696
    %v698 = vpop.xlane.xlu0 %697
    %v699 = vadd.f32 %v400, %v401
    %v700 = vadd.f32 %v699, %v402
    %v701 = vadd.f32 %v700, %v403
    %v702 = vadd.f32 %v701, %v404
    %v703 = vadd.f32 %v702, %v405
    %v704 = vadd.f32 %v703, %v406
    %v705 = vadd.f32 %v704, %v407
    %706 = vadd.xlane.f32.xlu0 %v705
    %v707 = vpop.xlane.xlu0 %706
    %v708 = vadd.f32 %v408, %v409
    %v709 = vadd.f32 %v708, %v410
    %v710 = vadd.f32 %v709, %v411
    %v711 = vadd.f32 %v710, %v412
    %v712 = vadd.f32 %v711, %v413
    %v713 = vadd.f32 %v712, %v414
    %v714 = vadd.f32 %v713, %v415
    %715 = vadd.xlane.f32.xlu0 %v714
    %v716 = vpop.xlane.xlu0 %715
    %v717 = vadd.f32 %v416, %v417
    %v718 = vadd.f32 %v717, %v418
    %v719 = vadd.f32 %v718, %v419
    %v720 = vadd.f32 %v719, %v420
    %v721 = vadd.f32 %v720, %v421
    %v722 = vadd.f32 %v721, %v422
    %v723 = vadd.f32 %v722, %v423
    %724 = vadd.xlane.f32.xlu0 %v723
    %v725 = vpop.xlane.xlu0 %724
    %v726 = vadd.f32 %v424, %v425
    %v727 = vadd.f32 %v726, %v426
    %v728 = vadd.f32 %v727, %v427
    %v729 = vadd.f32 %v728, %v428
    %v730 = vadd.f32 %v729, %v429
    %v731 = vadd.f32 %v730, %v430
    %v732 = vadd.f32 %v731, %v431
    %733 = vadd.xlane.f32.xlu0 %v732
    %v734 = vpop.xlane.xlu0 %733
    %v735 = vadd.f32 %v432, %v433
    %v736 = vadd.f32 %v735, %v434
    %v737 = vadd.f32 %v736, %v435
    %v738 = vadd.f32 %v737, %v436
    %v739 = vadd.f32 %v738, %v437
    %v740 = vadd.f32 %v739, %v438
    %v741 = vadd.f32 %v740, %v439
    %742 = vadd.xlane.f32.xlu0 %v741
    %v743 = vpop.xlane.xlu0 %742
    %v744 = vadd.f32 %v440, %v441
    %v745 = vadd.f32 %v744, %v442
    %v746 = vadd.f32 %v745, %v443
    %v747 = vadd.f32 %v746, %v444
    %v748 = vadd.f32 %v747, %v445
    %v749 = vadd.f32 %v748, %v446
    %v750 = vadd.f32 %v749, %v447
    %751 = vadd.xlane.f32.xlu0 %v750
    %v752 = vpop.xlane.xlu0 %751
    %v753 = vadd.f32 %v448, %v449
    %v754 = vadd.f32 %v753, %v450
    %v755 = vadd.f32 %v754, %v451
    %v756 = vadd.f32 %v755, %v452
    %v757 = vadd.f32 %v756, %v453
    %v758 = vadd.f32 %v757, %v454
    %v759 = vadd.f32 %v758, %v455
    %760 = vadd.xlane.f32.xlu0 %v759
    %v761 = vpop.xlane.xlu0 %760
    %v762 = vadd.f32 %v456, %v457
    %v763 = vadd.f32 %v762, %v458
    %v764 = vadd.f32 %v763, %v459
    %v765 = vadd.f32 %v764, %v460
    %v766 = vadd.f32 %v765, %v461
    %v767 = vadd.f32 %v766, %v462
    %v768 = vadd.f32 %v767, %v463
    %769 = vadd.xlane.f32.xlu0 %v768
    %v770 = vpop.xlane.xlu0 %769
    %v771 = vadd.f32 %v464, %v465
    %v772 = vadd.f32 %v771, %v466
    %v773 = vadd.f32 %v772, %v467
    %v774 = vadd.f32 %v773, %v468
    %v775 = vadd.f32 %v774, %v469
    %v776 = vadd.f32 %v775, %v470
    %v777 = vadd.f32 %v776, %v471
    %778 = vadd.xlane.f32.xlu0 %v777
    %v779 = vpop.xlane.xlu0 %778
    %v780 = vadd.f32 %v472, %v473
    %v781 = vadd.f32 %v780, %v474
    %v782 = vadd.f32 %v781, %v475
    %v783 = vadd.f32 %v782, %v476
    %v784 = vadd.f32 %v783, %v477
    %v785 = vadd.f32 %v784, %v478
    %v786 = vadd.f32 %v785, %v479
    %787 = vadd.xlane.f32.xlu0 %v786
    %v788 = vpop.xlane.xlu0 %787
    %v789 = vadd.f32 %v480, %v481
    %v790 = vadd.f32 %v789, %v482
    %v791 = vadd.f32 %v790, %v483
    %v792 = vadd.f32 %v791, %v484
    %v793 = vadd.f32 %v792, %v485
    %v794 = vadd.f32 %v793, %v486
    %v795 = vadd.f32 %v794, %v487
    %796 = vadd.xlane.f32.xlu0 %v795
    %v797 = vpop.xlane.xlu0 %796
    %v798 = vadd.f32 %v488, %v489
    %v799 = vadd.f32 %v798, %v490
    %v800 = vadd.f32 %v799, %v491
    %v801 = vadd.f32 %v800, %v492
    %v802 = vadd.f32 %v801, %v493
    %v803 = vadd.f32 %v802, %v494
    %v804 = vadd.f32 %v803, %v495
    %805 = vadd.xlane.f32.xlu0 %v804
    %v806 = vpop.xlane.xlu0 %805
    %v807 = vadd.f32 %v496, %v497
    %v808 = vadd.f32 %v807, %v498
    %v809 = vadd.f32 %v808, %v499
    %v810 = vadd.f32 %v809, %v500
    %v811 = vadd.f32 %v810, %v501
    %v812 = vadd.f32 %v811, %v502
    %v813 = vadd.f32 %v812, %v503
    %814 = vadd.xlane.f32.xlu0 %v813
    %v815 = vpop.xlane.xlu0 %814
    %v816 = vadd.f32 %v504, %v505
    %v817 = vadd.f32 %v816, %v506
    %v818 = vadd.f32 %v817, %v507
    %v819 = vadd.f32 %v818, %v508
    %v820 = vadd.f32 %v819, %v509
    %v821 = vadd.f32 %v820, %v510
    %v822 = vadd.f32 %v821, %v511
    %823 = vadd.xlane.f32.xlu0 %v822
    %v824 = vpop.xlane.xlu0 %823
    %v825 = vadd.f32 %v512, %v513
    %v826 = vadd.f32 %v825, %v514
    %v827 = vadd.f32 %v826, %v515
    %v828 = vadd.f32 %v827, %v516
    %v829 = vadd.f32 %v828, %v517
    %v830 = vadd.f32 %v829, %v518
    %v831 = vadd.f32 %v830, %v519
    %832 = vadd.xlane.f32.xlu0 %v831
    %v833 = vpop.xlane.xlu0 %832
    %v834 = vadd.f32 %v520, %v521
    %v835 = vadd.f32 %v834, %v522
    %v836 = vadd.f32 %v835, %v523
    %v837 = vadd.f32 %v836, %v524
    %v838 = vadd.f32 %v837, %v525
    %v839 = vadd.f32 %v838, %v526
    %v840 = vadd.f32 %v839, %v527
    %841 = vadd.xlane.f32.xlu0 %v840
    %v842 = vpop.xlane.xlu0 %841
    %v843 = vadd.f32 %v528, %v529
    %v844 = vadd.f32 %v843, %v530
    %v845 = vadd.f32 %v844, %v531
    %v846 = vadd.f32 %v845, %v532
    %v847 = vadd.f32 %v846, %v533
    %v848 = vadd.f32 %v847, %v534
    %v849 = vadd.f32 %v848, %v535
    %850 = vadd.xlane.f32.xlu0 %v849
    %v851 = vpop.xlane.xlu0 %850
    %v852 = vadd.f32 %v536, %v537
    %v853 = vadd.f32 %v852, %v538
    %v854 = vadd.f32 %v853, %v539
    %v855 = vadd.f32 %v854, %v540
    %v856 = vadd.f32 %v855, %v541
    %v857 = vadd.f32 %v856, %v542
    %v858 = vadd.f32 %v857, %v543
    %859 = vadd.xlane.f32.xlu0 %v858
    %v860 = vpop.xlane.xlu0 %859
    %v861 = vadd.f32 %v544, %v545
    %v862 = vadd.f32 %v861, %v546
    %v863 = vadd.f32 %v862, %v547
    %v864 = vadd.f32 %v863, %v548
    %v865 = vadd.f32 %v864, %v549
    %v866 = vadd.f32 %v865, %v550
    %v867 = vadd.f32 %v866, %v551
    %868 = vadd.xlane.f32.xlu0 %v867
    %v869 = vpop.xlane.xlu0 %868
    %v870 = vadd.f32 %v552, %v553
    %v871 = vadd.f32 %v870, %v554
    %v872 = vadd.f32 %v871, %v555
    %v873 = vadd.f32 %v872, %v556
    %v874 = vadd.f32 %v873, %v557
    %v875 = vadd.f32 %v874, %v558
    %v876 = vadd.f32 %v875, %v559
    %877 = vadd.xlane.f32.xlu0 %v876
    %v878 = vpop.xlane.xlu0 %877
    %v879 = vadd.f32 %v560, %v561
    %v880 = vadd.f32 %v879, %v562
    %v881 = vadd.f32 %v880, %v563
    %v882 = vadd.f32 %v881, %v564
    %v883 = vadd.f32 %v882, %v565
    %v884 = vadd.f32 %v883, %v566
    %v885 = vadd.f32 %v884, %v567
    %886 = vadd.xlane.f32.xlu0 %v885
    %v887 = vpop.xlane.xlu0 %886
    %v888 = vadd.f32 %v568, %v608
    %v889 = vadd.f32 %v569, %v617
    %v890 = vadd.f32 %v570, %v626
    %v891 = vadd.f32 %v571, %v635
    %v892 = vadd.f32 %v572, %v644
    %v893 = vadd.f32 %v573, %v653
    %v894 = vadd.f32 %v574, %v662
    %v895 = vadd.f32 %v575, %v671
    %v896 = vadd.f32 %v576, %v680
    %v897 = vadd.f32 %v577, %v689
    %v898 = vadd.f32 %v578, %v698
    %v899 = vadd.f32 %v579, %v707
    %v900 = vadd.f32 %v580, %v716
    %v901 = vadd.f32 %v581, %v725
    %v902 = vadd.f32 %v582, %v734
    %v903 = vadd.f32 %v583, %v743
    %v904 = vadd.f32 %v584, %v752
    %v905 = vadd.f32 %v585, %v761
    %v906 = vadd.f32 %v586, %v770
    %v907 = vadd.f32 %v587, %v779
    %v908 = vadd.f32 %v588, %v788
    %v909 = vadd.f32 %v589, %v797
    %v910 = vadd.f32 %v590, %v806
    %v911 = vadd.f32 %v591, %v815
    %v912 = vadd.f32 %v592, %v824
    %v913 = vadd.f32 %v593, %v833
    %v914 = vadd.f32 %v594, %v842
    %v915 = vadd.f32 %v595, %v851
    %v916 = vadd.f32 %v596, %v860
    %v917 = vadd.f32 %v597, %v869
    %v918 = vadd.f32 %v598, %v878
    %v919 = vadd.f32 %v599, %v887
    %vm920 = vcmask 7168
    %921 = vst.msk [vmem:[#allocation3] sm:$0xff] %vm920, %v888
    %922 = vst.msk [vmem:[#allocation3 + $0x8] sm:$0xff] %vm920, %v889
    %923 = vst.msk [vmem:[#allocation3 + $0x10] sm:$0xff] %vm920, %v890
    %924 = vst.msk [vmem:[#allocation3 + $0x18] sm:$0xff] %vm920, %v891
    %925 = vst.msk [vmem:[#allocation3 + $0x20] sm:$0xff] %vm920, %v892
    %926 = vst.msk [vmem:[#allocation3 + $0x28] sm:$0xff] %vm920, %v893
    %927 = vst.msk [vmem:[#allocation3 + $0x30] sm:$0xff] %vm920, %v894
    %928 = vst.msk [vmem:[#allocation3 + $0x38] sm:$0xff] %vm920, %v895
    %929 = vst.msk [vmem:[#allocation3 + $0x40] sm:$0xff] %vm920, %v896
    %930 = vst.msk [vmem:[#allocation3 + $0x48] sm:$0xff] %vm920, %v897
    %931 = vst.msk [vmem:[#allocation3 + $0x50] sm:$0xff] %vm920, %v898
    %932 = vst.msk [vmem:[#allocation3 + $0x58] sm:$0xff] %vm920, %v899
    %933 = vst.msk [vmem:[#allocation3 + $0x60] sm:$0xff] %vm920, %v900
    %934 = vst.msk [vmem:[#allocation3 + $0x68] sm:$0xff] %vm920, %v901
    %935 = vst.msk [vmem:[#allocation3 + $0x70] sm:$0xff] %vm920, %v902
    %936 = vst.msk [vmem:[#allocation3 + $0x78] sm:$0xff] %vm920, %v903
    %937 = vst.msk [vmem:[#allocation3 + $0x80] sm:$0xff] %vm920, %v904
    %938 = vst.msk [vmem:[#allocation3 + $0x88] sm:$0xff] %vm920, %v905
    %939 = vst.msk [vmem:[#allocation3 + $0x90] sm:$0xff] %vm920, %v906
    %940 = vst.msk [vmem:[#allocation3 + $0x98] sm:$0xff] %vm920, %v907
    %941 = vst.msk [vmem:[#allocation3 + $0xa0] sm:$0xff] %vm920, %v908
    %942 = vst.msk [vmem:[#allocation3 + $0xa8] sm:$0xff] %vm920, %v909
    %943 = vst.msk [vmem:[#allocation3 + $0xb0] sm:$0xff] %vm920, %v910
    %944 = vst.msk [vmem:[#allocation3 + $0xb8] sm:$0xff] %vm920, %v911
    %945 = vst.msk [vmem:[#allocation3 + $0xc0] sm:$0xff] %vm920, %v912
    %946 = vst.msk [vmem:[#allocation3 + $0xc8] sm:$0xff] %vm920, %v913
    %947 = vst.msk [vmem:[#allocation3 + $0xd0] sm:$0xff] %vm920, %v914
    %948 = vst.msk [vmem:[#allocation3 + $0xd8] sm:$0xff] %vm920, %v915
    %949 = vst.msk [vmem:[#allocation3 + $0xe0] sm:$0xff] %vm920, %v916
    %950 = vst.msk [vmem:[#allocation3 + $0xe8] sm:$0xff] %vm920, %v917
    %951 = vst.msk [vmem:[#allocation3 + $0xf0] sm:$0xff] %vm920, %v918
    %952 = vst.msk [vmem:[#allocation3 + $0xf8] sm:$0xff] %vm920, %v919
    %v953 = vld [vmem:[#allocation2] sm:$0xff]
    %v954 = vld [vmem:[#allocation2 + $0x8] sm:$0xff]
    %v955 = vld [vmem:[#allocation2 + $0x10] sm:$0xff]
    %v956 = vld [vmem:[#allocation2 + $0x18] sm:$0xff]
    %v957 = vld [vmem:[#allocation2 + $0x20] sm:$0xff]
    %v958 = vld [vmem:[#allocation2 + $0x28] sm:$0xff]
    %v959 = vld [vmem:[#allocation2 + $0x30] sm:$0xff]
    %v960 = vld [vmem:[#allocation2 + $0x38] sm:$0xff]
    %v961 = vld [vmem:[#allocation2 + $0x40] sm:$0xff]
    %v962 = vld [vmem:[#allocation2 + $0x48] sm:$0xff]
    %v963 = vld [vmem:[#allocation2 + $0x50] sm:$0xff]
    %v964 = vld [vmem:[#allocation2 + $0x58] sm:$0xff]
    %v965 = vld [vmem:[#allocation2 + $0x60] sm:$0xff]
    %v966 = vld [vmem:[#allocation2 + $0x68] sm:$0xff]
    %v967 = vld [vmem:[#allocation2 + $0x70] sm:$0xff]
    %v968 = vld [vmem:[#allocation2 + $0x78] sm:$0xff]
    %v969 = vld [vmem:[#allocation2 + $0x80] sm:$0xff]
    %v970 = vld [vmem:[#allocation2 + $0x88] sm:$0xff]
    %v971 = vld [vmem:[#allocation2 + $0x90] sm:$0xff]
    %v972 = vld [vmem:[#allocation2 + $0x98] sm:$0xff]
    %v973 = vld [vmem:[#allocation2 + $0xa0] sm:$0xff]
    %v974 = vld [vmem:[#allocation2 + $0xa8] sm:$0xff]
    %v975 = vld [vmem:[#allocation2 + $0xb0] sm:$0xff]
    %v976 = vld [vmem:[#allocation2 + $0xb8] sm:$0xff]
    %v977 = vld [vmem:[#allocation2 + $0xc0] sm:$0xff]
    %v978 = vld [vmem:[#allocation2 + $0xc8] sm:$0xff]
    %v979 = vld [vmem:[#allocation2 + $0xd0] sm:$0xff]
    %v980 = vld [vmem:[#allocation2 + $0xd8] sm:$0xff]
    %v981 = vld [vmem:[#allocation2 + $0xe0] sm:$0xff]
    %v982 = vld [vmem:[#allocation2 + $0xe8] sm:$0xff]
    %v983 = vld [vmem:[#allocation2 + $0xf0] sm:$0xff]
    %v984 = vld [vmem:[#allocation2 + $0xf8] sm:$0xff]
    %v985 = vld [vmem:[#allocation2 + $0x100] sm:$0xff]
    %v986 = vld [vmem:[#allocation2 + $0x108] sm:$0xff]
    %v987 = vld [vmem:[#allocation2 + $0x110] sm:$0xff]
    %v988 = vld [vmem:[#allocation2 + $0x118] sm:$0xff]
    %v989 = vld [vmem:[#allocation2 + $0x120] sm:$0xff]
    %v990 = vld [vmem:[#allocation2 + $0x128] sm:$0xff]
    %v991 = vld [vmem:[#allocation2 + $0x130] sm:$0xff]
    %v992 = vld [vmem:[#allocation2 + $0x138] sm:$0xff]
    %v993 = vld [vmem:[#allocation2 + $0x140] sm:$0xff]
    %v994 = vld [vmem:[#allocation2 + $0x148] sm:$0xff]
    %v995 = vld [vmem:[#allocation2 + $0x150] sm:$0xff]
    %v996 = vld [vmem:[#allocation2 + $0x158] sm:$0xff]
    %v997 = vld [vmem:[#allocation2 + $0x160] sm:$0xff]
    %v998 = vld [vmem:[#allocation2 + $0x168] sm:$0xff]
    %v999 = vld [vmem:[#allocation2 + $0x170] sm:$0xff]
    %v1000 = vld [vmem:[#allocation2 + $0x178] sm:$0xff]
    %v1001 = vld [vmem:[#allocation2 + $0x180] sm:$0xff]
    %v1002 = vld [vmem:[#allocation2 + $0x188] sm:$0xff]
    %v1003 = vld [vmem:[#allocation2 + $0x190] sm:$0xff]
    %v1004 = vld [vmem:[#allocation2 + $0x198] sm:$0xff]
    %v1005 = vld [vmem:[#allocation2 + $0x1a0] sm:$0xff]
    %v1006 = vld [vmem:[#allocation2 + $0x1a8] sm:$0xff]
    %v1007 = vld [vmem:[#allocation2 + $0x1b0] sm:$0xff]
    %v1008 = vld [vmem:[#allocation2 + $0x1b8] sm:$0xff]
    %v1009 = vld [vmem:[#allocation2 + $0x1c0] sm:$0xff]
    %v1010 = vld [vmem:[#allocation2 + $0x1c8] sm:$0xff]
    %v1011 = vld [vmem:[#allocation2 + $0x1d0] sm:$0xff]
    %v1012 = vld [vmem:[#allocation2 + $0x1d8] sm:$0xff]
    %v1013 = vld [vmem:[#allocation2 + $0x1e0] sm:$0xff]
    %v1014 = vld [vmem:[#allocation2 + $0x1e8] sm:$0xff]
    %v1015 = vld [vmem:[#allocation2 + $0x1f0] sm:$0xff]
    %v1016 = vld [vmem:[#allocation2 + $0x1f8] sm:$0xff]
    %v1017 = vld [vmem:[#allocation7] sm:$0xff]
    %v1018 = vld [vmem:[#allocation7 + $0x8] sm:$0xff]
    %v1019 = vld [vmem:[#allocation7 + $0x10] sm:$0xff]
    %v1020 = vld [vmem:[#allocation7 + $0x18] sm:$0xff]
    %v1021 = vld [vmem:[#allocation7 + $0x20] sm:$0xff]
    %v1022 = vld [vmem:[#allocation7 + $0x28] sm:$0xff]
    %v1023 = vld [vmem:[#allocation7 + $0x30] sm:$0xff]
    %v1024 = vld [vmem:[#allocation7 + $0x38] sm:$0xff]
    %v1025 = vld [vmem:[#allocation7 + $0x40] sm:$0xff]
    %v1026 = vld [vmem:[#allocation7 + $0x48] sm:$0xff]
    %v1027 = vld [vmem:[#allocation7 + $0x50] sm:$0xff]
    %v1028 = vld [vmem:[#allocation7 + $0x58] sm:$0xff]
    %v1029 = vld [vmem:[#allocation7 + $0x60] sm:$0xff]
    %v1030 = vld [vmem:[#allocation7 + $0x68] sm:$0xff]
    %v1031 = vld [vmem:[#allocation7 + $0x70] sm:$0xff]
    %v1032 = vld [vmem:[#allocation7 + $0x78] sm:$0xff]
    %v1033 = vld [vmem:[#allocation7 + $0x80] sm:$0xff]
    %v1034 = vld [vmem:[#allocation7 + $0x88] sm:$0xff]
    %v1035 = vld [vmem:[#allocation7 + $0x90] sm:$0xff]
    %v1036 = vld [vmem:[#allocation7 + $0x98] sm:$0xff]
    %v1037 = vld [vmem:[#allocation7 + $0xa0] sm:$0xff]
    %v1038 = vld [vmem:[#allocation7 + $0xa8] sm:$0xff]
    %v1039 = vld [vmem:[#allocation7 + $0xb0] sm:$0xff]
    %v1040 = vld [vmem:[#allocation7 + $0xb8] sm:$0xff]
    %v1041 = vld [vmem:[#allocation7 + $0xc0] sm:$0xff]
    %v1042 = vld [vmem:[#allocation7 + $0xc8] sm:$0xff]
    %v1043 = vld [vmem:[#allocation7 + $0xd0] sm:$0xff]
    %v1044 = vld [vmem:[#allocation7 + $0xd8] sm:$0xff]
    %v1045 = vld [vmem:[#allocation7 + $0xe0] sm:$0xff]
    %v1046 = vld [vmem:[#allocation7 + $0xe8] sm:$0xff]
    %v1047 = vld [vmem:[#allocation7 + $0xf0] sm:$0xff]
    %v1048 = vld [vmem:[#allocation7 + $0xf8] sm:$0xff]
    %v1049 = vld [vmem:[#allocation7 + $0x100] sm:$0xff]
    %v1050 = vld [vmem:[#allocation7 + $0x108] sm:$0xff]
    %v1051 = vld [vmem:[#allocation7 + $0x110] sm:$0xff]
    %v1052 = vld [vmem:[#allocation7 + $0x118] sm:$0xff]
    %v1053 = vld [vmem:[#allocation7 + $0x120] sm:$0xff]
    %v1054 = vld [vmem:[#allocation7 + $0x128] sm:$0xff]
    %v1055 = vld [vmem:[#allocation7 + $0x130] sm:$0xff]
    %v1056 = vld [vmem:[#allocation7 + $0x138] sm:$0xff]
    %v1057 = vld [vmem:[#allocation7 + $0x140] sm:$0xff]
    %v1058 = vld [vmem:[#allocation7 + $0x148] sm:$0xff]
    %v1059 = vld [vmem:[#allocation7 + $0x150] sm:$0xff]
    %v1060 = vld [vmem:[#allocation7 + $0x158] sm:$0xff]
    %v1061 = vld [vmem:[#allocation7 + $0x160] sm:$0xff]
    %v1062 = vld [vmem:[#allocation7 + $0x168] sm:$0xff]
    %v1063 = vld [vmem:[#allocation7 + $0x170] sm:$0xff]
    %v1064 = vld [vmem:[#allocation7 + $0x178] sm:$0xff]
    %v1065 = vld [vmem:[#allocation7 + $0x180] sm:$0xff]
    %v1066 = vld [vmem:[#allocation7 + $0x188] sm:$0xff]
    %v1067 = vld [vmem:[#allocation7 + $0x190] sm:$0xff]
    %v1068 = vld [vmem:[#allocation7 + $0x198] sm:$0xff]
    %v1069 = vld [vmem:[#allocation7 + $0x1a0] sm:$0xff]
    %v1070 = vld [vmem:[#allocation7 + $0x1a8] sm:$0xff]
    %v1071 = vld [vmem:[#allocation7 + $0x1b0] sm:$0xff]
    %v1072 = vld [vmem:[#allocation7 + $0x1b8] sm:$0xff]
    %v1073 = vld [vmem:[#allocation7 + $0x1c0] sm:$0xff]
    %v1074 = vld [vmem:[#allocation7 + $0x1c8] sm:$0xff]
    %v1075 = vld [vmem:[#allocation7 + $0x1d0] sm:$0xff]
    %v1076 = vld [vmem:[#allocation7 + $0x1d8] sm:$0xff]
    %v1077 = vld [vmem:[#allocation7 + $0x1e0] sm:$0xff]
    %v1078 = vld [vmem:[#allocation7 + $0x1e8] sm:$0xff]
    %v1079 = vld [vmem:[#allocation7 + $0x1f0] sm:$0xff]
    %v1080 = vld [vmem:[#allocation7 + $0x1f8] sm:$0xff]
    %v1081 = vld [vmem:[#allocation7 + $0x200] sm:$0xff]
    %v1082 = vld [vmem:[#allocation7 + $0x208] sm:$0xff]
    %v1083 = vld [vmem:[#allocation7 + $0x210] sm:$0xff]
    %v1084 = vld [vmem:[#allocation7 + $0x218] sm:$0xff]
    %v1085 = vld [vmem:[#allocation7 + $0x220] sm:$0xff]
    %v1086 = vld [vmem:[#allocation7 + $0x228] sm:$0xff]
    %v1087 = vld [vmem:[#allocation7 + $0x230] sm:$0xff]
    %v1088 = vld [vmem:[#allocation7 + $0x238] sm:$0xff]
    %v1089 = vld [vmem:[#allocation7 + $0x240] sm:$0xff]
    %v1090 = vld [vmem:[#allocation7 + $0x248] sm:$0xff]
    %v1091 = vld [vmem:[#allocation7 + $0x250] sm:$0xff]
    %v1092 = vld [vmem:[#allocation7 + $0x258] sm:$0xff]
    %v1093 = vld [vmem:[#allocation7 + $0x260] sm:$0xff]
    %v1094 = vld [vmem:[#allocation7 + $0x268] sm:$0xff]
    %v1095 = vld [vmem:[#allocation7 + $0x270] sm:$0xff]
    %v1096 = vld [vmem:[#allocation7 + $0x278] sm:$0xff]
    %v1097 = vld [vmem:[#allocation7 + $0x280] sm:$0xff]
    %v1098 = vld [vmem:[#allocation7 + $0x288] sm:$0xff]
    %v1099 = vld [vmem:[#allocation7 + $0x290] sm:$0xff]
    %v1100 = vld [vmem:[#allocation7 + $0x298] sm:$0xff]
    %v1101 = vld [vmem:[#allocation7 + $0x2a0] sm:$0xff]
    %v1102 = vld [vmem:[#allocation7 + $0x2a8] sm:$0xff]
    %v1103 = vld [vmem:[#allocation7 + $0x2b0] sm:$0xff]
    %v1104 = vld [vmem:[#allocation7 + $0x2b8] sm:$0xff]
    %v1105 = vld [vmem:[#allocation7 + $0x2c0] sm:$0xff]
    %v1106 = vld [vmem:[#allocation7 + $0x2c8] sm:$0xff]
    %v1107 = vld [vmem:[#allocation7 + $0x2d0] sm:$0xff]
    %v1108 = vld [vmem:[#allocation7 + $0x2d8] sm:$0xff]
    %v1109 = vld [vmem:[#allocation7 + $0x2e0] sm:$0xff]
    %v1110 = vld [vmem:[#allocation7 + $0x2e8] sm:$0xff]
    %v1111 = vld [vmem:[#allocation7 + $0x2f0] sm:$0xff]
    %v1112 = vld [vmem:[#allocation7 + $0x2f8] sm:$0xff]
    %v1113 = vld [vmem:[#allocation7 + $0x300] sm:$0xff]
    %v1114 = vld [vmem:[#allocation7 + $0x308] sm:$0xff]
    %v1115 = vld [vmem:[#allocation7 + $0x310] sm:$0xff]
    %v1116 = vld [vmem:[#allocation7 + $0x318] sm:$0xff]
    %v1117 = vld [vmem:[#allocation7 + $0x320] sm:$0xff]
    %v1118 = vld [vmem:[#allocation7 + $0x328] sm:$0xff]
    %v1119 = vld [vmem:[#allocation7 + $0x330] sm:$0xff]
    %v1120 = vld [vmem:[#allocation7 + $0x338] sm:$0xff]
    %v1121 = vld [vmem:[#allocation7 + $0x340] sm:$0xff]
    %v1122 = vld [vmem:[#allocation7 + $0x348] sm:$0xff]
    %v1123 = vld [vmem:[#allocation7 + $0x350] sm:$0xff]
    %v1124 = vld [vmem:[#allocation7 + $0x358] sm:$0xff]
    %v1125 = vld [vmem:[#allocation7 + $0x360] sm:$0xff]
    %v1126 = vld [vmem:[#allocation7 + $0x368] sm:$0xff]
    %v1127 = vld [vmem:[#allocation7 + $0x370] sm:$0xff]
    %v1128 = vld [vmem:[#allocation7 + $0x378] sm:$0xff]
    %v1129 = vld [vmem:[#allocation7 + $0x380] sm:$0xff]
    %v1130 = vld [vmem:[#allocation7 + $0x388] sm:$0xff]
    %v1131 = vld [vmem:[#allocation7 + $0x390] sm:$0xff]
    %v1132 = vld [vmem:[#allocation7 + $0x398] sm:$0xff]
    %v1133 = vld [vmem:[#allocation7 + $0x3a0] sm:$0xff]
    %v1134 = vld [vmem:[#allocation7 + $0x3a8] sm:$0xff]
    %v1135 = vld [vmem:[#allocation7 + $0x3b0] sm:$0xff]
    %v1136 = vld [vmem:[#allocation7 + $0x3b8] sm:$0xff]
    %v1137 = vld [vmem:[#allocation7 + $0x3c0] sm:$0xff]
    %v1138 = vld [vmem:[#allocation7 + $0x3c8] sm:$0xff]
    %v1139 = vld [vmem:[#allocation7 + $0x3d0] sm:$0xff]
    %v1140 = vld [vmem:[#allocation7 + $0x3d8] sm:$0xff]
    %v1141 = vld [vmem:[#allocation7 + $0x3e0] sm:$0xff]
    %v1142 = vld [vmem:[#allocation7 + $0x3e8] sm:$0xff]
    %v1143 = vld [vmem:[#allocation7 + $0x3f0] sm:$0xff]
    %v1144 = vld [vmem:[#allocation7 + $0x3f8] sm:$0xff]
    %v1273 = vunpack.c.l.b16 %v184
    %v1274 = vunpack.c.h.b16 %v184
    %v1275 = vunpack.c.l.b16 %v185
    %v1276 = vunpack.c.h.b16 %v185
    %v1277 = vunpack.c.l.b16 %v186
    %v1278 = vunpack.c.h.b16 %v186
    %v1279 = vunpack.c.l.b16 %v187
    %v1280 = vunpack.c.h.b16 %v187
    %v1281 = vunpack.c.l.b16 %v188
    %v1282 = vunpack.c.h.b16 %v188
    %v1283 = vunpack.c.l.b16 %v189
    %v1284 = vunpack.c.h.b16 %v189
    %v1285 = vunpack.c.l.b16 %v190
    %v1286 = vunpack.c.h.b16 %v190
    %v1287 = vunpack.c.l.b16 %v191
    %v1288 = vunpack.c.h.b16 %v191
    %v1289 = vunpack.c.l.b16 %v192
    %v1290 = vunpack.c.h.b16 %v192
    %v1291 = vunpack.c.l.b16 %v193
    %v1292 = vunpack.c.h.b16 %v193
    %v1293 = vunpack.c.l.b16 %v194
    %v1294 = vunpack.c.h.b16 %v194
    %v1295 = vunpack.c.l.b16 %v195
    %v1296 = vunpack.c.h.b16 %v195
    %v1297 = vunpack.c.l.b16 %v196
    %v1298 = vunpack.c.h.b16 %v196
    %v1299 = vunpack.c.l.b16 %v197
    %v1300 = vunpack.c.h.b16 %v197
    %v1301 = vunpack.c.l.b16 %v198
    %v1302 = vunpack.c.h.b16 %v198
    %v1303 = vunpack.c.l.b16 %v199
    %v1304 = vunpack.c.h.b16 %v199
    %v1305 = vunpack.c.l.b16 %v200
    %v1306 = vunpack.c.h.b16 %v200
    %v1307 = vunpack.c.l.b16 %v201
    %v1308 = vunpack.c.h.b16 %v201
    %v1309 = vunpack.c.l.b16 %v202
    %v1310 = vunpack.c.h.b16 %v202
    %v1311 = vunpack.c.l.b16 %v203
    %v1312 = vunpack.c.h.b16 %v203
    %v1313 = vunpack.c.l.b16 %v204
    %v1314 = vunpack.c.h.b16 %v204
    %v1315 = vunpack.c.l.b16 %v205
    %v1316 = vunpack.c.h.b16 %v205
    %v1317 = vunpack.c.l.b16 %v206
    %v1318 = vunpack.c.h.b16 %v206
    %v1319 = vunpack.c.l.b16 %v207
    %v1320 = vunpack.c.h.b16 %v207
    %v1321 = vunpack.c.l.b16 %v208
    %v1322 = vunpack.c.h.b16 %v208
    %v1323 = vunpack.c.l.b16 %v209
    %v1324 = vunpack.c.h.b16 %v209
    %v1325 = vunpack.c.l.b16 %v210
    %v1326 = vunpack.c.h.b16 %v210
    %v1327 = vunpack.c.l.b16 %v211
    %v1328 = vunpack.c.h.b16 %v211
    %v1329 = vunpack.c.l.b16 %v212
    %v1330 = vunpack.c.h.b16 %v212
    %v1331 = vunpack.c.l.b16 %v213
    %v1332 = vunpack.c.h.b16 %v213
    %v1333 = vunpack.c.l.b16 %v214
    %v1334 = vunpack.c.h.b16 %v214
    %v1335 = vunpack.c.l.b16 %v215
    %v1336 = vunpack.c.h.b16 %v215
    %v1337 = vunpack.c.l.b16 %v216
    %v1338 = vunpack.c.h.b16 %v216
    %v1339 = vunpack.c.l.b16 %v217
    %v1340 = vunpack.c.h.b16 %v217
    %v1341 = vunpack.c.l.b16 %v218
    %v1342 = vunpack.c.h.b16 %v218
    %v1343 = vunpack.c.l.b16 %v219
    %v1344 = vunpack.c.h.b16 %v219
    %v1345 = vunpack.c.l.b16 %v220
    %v1346 = vunpack.c.h.b16 %v220
    %v1347 = vunpack.c.l.b16 %v221
    %v1348 = vunpack.c.h.b16 %v221
    %v1349 = vunpack.c.l.b16 %v222
    %v1350 = vunpack.c.h.b16 %v222
    %v1351 = vunpack.c.l.b16 %v223
    %v1352 = vunpack.c.h.b16 %v223
    %v1353 = vunpack.c.l.b16 %v224
    %v1354 = vunpack.c.h.b16 %v224
    %v1355 = vunpack.c.l.b16 %v225
    %v1356 = vunpack.c.h.b16 %v225
    %v1357 = vunpack.c.l.b16 %v226
    %v1358 = vunpack.c.h.b16 %v226
    %v1359 = vunpack.c.l.b16 %v227
    %v1360 = vunpack.c.h.b16 %v227
    %v1361 = vunpack.c.l.b16 %v228
    %v1362 = vunpack.c.h.b16 %v228
    %v1363 = vunpack.c.l.b16 %v229
    %v1364 = vunpack.c.h.b16 %v229
    %v1365 = vunpack.c.l.b16 %v230
    %v1366 = vunpack.c.h.b16 %v230
    %v1367 = vunpack.c.l.b16 %v231
    %v1368 = vunpack.c.h.b16 %v231
    %v1369 = vunpack.c.l.b16 %v232
    %v1370 = vunpack.c.h.b16 %v232
    %v1371 = vunpack.c.l.b16 %v233
    %v1372 = vunpack.c.h.b16 %v233
    %v1373 = vunpack.c.l.b16 %v234
    %v1374 = vunpack.c.h.b16 %v234
    %v1375 = vunpack.c.l.b16 %v235
    %v1376 = vunpack.c.h.b16 %v235
    %v1377 = vunpack.c.l.b16 %v236
    %v1378 = vunpack.c.h.b16 %v236
    %v1379 = vunpack.c.l.b16 %v237
    %v1380 = vunpack.c.h.b16 %v237
    %v1381 = vunpack.c.l.b16 %v238
    %v1382 = vunpack.c.h.b16 %v238
    %v1383 = vunpack.c.l.b16 %v239
    %v1384 = vunpack.c.h.b16 %v239
    %v1385 = vunpack.c.l.b16 %v240
    %v1386 = vunpack.c.h.b16 %v240
    %v1387 = vunpack.c.l.b16 %v241
    %v1388 = vunpack.c.h.b16 %v241
    %v1389 = vunpack.c.l.b16 %v242
    %v1390 = vunpack.c.h.b16 %v242
    %v1391 = vunpack.c.l.b16 %v243
    %v1392 = vunpack.c.h.b16 %v243
    %v1393 = vunpack.c.l.b16 %v244
    %v1394 = vunpack.c.h.b16 %v244
    %v1395 = vunpack.c.l.b16 %v245
    %v1396 = vunpack.c.h.b16 %v245
    %v1397 = vunpack.c.l.b16 %v246
    %v1398 = vunpack.c.h.b16 %v246
    %v1399 = vunpack.c.l.b16 %v247
    %v1400 = vunpack.c.h.b16 %v247
    %v1401 = vunpack.c.l.b16 %v248
    %v1402 = vunpack.c.h.b16 %v248
    %v1403 = vunpack.c.l.b16 %v249
    %v1404 = vunpack.c.h.b16 %v249
    %v1405 = vunpack.c.l.b16 %v250
    %v1406 = vunpack.c.h.b16 %v250
    %v1407 = vunpack.c.l.b16 %v251
    %v1408 = vunpack.c.h.b16 %v251
    %v1409 = vunpack.c.l.b16 %v252
    %v1410 = vunpack.c.h.b16 %v252
    %v1411 = vunpack.c.l.b16 %v253
    %v1412 = vunpack.c.h.b16 %v253
    %v1413 = vunpack.c.l.b16 %v254
    %v1414 = vunpack.c.h.b16 %v254
    %v1415 = vunpack.c.l.b16 %v255
    %v1416 = vunpack.c.h.b16 %v255
    %v1417 = vunpack.c.l.b16 %v256
    %v1418 = vunpack.c.h.b16 %v256
    %v1419 = vunpack.c.l.b16 %v257
    %v1420 = vunpack.c.h.b16 %v257
    %v1421 = vunpack.c.l.b16 %v258
    %v1422 = vunpack.c.h.b16 %v258
    %v1423 = vunpack.c.l.b16 %v259
    %v1424 = vunpack.c.h.b16 %v259
    %v1425 = vunpack.c.l.b16 %v260
    %v1426 = vunpack.c.h.b16 %v260
    %v1427 = vunpack.c.l.b16 %v261
    %v1428 = vunpack.c.h.b16 %v261
    %v1429 = vunpack.c.l.b16 %v262
    %v1430 = vunpack.c.h.b16 %v262
    %v1431 = vunpack.c.l.b16 %v263
    %v1432 = vunpack.c.h.b16 %v263
    %v1433 = vunpack.c.l.b16 %v264
    %v1434 = vunpack.c.h.b16 %v264
    %v1435 = vunpack.c.l.b16 %v265
    %v1436 = vunpack.c.h.b16 %v265
    %v1437 = vunpack.c.l.b16 %v266
    %v1438 = vunpack.c.h.b16 %v266
    %v1439 = vunpack.c.l.b16 %v267
    %v1440 = vunpack.c.h.b16 %v267
    %v1441 = vunpack.c.l.b16 %v268
    %v1442 = vunpack.c.h.b16 %v268
    %v1443 = vunpack.c.l.b16 %v269
    %v1444 = vunpack.c.h.b16 %v269
    %v1445 = vunpack.c.l.b16 %v270
    %v1446 = vunpack.c.h.b16 %v270
    %v1447 = vunpack.c.l.b16 %v271
    %v1448 = vunpack.c.h.b16 %v271
    %v1449 = vunpack.c.l.b16 %v272
    %v1450 = vunpack.c.h.b16 %v272
    %v1451 = vunpack.c.l.b16 %v273
    %v1452 = vunpack.c.h.b16 %v273
    %v1453 = vunpack.c.l.b16 %v274
    %v1454 = vunpack.c.h.b16 %v274
    %v1455 = vunpack.c.l.b16 %v275
    %v1456 = vunpack.c.h.b16 %v275
    %v1457 = vunpack.c.l.b16 %v276
    %v1458 = vunpack.c.h.b16 %v276
    %v1459 = vunpack.c.l.b16 %v277
    %v1460 = vunpack.c.h.b16 %v277
    %v1461 = vunpack.c.l.b16 %v278
    %v1462 = vunpack.c.h.b16 %v278
    %v1463 = vunpack.c.l.b16 %v279
    %v1464 = vunpack.c.h.b16 %v279
    %v1465 = vunpack.c.l.b16 %v280
    %v1466 = vunpack.c.h.b16 %v280
    %v1467 = vunpack.c.l.b16 %v281
    %v1468 = vunpack.c.h.b16 %v281
    %v1469 = vunpack.c.l.b16 %v282
    %v1470 = vunpack.c.h.b16 %v282
    %v1471 = vunpack.c.l.b16 %v283
    %v1472 = vunpack.c.h.b16 %v283
    %v1473 = vunpack.c.l.b16 %v284
    %v1474 = vunpack.c.h.b16 %v284
    %v1475 = vunpack.c.l.b16 %v285
    %v1476 = vunpack.c.h.b16 %v285
    %v1477 = vunpack.c.l.b16 %v286
    %v1478 = vunpack.c.h.b16 %v286
    %v1479 = vunpack.c.l.b16 %v287
    %v1480 = vunpack.c.h.b16 %v287
    %v1481 = vunpack.c.l.b16 %v288
    %v1482 = vunpack.c.h.b16 %v288
    %v1483 = vunpack.c.l.b16 %v289
    %v1484 = vunpack.c.h.b16 %v289
    %v1485 = vunpack.c.l.b16 %v290
    %v1486 = vunpack.c.h.b16 %v290
    %v1487 = vunpack.c.l.b16 %v291
    %v1488 = vunpack.c.h.b16 %v291
    %v1489 = vunpack.c.l.b16 %v292
    %v1490 = vunpack.c.h.b16 %v292
    %v1491 = vunpack.c.l.b16 %v293
    %v1492 = vunpack.c.h.b16 %v293
    %v1493 = vunpack.c.l.b16 %v294
    %v1494 = vunpack.c.h.b16 %v294
    %v1495 = vunpack.c.l.b16 %v295
    %v1496 = vunpack.c.h.b16 %v295
    %v1497 = vunpack.c.l.b16 %v296
    %v1498 = vunpack.c.h.b16 %v296
    %v1499 = vunpack.c.l.b16 %v297
    %v1500 = vunpack.c.h.b16 %v297
    %v1501 = vunpack.c.l.b16 %v298
    %v1502 = vunpack.c.h.b16 %v298
    %v1503 = vunpack.c.l.b16 %v299
    %v1504 = vunpack.c.h.b16 %v299
    %v1505 = vunpack.c.l.b16 %v300
    %v1506 = vunpack.c.h.b16 %v300
    %v1507 = vunpack.c.l.b16 %v301
    %v1508 = vunpack.c.h.b16 %v301
    %v1509 = vunpack.c.l.b16 %v302
    %v1510 = vunpack.c.h.b16 %v302
    %v1511 = vunpack.c.l.b16 %v303
    %v1512 = vunpack.c.h.b16 %v303
    %v1513 = vunpack.c.l.b16 %v304
    %v1514 = vunpack.c.h.b16 %v304
    %v1515 = vunpack.c.l.b16 %v305
    %v1516 = vunpack.c.h.b16 %v305
    %v1517 = vunpack.c.l.b16 %v306
    %v1518 = vunpack.c.h.b16 %v306
    %v1519 = vunpack.c.l.b16 %v307
    %v1520 = vunpack.c.h.b16 %v307
    %v1521 = vunpack.c.l.b16 %v308
    %v1522 = vunpack.c.h.b16 %v308
    %v1523 = vunpack.c.l.b16 %v309
    %v1524 = vunpack.c.h.b16 %v309
    %v1525 = vunpack.c.l.b16 %v310
    %v1526 = vunpack.c.h.b16 %v310
    %v1527 = vunpack.c.l.b16 %v311
    %v1528 = vunpack.c.h.b16 %v311
    %v1529 = vpack.c.b16 %v1281, %v1273
    %v1530 = vpack.c.b16 %v1282, %v1274
    %v1531 = vpack.c.b16 %v1283, %v1275
    %v1532 = vpack.c.b16 %v1284, %v1276
    %v1533 = vpack.c.b16 %v1285, %v1277
    %v1534 = vpack.c.b16 %v1286, %v1278
    %v1535 = vpack.c.b16 %v1287, %v1279
    %v1536 = vpack.c.b16 %v1288, %v1280
    %v1537 = vpack.c.b16 %v1297, %v1289
    %v1538 = vpack.c.b16 %v1298, %v1290
    %v1539 = vpack.c.b16 %v1299, %v1291
    %v1540 = vpack.c.b16 %v1300, %v1292
    %v1541 = vpack.c.b16 %v1301, %v1293
    %v1542 = vpack.c.b16 %v1302, %v1294
    %v1543 = vpack.c.b16 %v1303, %v1295
    %v1544 = vpack.c.b16 %v1304, %v1296
    %v1545 = vpack.c.b16 %v1313, %v1305
    %v1546 = vpack.c.b16 %v1314, %v1306
    %v1547 = vpack.c.b16 %v1315, %v1307
    %v1548 = vpack.c.b16 %v1316, %v1308
    %v1549 = vpack.c.b16 %v1317, %v1309
    %v1550 = vpack.c.b16 %v1318, %v1310
    %v1551 = vpack.c.b16 %v1319, %v1311
    %v1552 = vpack.c.b16 %v1320, %v1312
    %v1553 = vpack.c.b16 %v1329, %v1321
    %v1554 = vpack.c.b16 %v1330, %v1322
    %v1555 = vpack.c.b16 %v1331, %v1323
    %v1556 = vpack.c.b16 %v1332, %v1324
    %v1557 = vpack.c.b16 %v1333, %v1325
    %v1558 = vpack.c.b16 %v1334, %v1326
    %v1559 = vpack.c.b16 %v1335, %v1327
    %v1560 = vpack.c.b16 %v1336, %v1328
    %v1561 = vpack.c.b16 %v1345, %v1337
    %v1562 = vpack.c.b16 %v1346, %v1338
    %v1563 = vpack.c.b16 %v1347, %v1339
    %v1564 = vpack.c.b16 %v1348, %v1340
    %v1565 = vpack.c.b16 %v1349, %v1341
    %v1566 = vpack.c.b16 %v1350, %v1342
    %v1567 = vpack.c.b16 %v1351, %v1343
    %v1568 = vpack.c.b16 %v1352, %v1344
    %v1569 = vpack.c.b16 %v1361, %v1353
    %v1570 = vpack.c.b16 %v1362, %v1354
    %v1571 = vpack.c.b16 %v1363, %v1355
    %v1572 = vpack.c.b16 %v1364, %v1356
    %v1573 = vpack.c.b16 %v1365, %v1357
    %v1574 = vpack.c.b16 %v1366, %v1358
    %v1575 = vpack.c.b16 %v1367, %v1359
    %v1576 = vpack.c.b16 %v1368, %v1360
    %v1577 = vpack.c.b16 %v1377, %v1369
    %v1578 = vpack.c.b16 %v1378, %v1370
    %v1579 = vpack.c.b16 %v1379, %v1371
    %v1580 = vpack.c.b16 %v1380, %v1372
    %v1581 = vpack.c.b16 %v1381, %v1373
    %v1582 = vpack.c.b16 %v1382, %v1374
    %v1583 = vpack.c.b16 %v1383, %v1375
    %v1584 = vpack.c.b16 %v1384, %v1376
    %v1585 = vpack.c.b16 %v1393, %v1385
    %v1586 = vpack.c.b16 %v1394, %v1386
    %v1587 = vpack.c.b16 %v1395, %v1387
    %v1588 = vpack.c.b16 %v1396, %v1388
    %v1589 = vpack.c.b16 %v1397, %v1389
    %v1590 = vpack.c.b16 %v1398, %v1390
    %v1591 = vpack.c.b16 %v1399, %v1391
    %v1592 = vpack.c.b16 %v1400, %v1392
    %v1593 = vpack.c.b16 %v1409, %v1401
    %v1594 = vpack.c.b16 %v1410, %v1402
    %v1595 = vpack.c.b16 %v1411, %v1403
    %v1596 = vpack.c.b16 %v1412, %v1404
    %v1597 = vpack.c.b16 %v1413, %v1405
    %v1598 = vpack.c.b16 %v1414, %v1406
    %v1599 = vpack.c.b16 %v1415, %v1407
    %v1600 = vpack.c.b16 %v1416, %v1408
    %v1601 = vpack.c.b16 %v1425, %v1417
    %v1602 = vpack.c.b16 %v1426, %v1418
    %v1603 = vpack.c.b16 %v1427, %v1419
    %v1604 = vpack.c.b16 %v1428, %v1420
    %v1605 = vpack.c.b16 %v1429, %v1421
    %v1606 = vpack.c.b16 %v1430, %v1422
    %v1607 = vpack.c.b16 %v1431, %v1423
    %v1608 = vpack.c.b16 %v1432, %v1424
    %v1609 = vpack.c.b16 %v1441, %v1433
    %v1610 = vpack.c.b16 %v1442, %v1434
    %v1611 = vpack.c.b16 %v1443, %v1435
    %v1612 = vpack.c.b16 %v1444, %v1436
    %v1613 = vpack.c.b16 %v1445, %v1437
    %v1614 = vpack.c.b16 %v1446, %v1438
    %v1615 = vpack.c.b16 %v1447, %v1439
    %v1616 = vpack.c.b16 %v1448, %v1440
    %v1617 = vpack.c.b16 %v1457, %v1449
    %v1618 = vpack.c.b16 %v1458, %v1450
    %v1619 = vpack.c.b16 %v1459, %v1451
    %v1620 = vpack.c.b16 %v1460, %v1452
    %v1621 = vpack.c.b16 %v1461, %v1453
    %v1622 = vpack.c.b16 %v1462, %v1454
    %v1623 = vpack.c.b16 %v1463, %v1455
    %v1624 = vpack.c.b16 %v1464, %v1456
    %v1625 = vpack.c.b16 %v1473, %v1465
    %v1626 = vpack.c.b16 %v1474, %v1466
    %v1627 = vpack.c.b16 %v1475, %v1467
    %v1628 = vpack.c.b16 %v1476, %v1468
    %v1629 = vpack.c.b16 %v1477, %v1469
    %v1630 = vpack.c.b16 %v1478, %v1470
    %v1631 = vpack.c.b16 %v1479, %v1471
    %v1632 = vpack.c.b16 %v1480, %v1472
    %v1633 = vpack.c.b16 %v1489, %v1481
    %v1634 = vpack.c.b16 %v1490, %v1482
    %v1635 = vpack.c.b16 %v1491, %v1483
    %v1636 = vpack.c.b16 %v1492, %v1484
    %v1637 = vpack.c.b16 %v1493, %v1485
    %v1638 = vpack.c.b16 %v1494, %v1486
    %v1639 = vpack.c.b16 %v1495, %v1487
    %v1640 = vpack.c.b16 %v1496, %v1488
    %v1641 = vpack.c.b16 %v1505, %v1497
    %v1642 = vpack.c.b16 %v1506, %v1498
    %v1643 = vpack.c.b16 %v1507, %v1499
    %v1644 = vpack.c.b16 %v1508, %v1500
    %v1645 = vpack.c.b16 %v1509, %v1501
    %v1646 = vpack.c.b16 %v1510, %v1502
    %v1647 = vpack.c.b16 %v1511, %v1503
    %v1648 = vpack.c.b16 %v1512, %v1504
    %v1649 = vpack.c.b16 %v1521, %v1513
    %v1650 = vpack.c.b16 %v1522, %v1514
    %v1651 = vpack.c.b16 %v1523, %v1515
    %v1652 = vpack.c.b16 %v1524, %v1516
    %v1653 = vpack.c.b16 %v1525, %v1517
    %v1654 = vpack.c.b16 %v1526, %v1518
    %v1655 = vpack.c.b16 %v1527, %v1519
    %v1656 = vpack.c.b16 %v1528, %v1520
    %v1913 = vunpack.c.l.b16 %v1017
    %v1914 = vunpack.c.h.b16 %v1017
    %v1915 = vunpack.c.l.b16 %v1018
    %v1916 = vunpack.c.h.b16 %v1018
    %v1917 = vunpack.c.l.b16 %v1019
    %v1918 = vunpack.c.h.b16 %v1019
    %v1919 = vunpack.c.l.b16 %v1020
    %v1920 = vunpack.c.h.b16 %v1020
    %v1921 = vunpack.c.l.b16 %v1021
    %v1922 = vunpack.c.h.b16 %v1021
    %v1923 = vunpack.c.l.b16 %v1022
    %v1924 = vunpack.c.h.b16 %v1022
    %v1925 = vunpack.c.l.b16 %v1023
    %v1926 = vunpack.c.h.b16 %v1023
    %v1927 = vunpack.c.l.b16 %v1024
    %v1928 = vunpack.c.h.b16 %v1024
    %v1929 = vunpack.c.l.b16 %v1025
    %v1930 = vunpack.c.h.b16 %v1025
    %v1931 = vunpack.c.l.b16 %v1026
    %v1932 = vunpack.c.h.b16 %v1026
    %v1933 = vunpack.c.l.b16 %v1027
    %v1934 = vunpack.c.h.b16 %v1027
    %v1935 = vunpack.c.l.b16 %v1028
    %v1936 = vunpack.c.h.b16 %v1028
    %v1937 = vunpack.c.l.b16 %v1029
    %v1938 = vunpack.c.h.b16 %v1029
    %v1939 = vunpack.c.l.b16 %v1030
    %v1940 = vunpack.c.h.b16 %v1030
    %v1941 = vunpack.c.l.b16 %v1031
    %v1942 = vunpack.c.h.b16 %v1031
    %v1943 = vunpack.c.l.b16 %v1032
    %v1944 = vunpack.c.h.b16 %v1032
    %v1945 = vunpack.c.l.b16 %v1033
    %v1946 = vunpack.c.h.b16 %v1033
    %v1947 = vunpack.c.l.b16 %v1034
    %v1948 = vunpack.c.h.b16 %v1034
    %v1949 = vunpack.c.l.b16 %v1035
    %v1950 = vunpack.c.h.b16 %v1035
    %v1951 = vunpack.c.l.b16 %v1036
    %v1952 = vunpack.c.h.b16 %v1036
    %v1953 = vunpack.c.l.b16 %v1037
    %v1954 = vunpack.c.h.b16 %v1037
    %v1955 = vunpack.c.l.b16 %v1038
    %v1956 = vunpack.c.h.b16 %v1038
    %v1957 = vunpack.c.l.b16 %v1039
    %v1958 = vunpack.c.h.b16 %v1039
    %v1959 = vunpack.c.l.b16 %v1040
    %v1960 = vunpack.c.h.b16 %v1040
    %v1961 = vunpack.c.l.b16 %v1041
    %v1962 = vunpack.c.h.b16 %v1041
    %v1963 = vunpack.c.l.b16 %v1042
    %v1964 = vunpack.c.h.b16 %v1042
    %v1965 = vunpack.c.l.b16 %v1043
    %v1966 = vunpack.c.h.b16 %v1043
    %v1967 = vunpack.c.l.b16 %v1044
    %v1968 = vunpack.c.h.b16 %v1044
    %v1969 = vunpack.c.l.b16 %v1045
    %v1970 = vunpack.c.h.b16 %v1045
    %v1971 = vunpack.c.l.b16 %v1046
    %v1972 = vunpack.c.h.b16 %v1046
    %v1973 = vunpack.c.l.b16 %v1047
    %v1974 = vunpack.c.h.b16 %v1047
    %v1975 = vunpack.c.l.b16 %v1048
    %v1976 = vunpack.c.h.b16 %v1048
    %v1977 = vunpack.c.l.b16 %v1049
    %v1978 = vunpack.c.h.b16 %v1049
    %v1979 = vunpack.c.l.b16 %v1050
    %v1980 = vunpack.c.h.b16 %v1050
    %v1981 = vunpack.c.l.b16 %v1051
    %v1982 = vunpack.c.h.b16 %v1051
    %v1983 = vunpack.c.l.b16 %v1052
    %v1984 = vunpack.c.h.b16 %v1052
    %v1985 = vunpack.c.l.b16 %v1053
    %v1986 = vunpack.c.h.b16 %v1053
    %v1987 = vunpack.c.l.b16 %v1054
    %v1988 = vunpack.c.h.b16 %v1054
    %v1989 = vunpack.c.l.b16 %v1055
    %v1990 = vunpack.c.h.b16 %v1055
    %v1991 = vunpack.c.l.b16 %v1056
    %v1992 = vunpack.c.h.b16 %v1056
    %v1993 = vunpack.c.l.b16 %v1057
    %v1994 = vunpack.c.h.b16 %v1057
    %v1995 = vunpack.c.l.b16 %v1058
    %v1996 = vunpack.c.h.b16 %v1058
    %v1997 = vunpack.c.l.b16 %v1059
    %v1998 = vunpack.c.h.b16 %v1059
    %v1999 = vunpack.c.l.b16 %v1060
    %v2000 = vunpack.c.h.b16 %v1060
    %v2001 = vunpack.c.l.b16 %v1061
    %v2002 = vunpack.c.h.b16 %v1061
    %v2003 = vunpack.c.l.b16 %v1062
    %v2004 = vunpack.c.h.b16 %v1062
    %v2005 = vunpack.c.l.b16 %v1063
    %v2006 = vunpack.c.h.b16 %v1063
    %v2007 = vunpack.c.l.b16 %v1064
    %v2008 = vunpack.c.h.b16 %v1064
    %v2009 = vunpack.c.l.b16 %v1065
    %v2010 = vunpack.c.h.b16 %v1065
    %v2011 = vunpack.c.l.b16 %v1066
    %v2012 = vunpack.c.h.b16 %v1066
    %v2013 = vunpack.c.l.b16 %v1067
    %v2014 = vunpack.c.h.b16 %v1067
    %v2015 = vunpack.c.l.b16 %v1068
    %v2016 = vunpack.c.h.b16 %v1068
    %v2017 = vunpack.c.l.b16 %v1069
    %v2018 = vunpack.c.h.b16 %v1069
    %v2019 = vunpack.c.l.b16 %v1070
    %v2020 = vunpack.c.h.b16 %v1070
    %v2021 = vunpack.c.l.b16 %v1071
    %v2022 = vunpack.c.h.b16 %v1071
    %v2023 = vunpack.c.l.b16 %v1072
    %v2024 = vunpack.c.h.b16 %v1072
    %v2025 = vunpack.c.l.b16 %v1073
    %v2026 = vunpack.c.h.b16 %v1073
    %v2027 = vunpack.c.l.b16 %v1074
    %v2028 = vunpack.c.h.b16 %v1074
    %v2029 = vunpack.c.l.b16 %v1075
    %v2030 = vunpack.c.h.b16 %v1075
    %v2031 = vunpack.c.l.b16 %v1076
    %v2032 = vunpack.c.h.b16 %v1076
    %v2033 = vunpack.c.l.b16 %v1077
    %v2034 = vunpack.c.h.b16 %v1077
    %v2035 = vunpack.c.l.b16 %v1078
    %v2036 = vunpack.c.h.b16 %v1078
    %v2037 = vunpack.c.l.b16 %v1079
    %v2038 = vunpack.c.h.b16 %v1079
    %v2039 = vunpack.c.l.b16 %v1080
    %v2040 = vunpack.c.h.b16 %v1080
    %v2041 = vunpack.c.l.b16 %v1081
    %v2042 = vunpack.c.h.b16 %v1081
    %v2043 = vunpack.c.l.b16 %v1082
    %v2044 = vunpack.c.h.b16 %v1082
    %v2045 = vunpack.c.l.b16 %v1083
    %v2046 = vunpack.c.h.b16 %v1083
    %v2047 = vunpack.c.l.b16 %v1084
    %v2048 = vunpack.c.h.b16 %v1084
    %v2049 = vunpack.c.l.b16 %v1085
    %v2050 = vunpack.c.h.b16 %v1085
    %v2051 = vunpack.c.l.b16 %v1086
    %v2052 = vunpack.c.h.b16 %v1086
    %v2053 = vunpack.c.l.b16 %v1087
    %v2054 = vunpack.c.h.b16 %v1087
    %v2055 = vunpack.c.l.b16 %v1088
    %v2056 = vunpack.c.h.b16 %v1088
    %v2057 = vunpack.c.l.b16 %v1089
    %v2058 = vunpack.c.h.b16 %v1089
    %v2059 = vunpack.c.l.b16 %v1090
    %v2060 = vunpack.c.h.b16 %v1090
    %v2061 = vunpack.c.l.b16 %v1091
    %v2062 = vunpack.c.h.b16 %v1091
    %v2063 = vunpack.c.l.b16 %v1092
    %v2064 = vunpack.c.h.b16 %v1092
    %v2065 = vunpack.c.l.b16 %v1093
    %v2066 = vunpack.c.h.b16 %v1093
    %v2067 = vunpack.c.l.b16 %v1094
    %v2068 = vunpack.c.h.b16 %v1094
    %v2069 = vunpack.c.l.b16 %v1095
    %v2070 = vunpack.c.h.b16 %v1095
    %v2071 = vunpack.c.l.b16 %v1096
    %v2072 = vunpack.c.h.b16 %v1096
    %v2073 = vunpack.c.l.b16 %v1097
    %v2074 = vunpack.c.h.b16 %v1097
    %v2075 = vunpack.c.l.b16 %v1098
    %v2076 = vunpack.c.h.b16 %v1098
    %v2077 = vunpack.c.l.b16 %v1099
    %v2078 = vunpack.c.h.b16 %v1099
    %v2079 = vunpack.c.l.b16 %v1100
    %v2080 = vunpack.c.h.b16 %v1100
    %v2081 = vunpack.c.l.b16 %v1101
    %v2082 = vunpack.c.h.b16 %v1101
    %v2083 = vunpack.c.l.b16 %v1102
    %v2084 = vunpack.c.h.b16 %v1102
    %v2085 = vunpack.c.l.b16 %v1103
    %v2086 = vunpack.c.h.b16 %v1103
    %v2087 = vunpack.c.l.b16 %v1104
    %v2088 = vunpack.c.h.b16 %v1104
    %v2089 = vunpack.c.l.b16 %v1105
    %v2090 = vunpack.c.h.b16 %v1105
    %v2091 = vunpack.c.l.b16 %v1106
    %v2092 = vunpack.c.h.b16 %v1106
    %v2093 = vunpack.c.l.b16 %v1107
    %v2094 = vunpack.c.h.b16 %v1107
    %v2095 = vunpack.c.l.b16 %v1108
    %v2096 = vunpack.c.h.b16 %v1108
    %v2097 = vunpack.c.l.b16 %v1109
    %v2098 = vunpack.c.h.b16 %v1109
    %v2099 = vunpack.c.l.b16 %v1110
    %v2100 = vunpack.c.h.b16 %v1110
    %v2101 = vunpack.c.l.b16 %v1111
    %v2102 = vunpack.c.h.b16 %v1111
    %v2103 = vunpack.c.l.b16 %v1112
    %v2104 = vunpack.c.h.b16 %v1112
    %v2105 = vunpack.c.l.b16 %v1113
    %v2106 = vunpack.c.h.b16 %v1113
    %v2107 = vunpack.c.l.b16 %v1114
    %v2108 = vunpack.c.h.b16 %v1114
    %v2109 = vunpack.c.l.b16 %v1115
    %v2110 = vunpack.c.h.b16 %v1115
    %v2111 = vunpack.c.l.b16 %v1116
    %v2112 = vunpack.c.h.b16 %v1116
    %v2113 = vunpack.c.l.b16 %v1117
    %v2114 = vunpack.c.h.b16 %v1117
    %v2115 = vunpack.c.l.b16 %v1118
    %v2116 = vunpack.c.h.b16 %v1118
    %v2117 = vunpack.c.l.b16 %v1119
    %v2118 = vunpack.c.h.b16 %v1119
    %v2119 = vunpack.c.l.b16 %v1120
    %v2120 = vunpack.c.h.b16 %v1120
    %v2121 = vunpack.c.l.b16 %v1121
    %v2122 = vunpack.c.h.b16 %v1121
    %v2123 = vunpack.c.l.b16 %v1122
    %v2124 = vunpack.c.h.b16 %v1122
    %v2125 = vunpack.c.l.b16 %v1123
    %v2126 = vunpack.c.h.b16 %v1123
    %v2127 = vunpack.c.l.b16 %v1124
    %v2128 = vunpack.c.h.b16 %v1124
    %v2129 = vunpack.c.l.b16 %v1125
    %v2130 = vunpack.c.h.b16 %v1125
    %v2131 = vunpack.c.l.b16 %v1126
    %v2132 = vunpack.c.h.b16 %v1126
    %v2133 = vunpack.c.l.b16 %v1127
    %v2134 = vunpack.c.h.b16 %v1127
    %v2135 = vunpack.c.l.b16 %v1128
    %v2136 = vunpack.c.h.b16 %v1128
    %v2137 = vunpack.c.l.b16 %v1129
    %v2138 = vunpack.c.h.b16 %v1129
    %v2139 = vunpack.c.l.b16 %v1130
    %v2140 = vunpack.c.h.b16 %v1130
    %v2141 = vunpack.c.l.b16 %v1131
    %v2142 = vunpack.c.h.b16 %v1131
    %v2143 = vunpack.c.l.b16 %v1132
    %v2144 = vunpack.c.h.b16 %v1132
    %v2145 = vunpack.c.l.b16 %v1133
    %v2146 = vunpack.c.h.b16 %v1133
    %v2147 = vunpack.c.l.b16 %v1134
    %v2148 = vunpack.c.h.b16 %v1134
    %v2149 = vunpack.c.l.b16 %v1135
    %v2150 = vunpack.c.h.b16 %v1135
    %v2151 = vunpack.c.l.b16 %v1136
    %v2152 = vunpack.c.h.b16 %v1136
    %v2153 = vunpack.c.l.b16 %v1137
    %v2154 = vunpack.c.h.b16 %v1137
    %v2155 = vunpack.c.l.b16 %v1138
    %v2156 = vunpack.c.h.b16 %v1138
    %v2157 = vunpack.c.l.b16 %v1139
    %v2158 = vunpack.c.h.b16 %v1139
    %v2159 = vunpack.c.l.b16 %v1140
    %v2160 = vunpack.c.h.b16 %v1140
    %v2161 = vunpack.c.l.b16 %v1141
    %v2162 = vunpack.c.h.b16 %v1141
    %v2163 = vunpack.c.l.b16 %v1142
    %v2164 = vunpack.c.h.b16 %v1142
    %v2165 = vunpack.c.l.b16 %v1143
    %v2166 = vunpack.c.h.b16 %v1143
    %v2167 = vunpack.c.l.b16 %v1144
    %v2168 = vunpack.c.h.b16 %v1144
    %v2169 = vpack.c.b16 %v1915, %v1913
    %v2170 = vpack.c.b16 %v1916, %v1914
    %v2171 = vpack.c.b16 %v1919, %v1917
    %v2172 = vpack.c.b16 %v1920, %v1918
    %v2173 = vpack.c.b16 %v1923, %v1921
    %v2174 = vpack.c.b16 %v1924, %v1922
    %v2175 = vpack.c.b16 %v1927, %v1925
    %v2176 = vpack.c.b16 %v1928, %v1926
    %v2177 = vpack.c.b16 %v1931, %v1929
    %v2178 = vpack.c.b16 %v1932, %v1930
    %v2179 = vpack.c.b16 %v1935, %v1933
    %v2180 = vpack.c.b16 %v1936, %v1934
    %v2181 = vpack.c.b16 %v1939, %v1937
    %v2182 = vpack.c.b16 %v1940, %v1938
    %v2183 = vpack.c.b16 %v1943, %v1941
    %v2184 = vpack.c.b16 %v1944, %v1942
    %v2185 = vpack.c.b16 %v1947, %v1945
    %v2186 = vpack.c.b16 %v1948, %v1946
    %v2187 = vpack.c.b16 %v1951, %v1949
    %v2188 = vpack.c.b16 %v1952, %v1950
    %v2189 = vpack.c.b16 %v1955, %v1953
    %v2190 = vpack.c.b16 %v1956, %v1954
    %v2191 = vpack.c.b16 %v1959, %v1957
    %v2192 = vpack.c.b16 %v1960, %v1958
    %v2193 = vpack.c.b16 %v1963, %v1961
    %v2194 = vpack.c.b16 %v1964, %v1962
    %v2195 = vpack.c.b16 %v1967, %v1965
    %v2196 = vpack.c.b16 %v1968, %v1966
    %v2197 = vpack.c.b16 %v1971, %v1969
    %v2198 = vpack.c.b16 %v1972, %v1970
    %v2199 = vpack.c.b16 %v1975, %v1973
    %v2200 = vpack.c.b16 %v1976, %v1974
    %v2201 = vpack.c.b16 %v1979, %v1977
    %v2202 = vpack.c.b16 %v1980, %v1978
    %v2203 = vpack.c.b16 %v1983, %v1981
    %v2204 = vpack.c.b16 %v1984, %v1982
    %v2205 = vpack.c.b16 %v1987, %v1985
    %v2206 = vpack.c.b16 %v1988, %v1986
    %v2207 = vpack.c.b16 %v1991, %v1989
    %v2208 = vpack.c.b16 %v1992, %v1990
    %v2209 = vpack.c.b16 %v1995, %v1993
    %v2210 = vpack.c.b16 %v1996, %v1994
    %v2211 = vpack.c.b16 %v1999, %v1997
    %v2212 = vpack.c.b16 %v2000, %v1998
    %v2213 = vpack.c.b16 %v2003, %v2001
    %v2214 = vpack.c.b16 %v2004, %v2002
    %v2215 = vpack.c.b16 %v2007, %v2005
    %v2216 = vpack.c.b16 %v2008, %v2006
    %v2217 = vpack.c.b16 %v2011, %v2009
    %v2218 = vpack.c.b16 %v2012, %v2010
    %v2219 = vpack.c.b16 %v2015, %v2013
    %v2220 = vpack.c.b16 %v2016, %v2014
    %v2221 = vpack.c.b16 %v2019, %v2017
    %v2222 = vpack.c.b16 %v2020, %v2018
    %v2223 = vpack.c.b16 %v2023, %v2021
    %v2224 = vpack.c.b16 %v2024, %v2022
    %v2225 = vpack.c.b16 %v2027, %v2025
    %v2226 = vpack.c.b16 %v2028, %v2026
    %v2227 = vpack.c.b16 %v2031, %v2029
    %v2228 = vpack.c.b16 %v2032, %v2030
    %v2229 = vpack.c.b16 %v2035, %v2033
    %v2230 = vpack.c.b16 %v2036, %v2034
    %v2231 = vpack.c.b16 %v2039, %v2037
    %v2232 = vpack.c.b16 %v2040, %v2038
    %v2233 = vpack.c.b16 %v2043, %v2041
    %v2234 = vpack.c.b16 %v2044, %v2042
    %v2235 = vpack.c.b16 %v2047, %v2045
    %v2236 = vpack.c.b16 %v2048, %v2046
    %v2237 = vpack.c.b16 %v2051, %v2049
    %v2238 = vpack.c.b16 %v2052, %v2050
    %v2239 = vpack.c.b16 %v2055, %v2053
    %v2240 = vpack.c.b16 %v2056, %v2054
    %v2241 = vpack.c.b16 %v2059, %v2057
    %v2242 = vpack.c.b16 %v2060, %v2058
    %v2243 = vpack.c.b16 %v2063, %v2061
    %v2244 = vpack.c.b16 %v2064, %v2062
    %v2245 = vpack.c.b16 %v2067, %v2065
    %v2246 = vpack.c.b16 %v2068, %v2066
    %v2247 = vpack.c.b16 %v2071, %v2069
    %v2248 = vpack.c.b16 %v2072, %v2070
    %v2249 = vpack.c.b16 %v2075, %v2073
    %v2250 = vpack.c.b16 %v2076, %v2074
    %v2251 = vpack.c.b16 %v2079, %v2077
    %v2252 = vpack.c.b16 %v2080, %v2078
    %v2253 = vpack.c.b16 %v2083, %v2081
    %v2254 = vpack.c.b16 %v2084, %v2082
    %v2255 = vpack.c.b16 %v2087, %v2085
    %v2256 = vpack.c.b16 %v2088, %v2086
    %v2257 = vpack.c.b16 %v2091, %v2089
    %v2258 = vpack.c.b16 %v2092, %v2090
    %v2259 = vpack.c.b16 %v2095, %v2093
    %v2260 = vpack.c.b16 %v2096, %v2094
    %v2261 = vpack.c.b16 %v2099, %v2097
    %v2262 = vpack.c.b16 %v2100, %v2098
    %v2263 = vpack.c.b16 %v2103, %v2101
    %v2264 = vpack.c.b16 %v2104, %v2102
    %v2265 = vpack.c.b16 %v2107, %v2105
    %v2266 = vpack.c.b16 %v2108, %v2106
    %v2267 = vpack.c.b16 %v2111, %v2109
    %v2268 = vpack.c.b16 %v2112, %v2110
    %v2269 = vpack.c.b16 %v2115, %v2113
    %v2270 = vpack.c.b16 %v2116, %v2114
    %v2271 = vpack.c.b16 %v2119, %v2117
    %v2272 = vpack.c.b16 %v2120, %v2118
    %v2273 = vpack.c.b16 %v2123, %v2121
    %v2274 = vpack.c.b16 %v2124, %v2122
    %v2275 = vpack.c.b16 %v2127, %v2125
    %v2276 = vpack.c.b16 %v2128, %v2126
    %v2277 = vpack.c.b16 %v2131, %v2129
    %v2278 = vpack.c.b16 %v2132, %v2130
    %v2279 = vpack.c.b16 %v2135, %v2133
    %v2280 = vpack.c.b16 %v2136, %v2134
    %v2281 = vpack.c.b16 %v2139, %v2137
    %v2282 = vpack.c.b16 %v2140, %v2138
    %v2283 = vpack.c.b16 %v2143, %v2141
    %v2284 = vpack.c.b16 %v2144, %v2142
    %v2285 = vpack.c.b16 %v2147, %v2145
    %v2286 = vpack.c.b16 %v2148, %v2146
    %v2287 = vpack.c.b16 %v2151, %v2149
    %v2288 = vpack.c.b16 %v2152, %v2150
    %v2289 = vpack.c.b16 %v2155, %v2153
    %v2290 = vpack.c.b16 %v2156, %v2154
    %v2291 = vpack.c.b16 %v2159, %v2157
    %v2292 = vpack.c.b16 %v2160, %v2158
    %v2293 = vpack.c.b16 %v2163, %v2161
    %v2294 = vpack.c.b16 %v2164, %v2162
    %v2295 = vpack.c.b16 %v2167, %v2165
    %v2296 = vpack.c.b16 %v2168, %v2166
    %2425 = vmatprep.subr.bf16.mxu0 %v2184
    %2426 = vmatpush1.bf16.msra.mxu0 %v2183
    %2427 = vmatprep.subr.bf16.mxu0 %v2182
    %2428 = vmatpush1.bf16.msra.mxu0 %v2181
    %2429 = vmatprep.subr.bf16.mxu0 %v2180
    %2430 = vmatpush1.bf16.msra.mxu0 %v2179
    %2431 = vmatprep.subr.bf16.mxu0 %v2178
    %2432 = vmatpush1.bf16.msra.mxu0 %v2177
    %2433 = vmatprep.subr.bf16.mxu0 %v2176
    %2434 = vmatpush1.bf16.msra.mxu0 %v2175
    %2435 = vmatprep.subr.bf16.mxu0 %v2174
    %2436 = vmatpush1.bf16.msra.mxu0 %v2173
    %2437 = vmatprep.subr.bf16.mxu0 %v2172
    %2438 = vmatpush1.bf16.msra.mxu0 %v2171
    %2439 = vmatprep.subr.bf16.mxu0 %v2170
    %2440 = vmatpush1.bf16.msra.mxu0 %v2169
    %2441 = vmatprep.subr.bf16.mxu0 %v2200
    %2442 = vmatpush2.bf16.msra.mxu0 %v2199
    %2443 = vmatprep.subr.bf16.mxu0 %v2198
    %2444 = vmatpush2.bf16.msra.mxu0 %v2197
    %2445 = vmatprep.subr.bf16.mxu0 %v2196
    %2446 = vmatpush2.bf16.msra.mxu0 %v2195
    %2447 = vmatprep.subr.bf16.mxu0 %v2194
    %2448 = vmatpush2.bf16.msra.mxu0 %v2193
    %2449 = vmatprep.subr.bf16.mxu0 %v2192
    %2450 = vmatpush2.bf16.msra.mxu0 %v2191
    %2451 = vmatprep.subr.bf16.mxu0 %v2190
    %2452 = vmatpush2.bf16.msra.mxu0 %v2189
    %2453 = vmatprep.subr.bf16.mxu0 %v2188
    %2454 = vmatpush2.bf16.msra.mxu0 %v2187
    %2455 = vmatprep.subr.bf16.mxu0 %v2186
    %2456 = vmatpush2.bf16.msra.mxu0 %v2185
    %2457 = vmatprep.mubr.bf16.mxu0 %v1530
    %2458 = vmatmul.mubr.bf16.gmra.mxu0 %v1529
    %v2459 = vpop.f32.mrf.mxu0
    %v2460 = vadd.f32 0.0, %v2459
    %v2461 = vpop.f32.mrf.mxu0
    %v2462 = vadd.f32 0.0, %v2461
    %v2463 = vpop.f32.mrf.mxu0
    %v2464 = vadd.f32 0.0, %v2463
    %v2465 = vpop.f32.mrf.mxu0
    %v2466 = vadd.f32 0.0, %v2465
    %2467 = vmatprep.mubr.bf16.mxu0 %v1538
    %2468 = vmatmul.mubr.bf16.gmra.mxu0 %v1537
    %v2469 = vpop.f32.mrf.mxu0
    %v2470 = vadd.f32 0.0, %v2469
    %v2471 = vpop.f32.mrf.mxu0
    %v2472 = vadd.f32 0.0, %v2471
    %v2473 = vpop.f32.mrf.mxu0
    %v2474 = vadd.f32 0.0, %v2473
    %v2475 = vpop.f32.mrf.mxu0
    %v2476 = vadd.f32 0.0, %v2475
    %2477 = vmatprep.mubr.bf16.mxu0 %v1546
    %2478 = vmatmul.mubr.bf16.gmra.mxu0 %v1545
    %v2479 = vpop.f32.mrf.mxu0
    %v2480 = vadd.f32 0.0, %v2479
    %v2481 = vpop.f32.mrf.mxu0
    %v2482 = vadd.f32 0.0, %v2481
    %v2483 = vpop.f32.mrf.mxu0
    %v2484 = vadd.f32 0.0, %v2483
    %v2485 = vpop.f32.mrf.mxu0
    %v2486 = vadd.f32 0.0, %v2485
    %2487 = vmatprep.mubr.bf16.mxu0 %v1554
    %2488 = vmatmul.mubr.bf16.gmra.mxu0 %v1553
    %v2489 = vpop.f32.mrf.mxu0
    %v2490 = vadd.f32 0.0, %v2489
    %v2491 = vpop.f32.mrf.mxu0
    %v2492 = vadd.f32 0.0, %v2491
    %v2493 = vpop.f32.mrf.mxu0
    %v2494 = vadd.f32 0.0, %v2493
    %v2495 = vpop.f32.mrf.mxu0
    %v2496 = vadd.f32 0.0, %v2495
    %2497 = vmatprep.mubr.bf16.mxu0 %v1562
    %2498 = vmatmul.mubr.bf16.gmra.mxu0 %v1561
    %v2499 = vpop.f32.mrf.mxu0
    %v2500 = vadd.f32 0.0, %v2499
    %v2501 = vpop.f32.mrf.mxu0
    %v2502 = vadd.f32 0.0, %v2501
    %v2503 = vpop.f32.mrf.mxu0
    %v2504 = vadd.f32 0.0, %v2503
    %v2505 = vpop.f32.mrf.mxu0
    %v2506 = vadd.f32 0.0, %v2505
    %2507 = vmatprep.mubr.bf16.mxu0 %v1570
    %2508 = vmatmul.mubr.bf16.gmra.mxu0 %v1569
    %v2509 = vpop.f32.mrf.mxu0
    %v2510 = vadd.f32 0.0, %v2509
    %v2511 = vpop.f32.mrf.mxu0
    %v2512 = vadd.f32 0.0, %v2511
    %v2513 = vpop.f32.mrf.mxu0
    %v2514 = vadd.f32 0.0, %v2513
    %v2515 = vpop.f32.mrf.mxu0
    %v2516 = vadd.f32 0.0, %v2515
    %2517 = vmatprep.mubr.bf16.mxu0 %v1578
    %2518 = vmatmul.mubr.bf16.gmra.mxu0 %v1577
    %v2519 = vpop.f32.mrf.mxu0
    %v2520 = vadd.f32 0.0, %v2519
    %v2521 = vpop.f32.mrf.mxu0
    %v2522 = vadd.f32 0.0, %v2521
    %v2523 = vpop.f32.mrf.mxu0
    %v2524 = vadd.f32 0.0, %v2523
    %v2525 = vpop.f32.mrf.mxu0
    %v2526 = vadd.f32 0.0, %v2525
    %2527 = vmatprep.mubr.bf16.mxu0 %v1586
    %2528 = vmatmul.mubr.bf16.gmra.mxu0 %v1585
    %v2529 = vpop.f32.mrf.mxu0
    %v2530 = vadd.f32 0.0, %v2529
    %v2531 = vpop.f32.mrf.mxu0
    %v2532 = vadd.f32 0.0, %v2531
    %v2533 = vpop.f32.mrf.mxu0
    %v2534 = vadd.f32 0.0, %v2533
    %v2535 = vpop.f32.mrf.mxu0
    %v2536 = vadd.f32 0.0, %v2535
    %2537 = vmatprep.mubr.bf16.mxu0 %v1594
    %2538 = vmatmul.mubr.bf16.gmra.mxu0 %v1593
    %v2539 = vpop.f32.mrf.mxu0
    %v2540 = vadd.f32 0.0, %v2539
    %v2541 = vpop.f32.mrf.mxu0
    %v2542 = vadd.f32 0.0, %v2541
    %v2543 = vpop.f32.mrf.mxu0
    %v2544 = vadd.f32 0.0, %v2543
    %v2545 = vpop.f32.mrf.mxu0
    %v2546 = vadd.f32 0.0, %v2545
    %2547 = vmatprep.mubr.bf16.mxu0 %v1602
    %2548 = vmatmul.mubr.bf16.gmra.mxu0 %v1601
    %v2549 = vpop.f32.mrf.mxu0
    %v2550 = vadd.f32 0.0, %v2549
    %v2551 = vpop.f32.mrf.mxu0
    %v2552 = vadd.f32 0.0, %v2551
    %v2553 = vpop.f32.mrf.mxu0
    %v2554 = vadd.f32 0.0, %v2553
    %v2555 = vpop.f32.mrf.mxu0
    %v2556 = vadd.f32 0.0, %v2555
    %2557 = vmatprep.mubr.bf16.mxu0 %v1610
    %2558 = vmatmul.mubr.bf16.gmra.mxu0 %v1609
    %v2559 = vpop.f32.mrf.mxu0
    %v2560 = vadd.f32 0.0, %v2559
    %v2561 = vpop.f32.mrf.mxu0
    %v2562 = vadd.f32 0.0, %v2561
    %v2563 = vpop.f32.mrf.mxu0
    %v2564 = vadd.f32 0.0, %v2563
    %v2565 = vpop.f32.mrf.mxu0
    %v2566 = vadd.f32 0.0, %v2565
    %2567 = vmatprep.mubr.bf16.mxu0 %v1618
    %2568 = vmatmul.mubr.bf16.gmra.mxu0 %v1617
    %v2569 = vpop.f32.mrf.mxu0
    %v2570 = vadd.f32 0.0, %v2569
    %v2571 = vpop.f32.mrf.mxu0
    %v2572 = vadd.f32 0.0, %v2571
    %v2573 = vpop.f32.mrf.mxu0
    %v2574 = vadd.f32 0.0, %v2573
    %v2575 = vpop.f32.mrf.mxu0
    %v2576 = vadd.f32 0.0, %v2575
    %2577 = vmatprep.mubr.bf16.mxu0 %v1626
    %2578 = vmatmul.mubr.bf16.gmra.mxu0 %v1625
    %v2579 = vpop.f32.mrf.mxu0
    %v2580 = vadd.f32 0.0, %v2579
    %v2581 = vpop.f32.mrf.mxu0
    %v2582 = vadd.f32 0.0, %v2581
    %v2583 = vpop.f32.mrf.mxu0
    %v2584 = vadd.f32 0.0, %v2583
    %v2585 = vpop.f32.mrf.mxu0
    %v2586 = vadd.f32 0.0, %v2585
    %2587 = vmatprep.mubr.bf16.mxu0 %v1634
    %2588 = vmatmul.mubr.bf16.gmra.mxu0 %v1633
    %v2589 = vpop.f32.mrf.mxu0
    %v2590 = vadd.f32 0.0, %v2589
    %v2591 = vpop.f32.mrf.mxu0
    %v2592 = vadd.f32 0.0, %v2591
    %v2593 = vpop.f32.mrf.mxu0
    %v2594 = vadd.f32 0.0, %v2593
    %v2595 = vpop.f32.mrf.mxu0
    %v2596 = vadd.f32 0.0, %v2595
    %2597 = vmatprep.mubr.bf16.mxu0 %v1642
    %2598 = vmatmul.mubr.bf16.gmra.mxu0 %v1641
    %v2599 = vpop.f32.mrf.mxu0
    %v2600 = vadd.f32 0.0, %v2599
    %v2601 = vpop.f32.mrf.mxu0
    %v2602 = vadd.f32 0.0, %v2601
    %v2603 = vpop.f32.mrf.mxu0
    %v2604 = vadd.f32 0.0, %v2603
    %v2605 = vpop.f32.mrf.mxu0
    %v2606 = vadd.f32 0.0, %v2605
    %2607 = vmatprep.mubr.bf16.mxu0 %v1650
    %2608 = vmatmul.mubr.bf16.gmra.mxu0 %v1649
    %v2609 = vpop.f32.mrf.mxu0
    %v2610 = vadd.f32 0.0, %v2609
    %v2611 = vpop.f32.mrf.mxu0
    %v2612 = vadd.f32 0.0, %v2611
    %v2613 = vpop.f32.mrf.mxu0
    %v2614 = vadd.f32 0.0, %v2613
    %v2615 = vpop.f32.mrf.mxu0
    %v2616 = vadd.f32 0.0, %v2615
    %2617 = vdwg.mxu0
    %2618 = vmatprep.subr.bf16.mxu0 %v2216
    %2619 = vmatpush1.bf16.msra.mxu0 %v2215
    %2620 = vmatprep.subr.bf16.mxu0 %v2214
    %2621 = vmatpush1.bf16.msra.mxu0 %v2213
    %2622 = vmatprep.subr.bf16.mxu0 %v2212
    %2623 = vmatpush1.bf16.msra.mxu0 %v2211
    %2624 = vmatprep.subr.bf16.mxu0 %v2210
    %2625 = vmatpush1.bf16.msra.mxu0 %v2209
    %2626 = vmatprep.subr.bf16.mxu0 %v2208
    %2627 = vmatpush1.bf16.msra.mxu0 %v2207
    %2628 = vmatprep.subr.bf16.mxu0 %v2206
    %2629 = vmatpush1.bf16.msra.mxu0 %v2205
    %2630 = vmatprep.subr.bf16.mxu0 %v2204
    %2631 = vmatpush1.bf16.msra.mxu0 %v2203
    %2632 = vmatprep.subr.bf16.mxu0 %v2202
    %2633 = vmatpush1.bf16.msra.mxu0 %v2201
    %2634 = vmatprep.subr.bf16.mxu0 %v2232
    %2635 = vmatpush2.bf16.msra.mxu0 %v2231
    %2636 = vmatprep.subr.bf16.mxu0 %v2230
    %2637 = vmatpush2.bf16.msra.mxu0 %v2229
    %2638 = vmatprep.subr.bf16.mxu0 %v2228
    %2639 = vmatpush2.bf16.msra.mxu0 %v2227
    %2640 = vmatprep.subr.bf16.mxu0 %v2226
    %2641 = vmatpush2.bf16.msra.mxu0 %v2225
    %2642 = vmatprep.subr.bf16.mxu0 %v2224
    %2643 = vmatpush2.bf16.msra.mxu0 %v2223
    %2644 = vmatprep.subr.bf16.mxu0 %v2222
    %2645 = vmatpush2.bf16.msra.mxu0 %v2221
    %2646 = vmatprep.subr.bf16.mxu0 %v2220
    %2647 = vmatpush2.bf16.msra.mxu0 %v2219
    %2648 = vmatprep.subr.bf16.mxu0 %v2218
    %2649 = vmatpush2.bf16.msra.mxu0 %v2217
    %2650 = vmatprep.mubr.bf16.mxu0 %v1532
    %2651 = vmatmul.mubr.bf16.gmra.mxu0 %v1531
    %v2652 = vpop.f32.mrf.mxu0
    %v2653 = vadd.f32 %v2460, %v2652
    %v2654 = vpop.f32.mrf.mxu0
    %v2655 = vadd.f32 %v2462, %v2654
    %v2656 = vpop.f32.mrf.mxu0
    %v2657 = vadd.f32 %v2464, %v2656
    %v2658 = vpop.f32.mrf.mxu0
    %v2659 = vadd.f32 %v2466, %v2658
    %2660 = vmatprep.mubr.bf16.mxu0 %v1540
    %2661 = vmatmul.mubr.bf16.gmra.mxu0 %v1539
    %v2662 = vpop.f32.mrf.mxu0
    %v2663 = vadd.f32 %v2470, %v2662
    %v2664 = vpop.f32.mrf.mxu0
    %v2665 = vadd.f32 %v2472, %v2664
    %v2666 = vpop.f32.mrf.mxu0
    %v2667 = vadd.f32 %v2474, %v2666
    %v2668 = vpop.f32.mrf.mxu0
    %v2669 = vadd.f32 %v2476, %v2668
    %2670 = vmatprep.mubr.bf16.mxu0 %v1548
    %2671 = vmatmul.mubr.bf16.gmra.mxu0 %v1547
    %v2672 = vpop.f32.mrf.mxu0
    %v2673 = vadd.f32 %v2480, %v2672
    %v2674 = vpop.f32.mrf.mxu0
    %v2675 = vadd.f32 %v2482, %v2674
    %v2676 = vpop.f32.mrf.mxu0
    %v2677 = vadd.f32 %v2484, %v2676
    %v2678 = vpop.f32.mrf.mxu0
    %v2679 = vadd.f32 %v2486, %v2678
    %2680 = vmatprep.mubr.bf16.mxu0 %v1556
    %2681 = vmatmul.mubr.bf16.gmra.mxu0 %v1555
    %v2682 = vpop.f32.mrf.mxu0
    %v2683 = vadd.f32 %v2490, %v2682
    %v2684 = vpop.f32.mrf.mxu0
    %v2685 = vadd.f32 %v2492, %v2684
    %v2686 = vpop.f32.mrf.mxu0
    %v2687 = vadd.f32 %v2494, %v2686
    %v2688 = vpop.f32.mrf.mxu0
    %v2689 = vadd.f32 %v2496, %v2688
    %2690 = vmatprep.mubr.bf16.mxu0 %v1564
    %2691 = vmatmul.mubr.bf16.gmra.mxu0 %v1563
    %v2692 = vpop.f32.mrf.mxu0
    %v2693 = vadd.f32 %v2500, %v2692
    %v2694 = vpop.f32.mrf.mxu0
    %v2695 = vadd.f32 %v2502, %v2694
    %v2696 = vpop.f32.mrf.mxu0
    %v2697 = vadd.f32 %v2504, %v2696
    %v2698 = vpop.f32.mrf.mxu0
    %v2699 = vadd.f32 %v2506, %v2698
    %2700 = vmatprep.mubr.bf16.mxu0 %v1572
    %2701 = vmatmul.mubr.bf16.gmra.mxu0 %v1571
    %v2702 = vpop.f32.mrf.mxu0
    %v2703 = vadd.f32 %v2510, %v2702
    %v2704 = vpop.f32.mrf.mxu0
    %v2705 = vadd.f32 %v2512, %v2704
    %v2706 = vpop.f32.mrf.mxu0
    %v2707 = vadd.f32 %v2514, %v2706
    %v2708 = vpop.f32.mrf.mxu0
    %v2709 = vadd.f32 %v2516, %v2708
    %2710 = vmatprep.mubr.bf16.mxu0 %v1580
    %2711 = vmatmul.mubr.bf16.gmra.mxu0 %v1579
    %v2712 = vpop.f32.mrf.mxu0
    %v2713 = vadd.f32 %v2520, %v2712
    %v2714 = vpop.f32.mrf.mxu0
    %v2715 = vadd.f32 %v2522, %v2714
    %v2716 = vpop.f32.mrf.mxu0
    %v2717 = vadd.f32 %v2524, %v2716
    %v2718 = vpop.f32.mrf.mxu0
    %v2719 = vadd.f32 %v2526, %v2718
    %2720 = vmatprep.mubr.bf16.mxu0 %v1588
    %2721 = vmatmul.mubr.bf16.gmra.mxu0 %v1587
    %v2722 = vpop.f32.mrf.mxu0
    %v2723 = vadd.f32 %v2530, %v2722
    %v2724 = vpop.f32.mrf.mxu0
    %v2725 = vadd.f32 %v2532, %v2724
    %v2726 = vpop.f32.mrf.mxu0
    %v2727 = vadd.f32 %v2534, %v2726
    %v2728 = vpop.f32.mrf.mxu0
    %v2729 = vadd.f32 %v2536, %v2728
    %2730 = vmatprep.mubr.bf16.mxu0 %v1596
    %2731 = vmatmul.mubr.bf16.gmra.mxu0 %v1595
    %v2732 = vpop.f32.mrf.mxu0
    %v2733 = vadd.f32 %v2540, %v2732
    %v2734 = vpop.f32.mrf.mxu0
    %v2735 = vadd.f32 %v2542, %v2734
    %v2736 = vpop.f32.mrf.mxu0
    %v2737 = vadd.f32 %v2544, %v2736
    %v2738 = vpop.f32.mrf.mxu0
    %v2739 = vadd.f32 %v2546, %v2738
    %2740 = vmatprep.mubr.bf16.mxu0 %v1604
    %2741 = vmatmul.mubr.bf16.gmra.mxu0 %v1603
    %v2742 = vpop.f32.mrf.mxu0
    %v2743 = vadd.f32 %v2550, %v2742
    %v2744 = vpop.f32.mrf.mxu0
    %v2745 = vadd.f32 %v2552, %v2744
    %v2746 = vpop.f32.mrf.mxu0
    %v2747 = vadd.f32 %v2554, %v2746
    %v2748 = vpop.f32.mrf.mxu0
    %v2749 = vadd.f32 %v2556, %v2748
    %2750 = vmatprep.mubr.bf16.mxu0 %v1612
    %2751 = vmatmul.mubr.bf16.gmra.mxu0 %v1611
    %v2752 = vpop.f32.mrf.mxu0
    %v2753 = vadd.f32 %v2560, %v2752
    %v2754 = vpop.f32.mrf.mxu0
    %v2755 = vadd.f32 %v2562, %v2754
    %v2756 = vpop.f32.mrf.mxu0
    %v2757 = vadd.f32 %v2564, %v2756
    %v2758 = vpop.f32.mrf.mxu0
    %v2759 = vadd.f32 %v2566, %v2758
    %2760 = vmatprep.mubr.bf16.mxu0 %v1620
    %2761 = vmatmul.mubr.bf16.gmra.mxu0 %v1619
    %v2762 = vpop.f32.mrf.mxu0
    %v2763 = vadd.f32 %v2570, %v2762
    %v2764 = vpop.f32.mrf.mxu0
    %v2765 = vadd.f32 %v2572, %v2764
    %v2766 = vpop.f32.mrf.mxu0
    %v2767 = vadd.f32 %v2574, %v2766
    %v2768 = vpop.f32.mrf.mxu0
    %v2769 = vadd.f32 %v2576, %v2768
    %2770 = vmatprep.mubr.bf16.mxu0 %v1628
    %2771 = vmatmul.mubr.bf16.gmra.mxu0 %v1627
    %v2772 = vpop.f32.mrf.mxu0
    %v2773 = vadd.f32 %v2580, %v2772
    %v2774 = vpop.f32.mrf.mxu0
    %v2775 = vadd.f32 %v2582, %v2774
    %v2776 = vpop.f32.mrf.mxu0
    %v2777 = vadd.f32 %v2584, %v2776
    %v2778 = vpop.f32.mrf.mxu0
    %v2779 = vadd.f32 %v2586, %v2778
    %2780 = vmatprep.mubr.bf16.mxu0 %v1636
    %2781 = vmatmul.mubr.bf16.gmra.mxu0 %v1635
    %v2782 = vpop.f32.mrf.mxu0
    %v2783 = vadd.f32 %v2590, %v2782
    %v2784 = vpop.f32.mrf.mxu0
    %v2785 = vadd.f32 %v2592, %v2784
    %v2786 = vpop.f32.mrf.mxu0
    %v2787 = vadd.f32 %v2594, %v2786
    %v2788 = vpop.f32.mrf.mxu0
    %v2789 = vadd.f32 %v2596, %v2788
    %2790 = vmatprep.mubr.bf16.mxu0 %v1644
    %2791 = vmatmul.mubr.bf16.gmra.mxu0 %v1643
    %v2792 = vpop.f32.mrf.mxu0
    %v2793 = vadd.f32 %v2600, %v2792
    %v2794 = vpop.f32.mrf.mxu0
    %v2795 = vadd.f32 %v2602, %v2794
    %v2796 = vpop.f32.mrf.mxu0
    %v2797 = vadd.f32 %v2604, %v2796
    %v2798 = vpop.f32.mrf.mxu0
    %v2799 = vadd.f32 %v2606, %v2798
    %2800 = vmatprep.mubr.bf16.mxu0 %v1652
    %2801 = vmatmul.mubr.bf16.gmra.mxu0 %v1651
    %v2802 = vpop.f32.mrf.mxu0
    %v2803 = vadd.f32 %v2610, %v2802
    %v2804 = vpop.f32.mrf.mxu0
    %v2805 = vadd.f32 %v2612, %v2804
    %v2806 = vpop.f32.mrf.mxu0
    %v2807 = vadd.f32 %v2614, %v2806
    %v2808 = vpop.f32.mrf.mxu0
    %v2809 = vadd.f32 %v2616, %v2808
    %2810 = vdwg.mxu0
    %2811 = vmatprep.subr.bf16.mxu0 %v2248
    %2812 = vmatpush1.bf16.msra.mxu0 %v2247
    %2813 = vmatprep.subr.bf16.mxu0 %v2246
    %2814 = vmatpush1.bf16.msra.mxu0 %v2245
    %2815 = vmatprep.subr.bf16.mxu0 %v2244
    %2816 = vmatpush1.bf16.msra.mxu0 %v2243
    %2817 = vmatprep.subr.bf16.mxu0 %v2242
    %2818 = vmatpush1.bf16.msra.mxu0 %v2241
    %2819 = vmatprep.subr.bf16.mxu0 %v2240
    %2820 = vmatpush1.bf16.msra.mxu0 %v2239
    %2821 = vmatprep.subr.bf16.mxu0 %v2238
    %2822 = vmatpush1.bf16.msra.mxu0 %v2237
    %2823 = vmatprep.subr.bf16.mxu0 %v2236
    %2824 = vmatpush1.bf16.msra.mxu0 %v2235
    %2825 = vmatprep.subr.bf16.mxu0 %v2234
    %2826 = vmatpush1.bf16.msra.mxu0 %v2233
    %2827 = vmatprep.subr.bf16.mxu0 %v2264
    %2828 = vmatpush2.bf16.msra.mxu0 %v2263
    %2829 = vmatprep.subr.bf16.mxu0 %v2262
    %2830 = vmatpush2.bf16.msra.mxu0 %v2261
    %2831 = vmatprep.subr.bf16.mxu0 %v2260
    %2832 = vmatpush2.bf16.msra.mxu0 %v2259
    %2833 = vmatprep.subr.bf16.mxu0 %v2258
    %2834 = vmatpush2.bf16.msra.mxu0 %v2257
    %2835 = vmatprep.subr.bf16.mxu0 %v2256
    %2836 = vmatpush2.bf16.msra.mxu0 %v2255
    %2837 = vmatprep.subr.bf16.mxu0 %v2254
    %2838 = vmatpush2.bf16.msra.mxu0 %v2253
    %2839 = vmatprep.subr.bf16.mxu0 %v2252
    %2840 = vmatpush2.bf16.msra.mxu0 %v2251
    %2841 = vmatprep.subr.bf16.mxu0 %v2250
    %2842 = vmatpush2.bf16.msra.mxu0 %v2249
    %2843 = vmatprep.mubr.bf16.mxu0 %v1534
    %2844 = vmatmul.mubr.bf16.gmra.mxu0 %v1533
    %v2845 = vpop.f32.mrf.mxu0
    %v2846 = vadd.f32 %v2653, %v2845
    %v2847 = vpop.f32.mrf.mxu0
    %v2848 = vadd.f32 %v2655, %v2847
    %v2849 = vpop.f32.mrf.mxu0
    %v2850 = vadd.f32 %v2657, %v2849
    %v2851 = vpop.f32.mrf.mxu0
    %v2852 = vadd.f32 %v2659, %v2851
    %2853 = vmatprep.mubr.bf16.mxu0 %v1542
    %2854 = vmatmul.mubr.bf16.gmra.mxu0 %v1541
    %v2855 = vpop.f32.mrf.mxu0
    %v2856 = vadd.f32 %v2663, %v2855
    %v2857 = vpop.f32.mrf.mxu0
    %v2858 = vadd.f32 %v2665, %v2857
    %v2859 = vpop.f32.mrf.mxu0
    %v2860 = vadd.f32 %v2667, %v2859
    %v2861 = vpop.f32.mrf.mxu0
    %v2862 = vadd.f32 %v2669, %v2861
    %2863 = vmatprep.mubr.bf16.mxu0 %v1550
    %2864 = vmatmul.mubr.bf16.gmra.mxu0 %v1549
    %v2865 = vpop.f32.mrf.mxu0
    %v2866 = vadd.f32 %v2673, %v2865
    %v2867 = vpop.f32.mrf.mxu0
    %v2868 = vadd.f32 %v2675, %v2867
    %v2869 = vpop.f32.mrf.mxu0
    %v2870 = vadd.f32 %v2677, %v2869
    %v2871 = vpop.f32.mrf.mxu0
    %v2872 = vadd.f32 %v2679, %v2871
    %2873 = vmatprep.mubr.bf16.mxu0 %v1558
    %2874 = vmatmul.mubr.bf16.gmra.mxu0 %v1557
    %v2875 = vpop.f32.mrf.mxu0
    %v2876 = vadd.f32 %v2683, %v2875
    %v2877 = vpop.f32.mrf.mxu0
    %v2878 = vadd.f32 %v2685, %v2877
    %v2879 = vpop.f32.mrf.mxu0
    %v2880 = vadd.f32 %v2687, %v2879
    %v2881 = vpop.f32.mrf.mxu0
    %v2882 = vadd.f32 %v2689, %v2881
    %2883 = vmatprep.mubr.bf16.mxu0 %v1566
    %2884 = vmatmul.mubr.bf16.gmra.mxu0 %v1565
    %v2885 = vpop.f32.mrf.mxu0
    %v2886 = vadd.f32 %v2693, %v2885
    %v2887 = vpop.f32.mrf.mxu0
    %v2888 = vadd.f32 %v2695, %v2887
    %v2889 = vpop.f32.mrf.mxu0
    %v2890 = vadd.f32 %v2697, %v2889
    %v2891 = vpop.f32.mrf.mxu0
    %v2892 = vadd.f32 %v2699, %v2891
    %2893 = vmatprep.mubr.bf16.mxu0 %v1574
    %2894 = vmatmul.mubr.bf16.gmra.mxu0 %v1573
    %v2895 = vpop.f32.mrf.mxu0
    %v2896 = vadd.f32 %v2703, %v2895
    %v2897 = vpop.f32.mrf.mxu0
    %v2898 = vadd.f32 %v2705, %v2897
    %v2899 = vpop.f32.mrf.mxu0
    %v2900 = vadd.f32 %v2707, %v2899
    %v2901 = vpop.f32.mrf.mxu0
    %v2902 = vadd.f32 %v2709, %v2901
    %2903 = vmatprep.mubr.bf16.mxu0 %v1582
    %2904 = vmatmul.mubr.bf16.gmra.mxu0 %v1581
    %v2905 = vpop.f32.mrf.mxu0
    %v2906 = vadd.f32 %v2713, %v2905
    %v2907 = vpop.f32.mrf.mxu0
    %v2908 = vadd.f32 %v2715, %v2907
    %v2909 = vpop.f32.mrf.mxu0
    %v2910 = vadd.f32 %v2717, %v2909
    %v2911 = vpop.f32.mrf.mxu0
    %v2912 = vadd.f32 %v2719, %v2911
    %2913 = vmatprep.mubr.bf16.mxu0 %v1590
    %2914 = vmatmul.mubr.bf16.gmra.mxu0 %v1589
    %v2915 = vpop.f32.mrf.mxu0
    %v2916 = vadd.f32 %v2723, %v2915
    %v2917 = vpop.f32.mrf.mxu0
    %v2918 = vadd.f32 %v2725, %v2917
    %v2919 = vpop.f32.mrf.mxu0
    %v2920 = vadd.f32 %v2727, %v2919
    %v2921 = vpop.f32.mrf.mxu0
    %v2922 = vadd.f32 %v2729, %v2921
    %2923 = vmatprep.mubr.bf16.mxu0 %v1598
    %2924 = vmatmul.mubr.bf16.gmra.mxu0 %v1597
    %v2925 = vpop.f32.mrf.mxu0
    %v2926 = vadd.f32 %v2733, %v2925
    %v2927 = vpop.f32.mrf.mxu0
    %v2928 = vadd.f32 %v2735, %v2927
    %v2929 = vpop.f32.mrf.mxu0
    %v2930 = vadd.f32 %v2737, %v2929
    %v2931 = vpop.f32.mrf.mxu0
    %v2932 = vadd.f32 %v2739, %v2931
    %2933 = vmatprep.mubr.bf16.mxu0 %v1606
    %2934 = vmatmul.mubr.bf16.gmra.mxu0 %v1605
    %v2935 = vpop.f32.mrf.mxu0
    %v2936 = vadd.f32 %v2743, %v2935
    %v2937 = vpop.f32.mrf.mxu0
    %v2938 = vadd.f32 %v2745, %v2937
    %v2939 = vpop.f32.mrf.mxu0
    %v2940 = vadd.f32 %v2747, %v2939
    %v2941 = vpop.f32.mrf.mxu0
    %v2942 = vadd.f32 %v2749, %v2941
    %2943 = vmatprep.mubr.bf16.mxu0 %v1614
    %2944 = vmatmul.mubr.bf16.gmra.mxu0 %v1613
    %v2945 = vpop.f32.mrf.mxu0
    %v2946 = vadd.f32 %v2753, %v2945
    %v2947 = vpop.f32.mrf.mxu0
    %v2948 = vadd.f32 %v2755, %v2947
    %v2949 = vpop.f32.mrf.mxu0
    %v2950 = vadd.f32 %v2757, %v2949
    %v2951 = vpop.f32.mrf.mxu0
    %v2952 = vadd.f32 %v2759, %v2951
    %2953 = vmatprep.mubr.bf16.mxu0 %v1622
    %2954 = vmatmul.mubr.bf16.gmra.mxu0 %v1621
    %v2955 = vpop.f32.mrf.mxu0
    %v2956 = vadd.f32 %v2763, %v2955
    %v2957 = vpop.f32.mrf.mxu0
    %v2958 = vadd.f32 %v2765, %v2957
    %v2959 = vpop.f32.mrf.mxu0
    %v2960 = vadd.f32 %v2767, %v2959
    %v2961 = vpop.f32.mrf.mxu0
    %v2962 = vadd.f32 %v2769, %v2961
    %2963 = vmatprep.mubr.bf16.mxu0 %v1630
    %2964 = vmatmul.mubr.bf16.gmra.mxu0 %v1629
    %v2965 = vpop.f32.mrf.mxu0
    %v2966 = vadd.f32 %v2773, %v2965
    %v2967 = vpop.f32.mrf.mxu0
    %v2968 = vadd.f32 %v2775, %v2967
    %v2969 = vpop.f32.mrf.mxu0
    %v2970 = vadd.f32 %v2777, %v2969
    %v2971 = vpop.f32.mrf.mxu0
    %v2972 = vadd.f32 %v2779, %v2971
    %2973 = vmatprep.mubr.bf16.mxu0 %v1638
    %2974 = vmatmul.mubr.bf16.gmra.mxu0 %v1637
    %v2975 = vpop.f32.mrf.mxu0
    %v2976 = vadd.f32 %v2783, %v2975
    %v2977 = vpop.f32.mrf.mxu0
    %v2978 = vadd.f32 %v2785, %v2977
    %v2979 = vpop.f32.mrf.mxu0
    %v2980 = vadd.f32 %v2787, %v2979
    %v2981 = vpop.f32.mrf.mxu0
    %v2982 = vadd.f32 %v2789, %v2981
    %2983 = vmatprep.mubr.bf16.mxu0 %v1646
    %2984 = vmatmul.mubr.bf16.gmra.mxu0 %v1645
    %v2985 = vpop.f32.mrf.mxu0
    %v2986 = vadd.f32 %v2793, %v2985
    %v2987 = vpop.f32.mrf.mxu0
    %v2988 = vadd.f32 %v2795, %v2987
    %v2989 = vpop.f32.mrf.mxu0
    %v2990 = vadd.f32 %v2797, %v2989
    %v2991 = vpop.f32.mrf.mxu0
    %v2992 = vadd.f32 %v2799, %v2991
    %2993 = vmatprep.mubr.bf16.mxu0 %v1654
    %2994 = vmatmul.mubr.bf16.gmra.mxu0 %v1653
    %v2995 = vpop.f32.mrf.mxu0
    %v2996 = vadd.f32 %v2803, %v2995
    %v2997 = vpop.f32.mrf.mxu0
    %v2998 = vadd.f32 %v2805, %v2997
    %v2999 = vpop.f32.mrf.mxu0
    %v3000 = vadd.f32 %v2807, %v2999
    %v3001 = vpop.f32.mrf.mxu0
    %v3002 = vadd.f32 %v2809, %v3001
    %3003 = vdwg.mxu0
    %3004 = vmatprep.subr.bf16.mxu0 %v2280
    %3005 = vmatpush1.bf16.msra.mxu0 %v2279
    %3006 = vmatprep.subr.bf16.mxu0 %v2278
    %3007 = vmatpush1.bf16.msra.mxu0 %v2277
    %3008 = vmatprep.subr.bf16.mxu0 %v2276
    %3009 = vmatpush1.bf16.msra.mxu0 %v2275
    %3010 = vmatprep.subr.bf16.mxu0 %v2274
    %3011 = vmatpush1.bf16.msra.mxu0 %v2273
    %3012 = vmatprep.subr.bf16.mxu0 %v2272
    %3013 = vmatpush1.bf16.msra.mxu0 %v2271
    %3014 = vmatprep.subr.bf16.mxu0 %v2270
    %3015 = vmatpush1.bf16.msra.mxu0 %v2269
    %3016 = vmatprep.subr.bf16.mxu0 %v2268
    %3017 = vmatpush1.bf16.msra.mxu0 %v2267
    %3018 = vmatprep.subr.bf16.mxu0 %v2266
    %3019 = vmatpush1.bf16.msra.mxu0 %v2265
    %3020 = vmatprep.subr.bf16.mxu0 %v2296
    %3021 = vmatpush2.bf16.msra.mxu0 %v2295
    %3022 = vmatprep.subr.bf16.mxu0 %v2294
    %3023 = vmatpush2.bf16.msra.mxu0 %v2293
    %3024 = vmatprep.subr.bf16.mxu0 %v2292
    %3025 = vmatpush2.bf16.msra.mxu0 %v2291
    %3026 = vmatprep.subr.bf16.mxu0 %v2290
    %3027 = vmatpush2.bf16.msra.mxu0 %v2289
    %3028 = vmatprep.subr.bf16.mxu0 %v2288
    %3029 = vmatpush2.bf16.msra.mxu0 %v2287
    %3030 = vmatprep.subr.bf16.mxu0 %v2286
    %3031 = vmatpush2.bf16.msra.mxu0 %v2285
    %3032 = vmatprep.subr.bf16.mxu0 %v2284
    %3033 = vmatpush2.bf16.msra.mxu0 %v2283
    %3034 = vmatprep.subr.bf16.mxu0 %v2282
    %3035 = vmatpush2.bf16.msra.mxu0 %v2281
    %3036 = vmatprep.mubr.bf16.mxu0 %v1536
    %3037 = vmatmul.mubr.bf16.gmra.mxu0 %v1535
    %v3038 = vpop.f32.mrf.mxu0
    %v3039 = vadd.f32 %v2846, %v3038
    %v3040 = vpop.f32.mrf.mxu0
    %v3041 = vadd.f32 %v2848, %v3040
    %v3042 = vpop.f32.mrf.mxu0
    %v3043 = vadd.f32 %v2850, %v3042
    %v3044 = vpop.f32.mrf.mxu0
    %v3045 = vadd.f32 %v2852, %v3044
    %3046 = vmatprep.mubr.bf16.mxu0 %v1544
    %3047 = vmatmul.mubr.bf16.gmra.mxu0 %v1543
    %v3048 = vpop.f32.mrf.mxu0
    %v3049 = vadd.f32 %v2856, %v3048
    %v3050 = vpop.f32.mrf.mxu0
    %v3051 = vadd.f32 %v2858, %v3050
    %v3052 = vpop.f32.mrf.mxu0
    %v3053 = vadd.f32 %v2860, %v3052
    %v3054 = vpop.f32.mrf.mxu0
    %v3055 = vadd.f32 %v2862, %v3054
    %3056 = vmatprep.mubr.bf16.mxu0 %v1552
    %3057 = vmatmul.mubr.bf16.gmra.mxu0 %v1551
    %v3058 = vpop.f32.mrf.mxu0
    %v3059 = vadd.f32 %v2866, %v3058
    %v3060 = vpop.f32.mrf.mxu0
    %v3061 = vadd.f32 %v2868, %v3060
    %v3062 = vpop.f32.mrf.mxu0
    %v3063 = vadd.f32 %v2870, %v3062
    %v3064 = vpop.f32.mrf.mxu0
    %v3065 = vadd.f32 %v2872, %v3064
    %3066 = vmatprep.mubr.bf16.mxu0 %v1560
    %3067 = vmatmul.mubr.bf16.gmra.mxu0 %v1559
    %v3068 = vpop.f32.mrf.mxu0
    %v3069 = vadd.f32 %v2876, %v3068
    %v3070 = vpop.f32.mrf.mxu0
    %v3071 = vadd.f32 %v2878, %v3070
    %v3072 = vpop.f32.mrf.mxu0
    %v3073 = vadd.f32 %v2880, %v3072
    %v3074 = vpop.f32.mrf.mxu0
    %v3075 = vadd.f32 %v2882, %v3074
    %3076 = vmatprep.mubr.bf16.mxu0 %v1568
    %3077 = vmatmul.mubr.bf16.gmra.mxu0 %v1567
    %v3078 = vpop.f32.mrf.mxu0
    %v3079 = vadd.f32 %v2886, %v3078
    %v3080 = vpop.f32.mrf.mxu0
    %v3081 = vadd.f32 %v2888, %v3080
    %v3082 = vpop.f32.mrf.mxu0
    %v3083 = vadd.f32 %v2890, %v3082
    %v3084 = vpop.f32.mrf.mxu0
    %v3085 = vadd.f32 %v2892, %v3084
    %3086 = vmatprep.mubr.bf16.mxu0 %v1576
    %3087 = vmatmul.mubr.bf16.gmra.mxu0 %v1575
    %v3088 = vpop.f32.mrf.mxu0
    %v3089 = vadd.f32 %v2896, %v3088
    %v3090 = vpop.f32.mrf.mxu0
    %v3091 = vadd.f32 %v2898, %v3090
    %v3092 = vpop.f32.mrf.mxu0
    %v3093 = vadd.f32 %v2900, %v3092
    %v3094 = vpop.f32.mrf.mxu0
    %v3095 = vadd.f32 %v2902, %v3094
    %3096 = vmatprep.mubr.bf16.mxu0 %v1584
    %3097 = vmatmul.mubr.bf16.gmra.mxu0 %v1583
    %v3098 = vpop.f32.mrf.mxu0
    %v3099 = vadd.f32 %v2906, %v3098
    %v3100 = vpop.f32.mrf.mxu0
    %v3101 = vadd.f32 %v2908, %v3100
    %v3102 = vpop.f32.mrf.mxu0
    %v3103 = vadd.f32 %v2910, %v3102
    %v3104 = vpop.f32.mrf.mxu0
    %v3105 = vadd.f32 %v2912, %v3104
    %3106 = vmatprep.mubr.bf16.mxu0 %v1592
    %3107 = vmatmul.mubr.bf16.gmra.mxu0 %v1591
    %v3108 = vpop.f32.mrf.mxu0
    %v3109 = vadd.f32 %v2916, %v3108
    %v3110 = vpop.f32.mrf.mxu0
    %v3111 = vadd.f32 %v2918, %v3110
    %v3112 = vpop.f32.mrf.mxu0
    %v3113 = vadd.f32 %v2920, %v3112
    %v3114 = vpop.f32.mrf.mxu0
    %v3115 = vadd.f32 %v2922, %v3114
    %3116 = vmatprep.mubr.bf16.mxu0 %v1600
    %3117 = vmatmul.mubr.bf16.gmra.mxu0 %v1599
    %v3118 = vpop.f32.mrf.mxu0
    %v3119 = vadd.f32 %v2926, %v3118
    %v3120 = vpop.f32.mrf.mxu0
    %v3121 = vadd.f32 %v2928, %v3120
    %v3122 = vpop.f32.mrf.mxu0
    %v3123 = vadd.f32 %v2930, %v3122
    %v3124 = vpop.f32.mrf.mxu0
    %v3125 = vadd.f32 %v2932, %v3124
    %3126 = vmatprep.mubr.bf16.mxu0 %v1608
    %3127 = vmatmul.mubr.bf16.gmra.mxu0 %v1607
    %v3128 = vpop.f32.mrf.mxu0
    %v3129 = vadd.f32 %v2936, %v3128
    %v3130 = vpop.f32.mrf.mxu0
    %v3131 = vadd.f32 %v2938, %v3130
    %v3132 = vpop.f32.mrf.mxu0
    %v3133 = vadd.f32 %v2940, %v3132
    %v3134 = vpop.f32.mrf.mxu0
    %v3135 = vadd.f32 %v2942, %v3134
    %3136 = vmatprep.mubr.bf16.mxu0 %v1616
    %3137 = vmatmul.mubr.bf16.gmra.mxu0 %v1615
    %v3138 = vpop.f32.mrf.mxu0
    %v3139 = vadd.f32 %v2946, %v3138
    %v3140 = vpop.f32.mrf.mxu0
    %v3141 = vadd.f32 %v2948, %v3140
    %v3142 = vpop.f32.mrf.mxu0
    %v3143 = vadd.f32 %v2950, %v3142
    %v3144 = vpop.f32.mrf.mxu0
    %v3145 = vadd.f32 %v2952, %v3144
    %3146 = vmatprep.mubr.bf16.mxu0 %v1624
    %3147 = vmatmul.mubr.bf16.gmra.mxu0 %v1623
    %v3148 = vpop.f32.mrf.mxu0
    %v3149 = vadd.f32 %v2956, %v3148
    %v3150 = vpop.f32.mrf.mxu0
    %v3151 = vadd.f32 %v2958, %v3150
    %v3152 = vpop.f32.mrf.mxu0
    %v3153 = vadd.f32 %v2960, %v3152
    %v3154 = vpop.f32.mrf.mxu0
    %v3155 = vadd.f32 %v2962, %v3154
    %3156 = vmatprep.mubr.bf16.mxu0 %v1632
    %3157 = vmatmul.mubr.bf16.gmra.mxu0 %v1631
    %v3158 = vpop.f32.mrf.mxu0
    %v3159 = vadd.f32 %v2966, %v3158
    %v3160 = vpop.f32.mrf.mxu0
    %v3161 = vadd.f32 %v2968, %v3160
    %v3162 = vpop.f32.mrf.mxu0
    %v3163 = vadd.f32 %v2970, %v3162
    %v3164 = vpop.f32.mrf.mxu0
    %v3165 = vadd.f32 %v2972, %v3164
    %3166 = vmatprep.mubr.bf16.mxu0 %v1640
    %3167 = vmatmul.mubr.bf16.gmra.mxu0 %v1639
    %v3168 = vpop.f32.mrf.mxu0
    %v3169 = vadd.f32 %v2976, %v3168
    %v3170 = vpop.f32.mrf.mxu0
    %v3171 = vadd.f32 %v2978, %v3170
    %v3172 = vpop.f32.mrf.mxu0
    %v3173 = vadd.f32 %v2980, %v3172
    %v3174 = vpop.f32.mrf.mxu0
    %v3175 = vadd.f32 %v2982, %v3174
    %3176 = vmatprep.mubr.bf16.mxu0 %v1648
    %3177 = vmatmul.mubr.bf16.gmra.mxu0 %v1647
    %v3178 = vpop.f32.mrf.mxu0
    %v3179 = vadd.f32 %v2986, %v3178
    %v3180 = vpop.f32.mrf.mxu0
    %v3181 = vadd.f32 %v2988, %v3180
    %v3182 = vpop.f32.mrf.mxu0
    %v3183 = vadd.f32 %v2990, %v3182
    %v3184 = vpop.f32.mrf.mxu0
    %v3185 = vadd.f32 %v2992, %v3184
    %3186 = vmatprep.mubr.bf16.mxu0 %v1656
    %3187 = vmatmul.mubr.bf16.gmra.mxu0 %v1655
    %v3188 = vpop.f32.mrf.mxu0
    %v3189 = vadd.f32 %v2996, %v3188
    %v3190 = vpop.f32.mrf.mxu0
    %v3191 = vadd.f32 %v2998, %v3190
    %v3192 = vpop.f32.mrf.mxu0
    %v3193 = vadd.f32 %v3000, %v3192
    %v3194 = vpop.f32.mrf.mxu0
    %v3195 = vadd.f32 %v3002, %v3194
    %3196 = vdwg.mxu0
    %v3197 = vadd.f32 %v953, %v3039
    %v3198 = vadd.f32 %v954, %v3041
    %v3199 = vadd.f32 %v955, %v3043
    %v3200 = vadd.f32 %v956, %v3045
    %v3201 = vadd.f32 %v957, %v3049
    %v3202 = vadd.f32 %v958, %v3051
    %v3203 = vadd.f32 %v959, %v3053
    %v3204 = vadd.f32 %v960, %v3055
    %v3205 = vadd.f32 %v961, %v3059
    %v3206 = vadd.f32 %v962, %v3061
    %v3207 = vadd.f32 %v963, %v3063
    %v3208 = vadd.f32 %v964, %v3065
    %v3209 = vadd.f32 %v965, %v3069
    %v3210 = vadd.f32 %v966, %v3071
    %v3211 = vadd.f32 %v967, %v3073
    %v3212 = vadd.f32 %v968, %v3075
    %v3213 = vadd.f32 %v969, %v3079
    %v3214 = vadd.f32 %v970, %v3081
    %v3215 = vadd.f32 %v971, %v3083
    %v3216 = vadd.f32 %v972, %v3085
    %v3217 = vadd.f32 %v973, %v3089
    %v3218 = vadd.f32 %v974, %v3091
    %v3219 = vadd.f32 %v975, %v3093
    %v3220 = vadd.f32 %v976, %v3095
    %v3221 = vadd.f32 %v977, %v3099
    %v3222 = vadd.f32 %v978, %v3101
    %v3223 = vadd.f32 %v979, %v3103
    %v3224 = vadd.f32 %v980, %v3105
    %v3225 = vadd.f32 %v981, %v3109
    %v3226 = vadd.f32 %v982, %v3111
    %v3227 = vadd.f32 %v983, %v3113
    %v3228 = vadd.f32 %v984, %v3115
    %v3229 = vadd.f32 %v985, %v3119
    %v3230 = vadd.f32 %v986, %v3121
    %v3231 = vadd.f32 %v987, %v3123
    %v3232 = vadd.f32 %v988, %v3125
    %v3233 = vadd.f32 %v989, %v3129
    %v3234 = vadd.f32 %v990, %v3131
    %v3235 = vadd.f32 %v991, %v3133
    %v3236 = vadd.f32 %v992, %v3135
    %v3237 = vadd.f32 %v993, %v3139
    %v3238 = vadd.f32 %v994, %v3141
    %v3239 = vadd.f32 %v995, %v3143
    %v3240 = vadd.f32 %v996, %v3145
    %v3241 = vadd.f32 %v997, %v3149
    %v3242 = vadd.f32 %v998, %v3151
    %v3243 = vadd.f32 %v999, %v3153
    %v3244 = vadd.f32 %v1000, %v3155
    %v3245 = vadd.f32 %v1001, %v3159
    %v3246 = vadd.f32 %v1002, %v3161
    %v3247 = vadd.f32 %v1003, %v3163
    %v3248 = vadd.f32 %v1004, %v3165
    %v3249 = vadd.f32 %v1005, %v3169
    %v3250 = vadd.f32 %v1006, %v3171
    %v3251 = vadd.f32 %v1007, %v3173
    %v3252 = vadd.f32 %v1008, %v3175
    %v3253 = vadd.f32 %v1009, %v3179
    %v3254 = vadd.f32 %v1010, %v3181
    %v3255 = vadd.f32 %v1011, %v3183
    %v3256 = vadd.f32 %v1012, %v3185
    %v3257 = vadd.f32 %v1013, %v3189
    %v3258 = vadd.f32 %v1014, %v3191
    %v3259 = vadd.f32 %v1015, %v3193
    %v3260 = vadd.f32 %v1016, %v3195
    %3261 = vst [vmem:[#allocation2] sm:$0xff] %v3197
    %3262 = vst [vmem:[#allocation2 + $0x8] sm:$0xff] %v3198
    %3263 = vst [vmem:[#allocation2 + $0x10] sm:$0xff] %v3199
    %3264 = vst [vmem:[#allocation2 + $0x18] sm:$0xff] %v3200
    %3265 = vst [vmem:[#allocation2 + $0x20] sm:$0xff] %v3201
    %3266 = vst [vmem:[#allocation2 + $0x28] sm:$0xff] %v3202
    %3267 = vst [vmem:[#allocation2 + $0x30] sm:$0xff] %v3203
    %3268 = vst [vmem:[#allocation2 + $0x38] sm:$0xff] %v3204
    %3269 = vst [vmem:[#allocation2 + $0x40] sm:$0xff] %v3205
    %3270 = vst [vmem:[#allocation2 + $0x48] sm:$0xff] %v3206
    %3271 = vst [vmem:[#allocation2 + $0x50] sm:$0xff] %v3207
    %3272 = vst [vmem:[#allocation2 + $0x58] sm:$0xff] %v3208
    %3273 = vst [vmem:[#allocation2 + $0x60] sm:$0xff] %v3209
    %3274 = vst [vmem:[#allocation2 + $0x68] sm:$0xff] %v3210
    %3275 = vst [vmem:[#allocation2 + $0x70] sm:$0xff] %v3211
    %3276 = vst [vmem:[#allocation2 + $0x78] sm:$0xff] %v3212
    %3277 = vst [vmem:[#allocation2 + $0x80] sm:$0xff] %v3213
    %3278 = vst [vmem:[#allocation2 + $0x88] sm:$0xff] %v3214
    %3279 = vst [vmem:[#allocation2 + $0x90] sm:$0xff] %v3215
    %3280 = vst [vmem:[#allocation2 + $0x98] sm:$0xff] %v3216
    %3281 = vst [vmem:[#allocation2 + $0xa0] sm:$0xff] %v3217
    %3282 = vst [vmem:[#allocation2 + $0xa8] sm:$0xff] %v3218
    %3283 = vst [vmem:[#allocation2 + $0xb0] sm:$0xff] %v3219
    %3284 = vst [vmem:[#allocation2 + $0xb8] sm:$0xff] %v3220
    %3285 = vst [vmem:[#allocation2 + $0xc0] sm:$0xff] %v3221
    %3286 = vst [vmem:[#allocation2 + $0xc8] sm:$0xff] %v3222
    %3287 = vst [vmem:[#allocation2 + $0xd0] sm:$0xff] %v3223
    %3288 = vst [vmem:[#allocation2 + $0xd8] sm:$0xff] %v3224
    %3289 = vst [vmem:[#allocation2 + $0xe0] sm:$0xff] %v3225
    %3290 = vst [vmem:[#allocation2 + $0xe8] sm:$0xff] %v3226
    %3291 = vst [vmem:[#allocation2 + $0xf0] sm:$0xff] %v3227
    %3292 = vst [vmem:[#allocation2 + $0xf8] sm:$0xff] %v3228
    %3293 = vst [vmem:[#allocation2 + $0x100] sm:$0xff] %v3229
    %3294 = vst [vmem:[#allocation2 + $0x108] sm:$0xff] %v3230
    %3295 = vst [vmem:[#allocation2 + $0x110] sm:$0xff] %v3231
    %3296 = vst [vmem:[#allocation2 + $0x118] sm:$0xff] %v3232
    %3297 = vst [vmem:[#allocation2 + $0x120] sm:$0xff] %v3233
    %3298 = vst [vmem:[#allocation2 + $0x128] sm:$0xff] %v3234
    %3299 = vst [vmem:[#allocation2 + $0x130] sm:$0xff] %v3235
    %3300 = vst [vmem:[#allocation2 + $0x138] sm:$0xff] %v3236
    %3301 = vst [vmem:[#allocation2 + $0x140] sm:$0xff] %v3237
    %3302 = vst [vmem:[#allocation2 + $0x148] sm:$0xff] %v3238
    %3303 = vst [vmem:[#allocation2 + $0x150] sm:$0xff] %v3239
    %3304 = vst [vmem:[#allocation2 + $0x158] sm:$0xff] %v3240
    %3305 = vst [vmem:[#allocation2 + $0x160] sm:$0xff] %v3241
    %3306 = vst [vmem:[#allocation2 + $0x168] sm:$0xff] %v3242
    %3307 = vst [vmem:[#allocation2 + $0x170] sm:$0xff] %v3243
    %3308 = vst [vmem:[#allocation2 + $0x178] sm:$0xff] %v3244
    %3309 = vst [vmem:[#allocation2 + $0x180] sm:$0xff] %v3245
    %3310 = vst [vmem:[#allocation2 + $0x188] sm:$0xff] %v3246
    %3311 = vst [vmem:[#allocation2 + $0x190] sm:$0xff] %v3247
    %3312 = vst [vmem:[#allocation2 + $0x198] sm:$0xff] %v3248
    %3313 = vst [vmem:[#allocation2 + $0x1a0] sm:$0xff] %v3249
    %3314 = vst [vmem:[#allocation2 + $0x1a8] sm:$0xff] %v3250
    %3315 = vst [vmem:[#allocation2 + $0x1b0] sm:$0xff] %v3251
    %3316 = vst [vmem:[#allocation2 + $0x1b8] sm:$0xff] %v3252
    %3317 = vst [vmem:[#allocation2 + $0x1c0] sm:$0xff] %v3253
    %3318 = vst [vmem:[#allocation2 + $0x1c8] sm:$0xff] %v3254
    %3319 = vst [vmem:[#allocation2 + $0x1d0] sm:$0xff] %v3255
    %3320 = vst [vmem:[#allocation2 + $0x1d8] sm:$0xff] %v3256
    %3321 = vst [vmem:[#allocation2 + $0x1e0] sm:$0xff] %v3257
    %3322 = vst [vmem:[#allocation2 + $0x1e8] sm:$0xff] %v3258
    %3323 = vst [vmem:[#allocation2 + $0x1f0] sm:$0xff] %v3259
    %3324 = vst [vmem:[#allocation2 + $0x1f8] sm:$0xff] %v3260
    // Predicated region
    $region50: #{tpu_custom_call.1} parent=1 // pred_check
      %p3325 = pneg %p83
    $region51: #{tpu_custom_call.1} parent=1 // pred_check_branch
      %3327 = sbr.rel (%p3325) target = $region53
    $region52: #{tpu_custom_call.1} parent=1 // pred_region
      %v3328 = vld [vmem:[#allocation3] sm:$0xff]
      %v3329 = vld [vmem:[#allocation3 + $0x8] sm:$0xff]
      %v3330 = vld [vmem:[#allocation3 + $0x10] sm:$0xff]
      %v3331 = vld [vmem:[#allocation3 + $0x18] sm:$0xff]
      %v3332 = vld [vmem:[#allocation3 + $0x20] sm:$0xff]
      %v3333 = vld [vmem:[#allocation3 + $0x28] sm:$0xff]
      %v3334 = vld [vmem:[#allocation3 + $0x30] sm:$0xff]
      %v3335 = vld [vmem:[#allocation3 + $0x38] sm:$0xff]
      %v3336 = vld [vmem:[#allocation3 + $0x40] sm:$0xff]
      %v3337 = vld [vmem:[#allocation3 + $0x48] sm:$0xff]
      %v3338 = vld [vmem:[#allocation3 + $0x50] sm:$0xff]
      %v3339 = vld [vmem:[#allocation3 + $0x58] sm:$0xff]
      %v3340 = vld [vmem:[#allocation3 + $0x60] sm:$0xff]
      %v3341 = vld [vmem:[#allocation3 + $0x68] sm:$0xff]
      %v3342 = vld [vmem:[#allocation3 + $0x70] sm:$0xff]
      %v3343 = vld [vmem:[#allocation3 + $0x78] sm:$0xff]
      %v3344 = vld [vmem:[#allocation3 + $0x80] sm:$0xff]
      %v3345 = vld [vmem:[#allocation3 + $0x88] sm:$0xff]
      %v3346 = vld [vmem:[#allocation3 + $0x90] sm:$0xff]
      %v3347 = vld [vmem:[#allocation3 + $0x98] sm:$0xff]
      %v3348 = vld [vmem:[#allocation3 + $0xa0] sm:$0xff]
      %v3349 = vld [vmem:[#allocation3 + $0xa8] sm:$0xff]
      %v3350 = vld [vmem:[#allocation3 + $0xb0] sm:$0xff]
      %v3351 = vld [vmem:[#allocation3 + $0xb8] sm:$0xff]
      %v3352 = vld [vmem:[#allocation3 + $0xc0] sm:$0xff]
      %v3353 = vld [vmem:[#allocation3 + $0xc8] sm:$0xff]
      %v3354 = vld [vmem:[#allocation3 + $0xd0] sm:$0xff]
      %v3355 = vld [vmem:[#allocation3 + $0xd8] sm:$0xff]
      %v3356 = vld [vmem:[#allocation3 + $0xe0] sm:$0xff]
      %v3357 = vld [vmem:[#allocation3 + $0xe8] sm:$0xff]
      %v3358 = vld [vmem:[#allocation3 + $0xf0] sm:$0xff]
      %v3359 = vld [vmem:[#allocation3 + $0xf8] sm:$0xff]
      %v3360 = vrsqrt.pop %v3328
      %v3361 = vmul.f32 %v3328, %v3360
      %vm3362 = vcmp.eq.f32.partialorder %v3328, inf
      %v3363 = vsel %vm3362, %v3328, %v3361
      %vm3364 = vcmp.eq.f32.partialorder %v3328, 0.0
      %v3365 = vand.u32 %v3328, 2147483648
      %v3366 = vsel %vm3364, %v3365, %v3363
      %v3367 = vrsqrt.pop %v3329
      %v3368 = vmul.f32 %v3329, %v3367
      %vm3369 = vcmp.eq.f32.partialorder %v3329, inf
      %v3370 = vsel %vm3369, %v3329, %v3368
      %vm3371 = vcmp.eq.f32.partialorder %v3329, 0.0
      %v3372 = vand.u32 %v3329, 2147483648
      %v3373 = vsel %vm3371, %v3372, %v3370
      %v3374 = vrsqrt.pop %v3330
      %v3375 = vmul.f32 %v3330, %v3374
      %vm3376 = vcmp.eq.f32.partialorder %v3330, inf
      %v3377 = vsel %vm3376, %v3330, %v3375
      %vm3378 = vcmp.eq.f32.partialorder %v3330, 0.0
      %v3379 = vand.u32 %v3330, 2147483648
      %v3380 = vsel %vm3378, %v3379, %v3377
      %v3381 = vrsqrt.pop %v3331
      %v3382 = vmul.f32 %v3331, %v3381
      %vm3383 = vcmp.eq.f32.partialorder %v3331, inf
      %v3384 = vsel %vm3383, %v3331, %v3382
      %vm3385 = vcmp.eq.f32.partialorder %v3331, 0.0
      %v3386 = vand.u32 %v3331, 2147483648
      %v3387 = vsel %vm3385, %v3386, %v3384
      %v3388 = vrsqrt.pop %v3332
      %v3389 = vmul.f32 %v3332, %v3388
      %vm3390 = vcmp.eq.f32.partialorder %v3332, inf
      %v3391 = vsel %vm3390, %v3332, %v3389
      %vm3392 = vcmp.eq.f32.partialorder %v3332, 0.0
      %v3393 = vand.u32 %v3332, 2147483648
      %v3394 = vsel %vm3392, %v3393, %v3391
      %v3395 = vrsqrt.pop %v3333
      %v3396 = vmul.f32 %v3333, %v3395
      %vm3397 = vcmp.eq.f32.partialorder %v3333, inf
      %v3398 = vsel %vm3397, %v3333, %v3396
      %vm3399 = vcmp.eq.f32.partialorder %v3333, 0.0
      %v3400 = vand.u32 %v3333, 2147483648
      %v3401 = vsel %vm3399, %v3400, %v3398
      %v3402 = vrsqrt.pop %v3334
      %v3403 = vmul.f32 %v3334, %v3402
      %vm3404 = vcmp.eq.f32.partialorder %v3334, inf
      %v3405 = vsel %vm3404, %v3334, %v3403
      %vm3406 = vcmp.eq.f32.partialorder %v3334, 0.0
      %v3407 = vand.u32 %v3334, 2147483648
      %v3408 = vsel %vm3406, %v3407, %v3405
      %v3409 = vrsqrt.pop %v3335
      %v3410 = vmul.f32 %v3335, %v3409
      %vm3411 = vcmp.eq.f32.partialorder %v3335, inf
      %v3412 = vsel %vm3411, %v3335, %v3410
      %vm3413 = vcmp.eq.f32.partialorder %v3335, 0.0
      %v3414 = vand.u32 %v3335, 2147483648
      %v3415 = vsel %vm3413, %v3414, %v3412
      %v3416 = vrsqrt.pop %v3336
      %v3417 = vmul.f32 %v3336, %v3416
      %vm3418 = vcmp.eq.f32.partialorder %v3336, inf
      %v3419 = vsel %vm3418, %v3336, %v3417
      %vm3420 = vcmp.eq.f32.partialorder %v3336, 0.0
      %v3421 = vand.u32 %v3336, 2147483648
      %v3422 = vsel %vm3420, %v3421, %v3419
      %v3423 = vrsqrt.pop %v3337
      %v3424 = vmul.f32 %v3337, %v3423
      %vm3425 = vcmp.eq.f32.partialorder %v3337, inf
      %v3426 = vsel %vm3425, %v3337, %v3424
      %vm3427 = vcmp.eq.f32.partialorder %v3337, 0.0
      %v3428 = vand.u32 %v3337, 2147483648
      %v3429 = vsel %vm3427, %v3428, %v3426
      %v3430 = vrsqrt.pop %v3338
      %v3431 = vmul.f32 %v3338, %v3430
      %vm3432 = vcmp.eq.f32.partialorder %v3338, inf
      %v3433 = vsel %vm3432, %v3338, %v3431
      %vm3434 = vcmp.eq.f32.partialorder %v3338, 0.0
      %v3435 = vand.u32 %v3338, 2147483648
      %v3436 = vsel %vm3434, %v3435, %v3433
      %v3437 = vrsqrt.pop %v3339
      %v3438 = vmul.f32 %v3339, %v3437
      %vm3439 = vcmp.eq.f32.partialorder %v3339, inf
      %v3440 = vsel %vm3439, %v3339, %v3438
      %vm3441 = vcmp.eq.f32.partialorder %v3339, 0.0
      %v3442 = vand.u32 %v3339, 2147483648
      %v3443 = vsel %vm3441, %v3442, %v3440
      %v3444 = vrsqrt.pop %v3340
      %v3445 = vmul.f32 %v3340, %v3444
      %vm3446 = vcmp.eq.f32.partialorder %v3340, inf
      %v3447 = vsel %vm3446, %v3340, %v3445
      %vm3448 = vcmp.eq.f32.partialorder %v3340, 0.0
      %v3449 = vand.u32 %v3340, 2147483648
      %v3450 = vsel %vm3448, %v3449, %v3447
      %v3451 = vrsqrt.pop %v3341
      %v3452 = vmul.f32 %v3341, %v3451
      %vm3453 = vcmp.eq.f32.partialorder %v3341, inf
      %v3454 = vsel %vm3453, %v3341, %v3452
      %vm3455 = vcmp.eq.f32.partialorder %v3341, 0.0
      %v3456 = vand.u32 %v3341, 2147483648
      %v3457 = vsel %vm3455, %v3456, %v3454
      %v3458 = vrsqrt.pop %v3342
      %v3459 = vmul.f32 %v3342, %v3458
      %vm3460 = vcmp.eq.f32.partialorder %v3342, inf
      %v3461 = vsel %vm3460, %v3342, %v3459
      %vm3462 = vcmp.eq.f32.partialorder %v3342, 0.0
      %v3463 = vand.u32 %v3342, 2147483648
      %v3464 = vsel %vm3462, %v3463, %v3461
      %v3465 = vrsqrt.pop %v3343
      %v3466 = vmul.f32 %v3343, %v3465
      %vm3467 = vcmp.eq.f32.partialorder %v3343, inf
      %v3468 = vsel %vm3467, %v3343, %v3466
      %vm3469 = vcmp.eq.f32.partialorder %v3343, 0.0
      %v3470 = vand.u32 %v3343, 2147483648
      %v3471 = vsel %vm3469, %v3470, %v3468
      %v3472 = vrsqrt.pop %v3344
      %v3473 = vmul.f32 %v3344, %v3472
      %vm3474 = vcmp.eq.f32.partialorder %v3344, inf
      %v3475 = vsel %vm3474, %v3344, %v3473
      %vm3476 = vcmp.eq.f32.partialorder %v3344, 0.0
      %v3477 = vand.u32 %v3344, 2147483648
      %v3478 = vsel %vm3476, %v3477, %v3475
      %v3479 = vrsqrt.pop %v3345
      %v3480 = vmul.f32 %v3345, %v3479
      %vm3481 = vcmp.eq.f32.partialorder %v3345, inf
      %v3482 = vsel %vm3481, %v3345, %v3480
      %vm3483 = vcmp.eq.f32.partialorder %v3345, 0.0
      %v3484 = vand.u32 %v3345, 2147483648
      %v3485 = vsel %vm3483, %v3484, %v3482
      %v3486 = vrsqrt.pop %v3346
      %v3487 = vmul.f32 %v3346, %v3486
      %vm3488 = vcmp.eq.f32.partialorder %v3346, inf
      %v3489 = vsel %vm3488, %v3346, %v3487
      %vm3490 = vcmp.eq.f32.partialorder %v3346, 0.0
      %v3491 = vand.u32 %v3346, 2147483648
      %v3492 = vsel %vm3490, %v3491, %v3489
      %v3493 = vrsqrt.pop %v3347
      %v3494 = vmul.f32 %v3347, %v3493
      %vm3495 = vcmp.eq.f32.partialorder %v3347, inf
      %v3496 = vsel %vm3495, %v3347, %v3494
      %vm3497 = vcmp.eq.f32.partialorder %v3347, 0.0
      %v3498 = vand.u32 %v3347, 2147483648
      %v3499 = vsel %vm3497, %v3498, %v3496
      %v3500 = vrsqrt.pop %v3348
      %v3501 = vmul.f32 %v3348, %v3500
      %vm3502 = vcmp.eq.f32.partialorder %v3348, inf
      %v3503 = vsel %vm3502, %v3348, %v3501
      %vm3504 = vcmp.eq.f32.partialorder %v3348, 0.0
      %v3505 = vand.u32 %v3348, 2147483648
      %v3506 = vsel %vm3504, %v3505, %v3503
      %v3507 = vrsqrt.pop %v3349
      %v3508 = vmul.f32 %v3349, %v3507
      %vm3509 = vcmp.eq.f32.partialorder %v3349, inf
      %v3510 = vsel %vm3509, %v3349, %v3508
      %vm3511 = vcmp.eq.f32.partialorder %v3349, 0.0
      %v3512 = vand.u32 %v3349, 2147483648
      %v3513 = vsel %vm3511, %v3512, %v3510
      %v3514 = vrsqrt.pop %v3350
      %v3515 = vmul.f32 %v3350, %v3514
      %vm3516 = vcmp.eq.f32.partialorder %v3350, inf
      %v3517 = vsel %vm3516, %v3350, %v3515
      %vm3518 = vcmp.eq.f32.partialorder %v3350, 0.0
      %v3519 = vand.u32 %v3350, 2147483648
      %v3520 = vsel %vm3518, %v3519, %v3517
      %v3521 = vrsqrt.pop %v3351
      %v3522 = vmul.f32 %v3351, %v3521
      %vm3523 = vcmp.eq.f32.partialorder %v3351, inf
      %v3524 = vsel %vm3523, %v3351, %v3522
      %vm3525 = vcmp.eq.f32.partialorder %v3351, 0.0
      %v3526 = vand.u32 %v3351, 2147483648
      %v3527 = vsel %vm3525, %v3526, %v3524
      %v3528 = vrsqrt.pop %v3352
      %v3529 = vmul.f32 %v3352, %v3528
      %vm3530 = vcmp.eq.f32.partialorder %v3352, inf
      %v3531 = vsel %vm3530, %v3352, %v3529
      %vm3532 = vcmp.eq.f32.partialorder %v3352, 0.0
      %v3533 = vand.u32 %v3352, 2147483648
      %v3534 = vsel %vm3532, %v3533, %v3531
      %v3535 = vrsqrt.pop %v3353
      %v3536 = vmul.f32 %v3353, %v3535
      %vm3537 = vcmp.eq.f32.partialorder %v3353, inf
      %v3538 = vsel %vm3537, %v3353, %v3536
      %vm3539 = vcmp.eq.f32.partialorder %v3353, 0.0
      %v3540 = vand.u32 %v3353, 2147483648
      %v3541 = vsel %vm3539, %v3540, %v3538
      %v3542 = vrsqrt.pop %v3354
      %v3543 = vmul.f32 %v3354, %v3542
      %vm3544 = vcmp.eq.f32.partialorder %v3354, inf
      %v3545 = vsel %vm3544, %v3354, %v3543
      %vm3546 = vcmp.eq.f32.partialorder %v3354, 0.0
      %v3547 = vand.u32 %v3354, 2147483648
      %v3548 = vsel %vm3546, %v3547, %v3545
      %v3549 = vrsqrt.pop %v3355
      %v3550 = vmul.f32 %v3355, %v3549
      %vm3551 = vcmp.eq.f32.partialorder %v3355, inf
      %v3552 = vsel %vm3551, %v3355, %v3550
      %vm3553 = vcmp.eq.f32.partialorder %v3355, 0.0
      %v3554 = vand.u32 %v3355, 2147483648
      %v3555 = vsel %vm3553, %v3554, %v3552
      %v3556 = vrsqrt.pop %v3356
      %v3557 = vmul.f32 %v3356, %v3556
      %vm3558 = vcmp.eq.f32.partialorder %v3356, inf
      %v3559 = vsel %vm3558, %v3356, %v3557
      %vm3560 = vcmp.eq.f32.partialorder %v3356, 0.0
      %v3561 = vand.u32 %v3356, 2147483648
      %v3562 = vsel %vm3560, %v3561, %v3559
      %v3563 = vrsqrt.pop %v3357
      %v3564 = vmul.f32 %v3357, %v3563
      %vm3565 = vcmp.eq.f32.partialorder %v3357, inf
      %v3566 = vsel %vm3565, %v3357, %v3564
      %vm3567 = vcmp.eq.f32.partialorder %v3357, 0.0
      %v3568 = vand.u32 %v3357, 2147483648
      %v3569 = vsel %vm3567, %v3568, %v3566
      %v3570 = vrsqrt.pop %v3358
      %v3571 = vmul.f32 %v3358, %v3570
      %vm3572 = vcmp.eq.f32.partialorder %v3358, inf
      %v3573 = vsel %vm3572, %v3358, %v3571
      %vm3574 = vcmp.eq.f32.partialorder %v3358, 0.0
      %v3575 = vand.u32 %v3358, 2147483648
      %v3576 = vsel %vm3574, %v3575, %v3573
      %v3577 = vrsqrt.pop %v3359
      %v3578 = vmul.f32 %v3359, %v3577
      %vm3579 = vcmp.eq.f32.partialorder %v3359, inf
      %v3580 = vsel %vm3579, %v3359, %v3578
      %vm3581 = vcmp.eq.f32.partialorder %v3359, 0.0
      %v3582 = vand.u32 %v3359, 2147483648
      %v3583 = vsel %vm3581, %v3582, %v3580
      %v3584 = vmax.f32 %v3366, 1e-12
      %v3585 = vmax.f32 %v3373, 1e-12
      %v3586 = vmax.f32 %v3380, 1e-12
      %v3587 = vmax.f32 %v3387, 1e-12
      %v3588 = vmax.f32 %v3394, 1e-12
      %v3589 = vmax.f32 %v3401, 1e-12
      %v3590 = vmax.f32 %v3408, 1e-12
      %v3591 = vmax.f32 %v3415, 1e-12
      %v3592 = vmax.f32 %v3422, 1e-12
      %v3593 = vmax.f32 %v3429, 1e-12
      %v3594 = vmax.f32 %v3436, 1e-12
      %v3595 = vmax.f32 %v3443, 1e-12
      %v3596 = vmax.f32 %v3450, 1e-12
      %v3597 = vmax.f32 %v3457, 1e-12
      %v3598 = vmax.f32 %v3464, 1e-12
      %v3599 = vmax.f32 %v3471, 1e-12
      %v3600 = vmax.f32 %v3478, 1e-12
      %v3601 = vmax.f32 %v3485, 1e-12
      %v3602 = vmax.f32 %v3492, 1e-12
      %v3603 = vmax.f32 %v3499, 1e-12
      %v3604 = vmax.f32 %v3506, 1e-12
      %v3605 = vmax.f32 %v3513, 1e-12
      %v3606 = vmax.f32 %v3520, 1e-12
      %v3607 = vmax.f32 %v3527, 1e-12
      %v3608 = vmax.f32 %v3534, 1e-12
      %v3609 = vmax.f32 %v3541, 1e-12
      %v3610 = vmax.f32 %v3548, 1e-12
      %v3611 = vmax.f32 %v3555, 1e-12
      %v3612 = vmax.f32 %v3562, 1e-12
      %v3613 = vmax.f32 %v3569, 1e-12
      %v3614 = vmax.f32 %v3576, 1e-12
      %v3615 = vmax.f32 %v3583, 1e-12
      %v3616 = vrcp.pop %v3584
      %v3617 = vrcp.pop %v3585
      %v3618 = vrcp.pop %v3586
      %v3619 = vrcp.pop %v3587
      %v3620 = vrcp.pop %v3588
      %v3621 = vrcp.pop %v3589
      %v3622 = vrcp.pop %v3590
      %v3623 = vrcp.pop %v3591
      %v3624 = vrcp.pop %v3592
      %v3625 = vrcp.pop %v3593
      %v3626 = vrcp.pop %v3594
      %v3627 = vrcp.pop %v3595
      %v3628 = vrcp.pop %v3596
      %v3629 = vrcp.pop %v3597
      %v3630 = vrcp.pop %v3598
      %v3631 = vrcp.pop %v3599
      %v3632 = vrcp.pop %v3600
      %v3633 = vrcp.pop %v3601
      %v3634 = vrcp.pop %v3602
      %v3635 = vrcp.pop %v3603
      %v3636 = vrcp.pop %v3604
      %v3637 = vrcp.pop %v3605
      %v3638 = vrcp.pop %v3606
      %v3639 = vrcp.pop %v3607
      %v3640 = vrcp.pop %v3608
      %v3641 = vrcp.pop %v3609
      %v3642 = vrcp.pop %v3610
      %v3643 = vrcp.pop %v3611
      %v3644 = vrcp.pop %v3612
      %v3645 = vrcp.pop %v3613
      %v3646 = vrcp.pop %v3614
      %v3647 = vrcp.pop %v3615
      %v3648 = vld [vmem:[#allocation2] sm:$0xff]
      %v3649 = vld [vmem:[#allocation2 + $0x8] sm:$0xff]
      %v3650 = vld [vmem:[#allocation2 + $0x10] sm:$0xff]
      %v3651 = vld [vmem:[#allocation2 + $0x18] sm:$0xff]
      %v3652 = vld [vmem:[#allocation2 + $0x20] sm:$0xff]
      %v3653 = vld [vmem:[#allocation2 + $0x28] sm:$0xff]
      %v3654 = vld [vmem:[#allocation2 + $0x30] sm:$0xff]
      %v3655 = vld [vmem:[#allocation2 + $0x38] sm:$0xff]
      %v3656 = vld [vmem:[#allocation2 + $0x40] sm:$0xff]
      %v3657 = vld [vmem:[#allocation2 + $0x48] sm:$0xff]
      %v3658 = vld [vmem:[#allocation2 + $0x50] sm:$0xff]
      %v3659 = vld [vmem:[#allocation2 + $0x58] sm:$0xff]
      %v3660 = vld [vmem:[#allocation2 + $0x60] sm:$0xff]
      %v3661 = vld [vmem:[#allocation2 + $0x68] sm:$0xff]
      %v3662 = vld [vmem:[#allocation2 + $0x70] sm:$0xff]
      %v3663 = vld [vmem:[#allocation2 + $0x78] sm:$0xff]
      %v3664 = vld [vmem:[#allocation2 + $0x80] sm:$0xff]
      %v3665 = vld [vmem:[#allocation2 + $0x88] sm:$0xff]
      %v3666 = vld [vmem:[#allocation2 + $0x90] sm:$0xff]
      %v3667 = vld [vmem:[#allocation2 + $0x98] sm:$0xff]
      %v3668 = vld [vmem:[#allocation2 + $0xa0] sm:$0xff]
      %v3669 = vld [vmem:[#allocation2 + $0xa8] sm:$0xff]
      %v3670 = vld [vmem:[#allocation2 + $0xb0] sm:$0xff]
      %v3671 = vld [vmem:[#allocation2 + $0xb8] sm:$0xff]
      %v3672 = vld [vmem:[#allocation2 + $0xc0] sm:$0xff]
      %v3673 = vld [vmem:[#allocation2 + $0xc8] sm:$0xff]
      %v3674 = vld [vmem:[#allocation2 + $0xd0] sm:$0xff]
      %v3675 = vld [vmem:[#allocation2 + $0xd8] sm:$0xff]
      %v3676 = vld [vmem:[#allocation2 + $0xe0] sm:$0xff]
      %v3677 = vld [vmem:[#allocation2 + $0xe8] sm:$0xff]
      %v3678 = vld [vmem:[#allocation2 + $0xf0] sm:$0xff]
      %v3679 = vld [vmem:[#allocation2 + $0xf8] sm:$0xff]
      %v3680 = vld [vmem:[#allocation2 + $0x100] sm:$0xff]
      %v3681 = vld [vmem:[#allocation2 + $0x108] sm:$0xff]
      %v3682 = vld [vmem:[#allocation2 + $0x110] sm:$0xff]
      %v3683 = vld [vmem:[#allocation2 + $0x118] sm:$0xff]
      %v3684 = vld [vmem:[#allocation2 + $0x120] sm:$0xff]
      %v3685 = vld [vmem:[#allocation2 + $0x128] sm:$0xff]
      %v3686 = vld [vmem:[#allocation2 + $0x130] sm:$0xff]
      %v3687 = vld [vmem:[#allocation2 + $0x138] sm:$0xff]
      %v3688 = vld [vmem:[#allocation2 + $0x140] sm:$0xff]
      %v3689 = vld [vmem:[#allocation2 + $0x148] sm:$0xff]
      %v3690 = vld [vmem:[#allocation2 + $0x150] sm:$0xff]
      %v3691 = vld [vmem:[#allocation2 + $0x158] sm:$0xff]
      %v3692 = vld [vmem:[#allocation2 + $0x160] sm:$0xff]
      %v3693 = vld [vmem:[#allocation2 + $0x168] sm:$0xff]
      %v3694 = vld [vmem:[#allocation2 + $0x170] sm:$0xff]
      %v3695 = vld [vmem:[#allocation2 + $0x178] sm:$0xff]
      %v3696 = vld [vmem:[#allocation2 + $0x180] sm:$0xff]
      %v3697 = vld [vmem:[#allocation2 + $0x188] sm:$0xff]
      %v3698 = vld [vmem:[#allocation2 + $0x190] sm:$0xff]
      %v3699 = vld [vmem:[#allocation2 + $0x198] sm:$0xff]
      %v3700 = vld [vmem:[#allocation2 + $0x1a0] sm:$0xff]
      %v3701 = vld [vmem:[#allocation2 + $0x1a8] sm:$0xff]
      %v3702 = vld [vmem:[#allocation2 + $0x1b0] sm:$0xff]
      %v3703 = vld [vmem:[#allocation2 + $0x1b8] sm:$0xff]
      %v3704 = vld [vmem:[#allocation2 + $0x1c0] sm:$0xff]
      %v3705 = vld [vmem:[#allocation2 + $0x1c8] sm:$0xff]
      %v3706 = vld [vmem:[#allocation2 + $0x1d0] sm:$0xff]
      %v3707 = vld [vmem:[#allocation2 + $0x1d8] sm:$0xff]
      %v3708 = vld [vmem:[#allocation2 + $0x1e0] sm:$0xff]
      %v3709 = vld [vmem:[#allocation2 + $0x1e8] sm:$0xff]
      %v3710 = vld [vmem:[#allocation2 + $0x1f0] sm:$0xff]
      %v3711 = vld [vmem:[#allocation2 + $0x1f8] sm:$0xff]
      %3713 = vset.pattern.permute.xlu0 0
      %3714 = vperm.xlu0 %3713, %v3616
      %v3715 = vpop.permute.xlu0 %3714
      %3718 = vset.pattern.permute.xlu0 0
      %3719 = vperm.xlu0 %3718, %v3617
      %v3720 = vpop.permute.xlu0 %3719
      %3723 = vset.pattern.permute.xlu0 0
      %3724 = vperm.xlu0 %3723, %v3618
      %v3725 = vpop.permute.xlu0 %3724
      %3728 = vset.pattern.permute.xlu0 0
      %3729 = vperm.xlu0 %3728, %v3619
      %v3730 = vpop.permute.xlu0 %3729
      %3733 = vset.pattern.permute.xlu0 0
      %3734 = vperm.xlu0 %3733, %v3620
      %v3735 = vpop.permute.xlu0 %3734
      %3738 = vset.pattern.permute.xlu0 0
      %3739 = vperm.xlu0 %3738, %v3621
      %v3740 = vpop.permute.xlu0 %3739
      %3743 = vset.pattern.permute.xlu0 0
      %3744 = vperm.xlu0 %3743, %v3622
      %v3745 = vpop.permute.xlu0 %3744
      %3748 = vset.pattern.permute.xlu0 0
      %3749 = vperm.xlu0 %3748, %v3623
      %v3750 = vpop.permute.xlu0 %3749
      %3753 = vset.pattern.permute.xlu0 0
      %3754 = vperm.xlu0 %3753, %v3624
      %v3755 = vpop.permute.xlu0 %3754
      %3758 = vset.pattern.permute.xlu0 0
      %3759 = vperm.xlu0 %3758, %v3625
      %v3760 = vpop.permute.xlu0 %3759
      %3763 = vset.pattern.permute.xlu0 0
      %3764 = vperm.xlu0 %3763, %v3626
      %v3765 = vpop.permute.xlu0 %3764
      %3768 = vset.pattern.permute.xlu0 0
      %3769 = vperm.xlu0 %3768, %v3627
      %v3770 = vpop.permute.xlu0 %3769
      %3773 = vset.pattern.permute.xlu0 0
      %3774 = vperm.xlu0 %3773, %v3628
      %v3775 = vpop.permute.xlu0 %3774
      %3778 = vset.pattern.permute.xlu0 0
      %3779 = vperm.xlu0 %3778, %v3629
      %v3780 = vpop.permute.xlu0 %3779
      %3783 = vset.pattern.permute.xlu0 0
      %3784 = vperm.xlu0 %3783, %v3630
      %v3785 = vpop.permute.xlu0 %3784
      %3788 = vset.pattern.permute.xlu0 0
      %3789 = vperm.xlu0 %3788, %v3631
      %v3790 = vpop.permute.xlu0 %3789
      %3793 = vset.pattern.permute.xlu0 0
      %3794 = vperm.xlu0 %3793, %v3632
      %v3795 = vpop.permute.xlu0 %3794
      %3798 = vset.pattern.permute.xlu0 0
      %3799 = vperm.xlu0 %3798, %v3633
      %v3800 = vpop.permute.xlu0 %3799
      %3803 = vset.pattern.permute.xlu0 0
      %3804 = vperm.xlu0 %3803, %v3634
      %v3805 = vpop.permute.xlu0 %3804
      %3808 = vset.pattern.permute.xlu0 0
      %3809 = vperm.xlu0 %3808, %v3635
      %v3810 = vpop.permute.xlu0 %3809
      %3813 = vset.pattern.permute.xlu0 0
      %3814 = vperm.xlu0 %3813, %v3636
      %v3815 = vpop.permute.xlu0 %3814
      %3818 = vset.pattern.permute.xlu0 0
      %3819 = vperm.xlu0 %3818, %v3637
      %v3820 = vpop.permute.xlu0 %3819
      %3823 = vset.pattern.permute.xlu0 0
      %3824 = vperm.xlu0 %3823, %v3638
      %v3825 = vpop.permute.xlu0 %3824
      %3828 = vset.pattern.permute.xlu0 0
      %3829 = vperm.xlu0 %3828, %v3639
      %v3830 = vpop.permute.xlu0 %3829
      %3833 = vset.pattern.permute.xlu0 0
      %3834 = vperm.xlu0 %3833, %v3640
      %v3835 = vpop.permute.xlu0 %3834
      %3838 = vset.pattern.permute.xlu0 0
      %3839 = vperm.xlu0 %3838, %v3641
      %v3840 = vpop.permute.xlu0 %3839
      %3843 = vset.pattern.permute.xlu0 0
      %3844 = vperm.xlu0 %3843, %v3642
      %v3845 = vpop.permute.xlu0 %3844
      %3848 = vset.pattern.permute.xlu0 0
      %3849 = vperm.xlu0 %3848, %v3643
      %v3850 = vpop.permute.xlu0 %3849
      %3853 = vset.pattern.permute.xlu0 0
      %3854 = vperm.xlu0 %3853, %v3644
      %v3855 = vpop.permute.xlu0 %3854
      %3858 = vset.pattern.permute.xlu0 0
      %3859 = vperm.xlu0 %3858, %v3645
      %v3860 = vpop.permute.xlu0 %3859
      %3863 = vset.pattern.permute.xlu0 0
      %3864 = vperm.xlu0 %3863, %v3646
      %v3865 = vpop.permute.xlu0 %3864
      %3868 = vset.pattern.permute.xlu0 0
      %3869 = vperm.xlu0 %3868, %v3647
      %v3870 = vpop.permute.xlu0 %3869
      %v3872 = vmul.f32 %v3648, %v3715
      %v3873 = vmul.f32 %v3649, %v3715
      %v3874 = vmul.f32 %v3650, %v3720
      %v3875 = vmul.f32 %v3651, %v3720
      %v3876 = vmul.f32 %v3652, %v3725
      %v3877 = vmul.f32 %v3653, %v3725
      %v3878 = vmul.f32 %v3654, %v3730
      %v3879 = vmul.f32 %v3655, %v3730
      %v3880 = vmul.f32 %v3656, %v3735
      %v3881 = vmul.f32 %v3657, %v3735
      %v3882 = vmul.f32 %v3658, %v3740
      %v3883 = vmul.f32 %v3659, %v3740
      %v3884 = vmul.f32 %v3660, %v3745
      %v3885 = vmul.f32 %v3661, %v3745
      %v3886 = vmul.f32 %v3662, %v3750
      %v3887 = vmul.f32 %v3663, %v3750
      %v3888 = vmul.f32 %v3664, %v3755
      %v3889 = vmul.f32 %v3665, %v3755
      %v3890 = vmul.f32 %v3666, %v3760
      %v3891 = vmul.f32 %v3667, %v3760
      %v3892 = vmul.f32 %v3668, %v3765
      %v3893 = vmul.f32 %v3669, %v3765
      %v3894 = vmul.f32 %v3670, %v3770
      %v3895 = vmul.f32 %v3671, %v3770
      %v3896 = vmul.f32 %v3672, %v3775
      %v3897 = vmul.f32 %v3673, %v3775
      %v3898 = vmul.f32 %v3674, %v3780
      %v3899 = vmul.f32 %v3675, %v3780
      %v3900 = vmul.f32 %v3676, %v3785
      %v3901 = vmul.f32 %v3677, %v3785
      %v3902 = vmul.f32 %v3678, %v3790
      %v3903 = vmul.f32 %v3679, %v3790
      %v3904 = vmul.f32 %v3680, %v3795
      %v3905 = vmul.f32 %v3681, %v3795
      %v3906 = vmul.f32 %v3682, %v3800
      %v3907 = vmul.f32 %v3683, %v3800
      %v3908 = vmul.f32 %v3684, %v3805
      %v3909 = vmul.f32 %v3685, %v3805
      %v3910 = vmul.f32 %v3686, %v3810
      %v3911 = vmul.f32 %v3687, %v3810
      %v3912 = vmul.f32 %v3688, %v3815
      %v3913 = vmul.f32 %v3689, %v3815
      %v3914 = vmul.f32 %v3690, %v3820
      %v3915 = vmul.f32 %v3691, %v3820
      %v3916 = vmul.f32 %v3692, %v3825
      %v3917 = vmul.f32 %v3693, %v3825
      %v3918 = vmul.f32 %v3694, %v3830
      %v3919 = vmul.f32 %v3695, %v3830
      %v3920 = vmul.f32 %v3696, %v3835
      %v3921 = vmul.f32 %v3697, %v3835
      %v3922 = vmul.f32 %v3698, %v3840
      %v3923 = vmul.f32 %v3699, %v3840
      %v3924 = vmul.f32 %v3700, %v3845
      %v3925 = vmul.f32 %v3701, %v3845
      %v3926 = vmul.f32 %v3702, %v3850
      %v3927 = vmul.f32 %v3703, %v3850
      %v3928 = vmul.f32 %v3704, %v3855
      %v3929 = vmul.f32 %v3705, %v3855
      %v3930 = vmul.f32 %v3706, %v3860
      %v3931 = vmul.f32 %v3707, %v3860
      %v3932 = vmul.f32 %v3708, %v3865
      %v3933 = vmul.f32 %v3709, %v3865
      %v3934 = vmul.f32 %v3710, %v3870
      %v3935 = vmul.f32 %v3711, %v3870
      %v3936 = vld [vmem:[%s2] sm:$0x3]
      %v3938 = vlaneseq
      %v3939 = vshrl.u32 %v3938, 7
      %v3940 = vsub.s32 0, %v3939
      %v3941 = vrot.slane %v3936, %v3940
      %v3942 = vlaneseq
      %v3943 = vshrl.u32 %v3942, 7
      %v3944 = vsub.s32 1, %v3943
      %v3945 = vrot.slane %v3936, %v3944
      %v3948 = vadd.f32 %v3872, %v3941
      %v3949 = vadd.f32 %v3873, %v3945
      %v3950 = vadd.f32 %v3874, %v3941
      %v3951 = vadd.f32 %v3875, %v3945
      %v3952 = vadd.f32 %v3876, %v3941
      %v3953 = vadd.f32 %v3877, %v3945
      %v3954 = vadd.f32 %v3878, %v3941
      %v3955 = vadd.f32 %v3879, %v3945
      %v3956 = vadd.f32 %v3880, %v3941
      %v3957 = vadd.f32 %v3881, %v3945
      %v3958 = vadd.f32 %v3882, %v3941
      %v3959 = vadd.f32 %v3883, %v3945
      %v3960 = vadd.f32 %v3884, %v3941
      %v3961 = vadd.f32 %v3885, %v3945
      %v3962 = vadd.f32 %v3886, %v3941
      %v3963 = vadd.f32 %v3887, %v3945
      %v3964 = vadd.f32 %v3888, %v3941
      %v3965 = vadd.f32 %v3889, %v3945
      %v3966 = vadd.f32 %v3890, %v3941
      %v3967 = vadd.f32 %v3891, %v3945
      %v3968 = vadd.f32 %v3892, %v3941
      %v3969 = vadd.f32 %v3893, %v3945
      %v3970 = vadd.f32 %v3894, %v3941
      %v3971 = vadd.f32 %v3895, %v3945
      %v3972 = vadd.f32 %v3896, %v3941
      %v3973 = vadd.f32 %v3897, %v3945
      %v3974 = vadd.f32 %v3898, %v3941
      %v3975 = vadd.f32 %v3899, %v3945
      %v3976 = vadd.f32 %v3900, %v3941
      %v3977 = vadd.f32 %v3901, %v3945
      %v3978 = vadd.f32 %v3902, %v3941
      %v3979 = vadd.f32 %v3903, %v3945
      %v3980 = vadd.f32 %v3904, %v3941
      %v3981 = vadd.f32 %v3905, %v3945
      %v3982 = vadd.f32 %v3906, %v3941
      %v3983 = vadd.f32 %v3907, %v3945
      %v3984 = vadd.f32 %v3908, %v3941
      %v3985 = vadd.f32 %v3909, %v3945
      %v3986 = vadd.f32 %v3910, %v3941
      %v3987 = vadd.f32 %v3911, %v3945
      %v3988 = vadd.f32 %v3912, %v3941
      %v3989 = vadd.f32 %v3913, %v3945
      %v3990 = vadd.f32 %v3914, %v3941
      %v3991 = vadd.f32 %v3915, %v3945
      %v3992 = vadd.f32 %v3916, %v3941
      %v3993 = vadd.f32 %v3917, %v3945
      %v3994 = vadd.f32 %v3918, %v3941
      %v3995 = vadd.f32 %v3919, %v3945
      %v3996 = vadd.f32 %v3920, %v3941
      %v3997 = vadd.f32 %v3921, %v3945
      %v3998 = vadd.f32 %v3922, %v3941
      %v3999 = vadd.f32 %v3923, %v3945
      %v4000 = vadd.f32 %v3924, %v3941
      %v4001 = vadd.f32 %v3925, %v3945
      %v4002 = vadd.f32 %v3926, %v3941
      %v4003 = vadd.f32 %v3927, %v3945
      %v4004 = vadd.f32 %v3928, %v3941
      %v4005 = vadd.f32 %v3929, %v3945
      %v4006 = vadd.f32 %v3930, %v3941
      %v4007 = vadd.f32 %v3931, %v3945
      %v4008 = vadd.f32 %v3932, %v3941
      %v4009 = vadd.f32 %v3933, %v3945
      %v4010 = vadd.f32 %v3934, %v3941
      %v4011 = vadd.f32 %v3935, %v3945
      %v4012 = vtanh.pop %v3948
      %v4013 = vtanh.pop %v3949
      %v4014 = vtanh.pop %v3950
      %v4015 = vtanh.pop %v3951
      %v4016 = vtanh.pop %v3952
      %v4017 = vtanh.pop %v3953
      %v4018 = vtanh.pop %v3954
      %v4019 = vtanh.pop %v3955
      %v4020 = vtanh.pop %v3956
      %v4021 = vtanh.pop %v3957
      %v4022 = vtanh.pop %v3958
      %v4023 = vtanh.pop %v3959
      %v4024 = vtanh.pop %v3960
      %v4025 = vtanh.pop %v3961
      %v4026 = vtanh.pop %v3962
      %v4027 = vtanh.pop %v3963
      %v4028 = vtanh.pop %v3964
      %v4029 = vtanh.pop %v3965
      %v4030 = vtanh.pop %v3966
      %v4031 = vtanh.pop %v3967
      %v4032 = vtanh.pop %v3968
      %v4033 = vtanh.pop %v3969
      %v4034 = vtanh.pop %v3970
      %v4035 = vtanh.pop %v3971
      %v4036 = vtanh.pop %v3972
      %v4037 = vtanh.pop %v3973
      %v4038 = vtanh.pop %v3974
      %v4039 = vtanh.pop %v3975
      %v4040 = vtanh.pop %v3976
      %v4041 = vtanh.pop %v3977
      %v4042 = vtanh.pop %v3978
      %v4043 = vtanh.pop %v3979
      %v4044 = vtanh.pop %v3980
      %v4045 = vtanh.pop %v3981
      %v4046 = vtanh.pop %v3982
      %v4047 = vtanh.pop %v3983
      %v4048 = vtanh.pop %v3984
      %v4049 = vtanh.pop %v3985
      %v4050 = vtanh.pop %v3986
      %v4051 = vtanh.pop %v3987
      %v4052 = vtanh.pop %v3988
      %v4053 = vtanh.pop %v3989
      %v4054 = vtanh.pop %v3990
      %v4055 = vtanh.pop %v3991
      %v4056 = vtanh.pop %v3992
      %v4057 = vtanh.pop %v3993
      %v4058 = vtanh.pop %v3994
      %v4059 = vtanh.pop %v3995
      %v4060 = vtanh.pop %v3996
      %v4061 = vtanh.pop %v3997
      %v4062 = vtanh.pop %v3998
      %v4063 = vtanh.pop %v3999
      %v4064 = vtanh.pop %v4000
      %v4065 = vtanh.pop %v4001
      %v4066 = vtanh.pop %v4002
      %v4067 = vtanh.pop %v4003
      %v4068 = vtanh.pop %v4004
      %v4069 = vtanh.pop %v4005
      %v4070 = vtanh.pop %v4006
      %v4071 = vtanh.pop %v4007
      %v4072 = vtanh.pop %v4008
      %v4073 = vtanh.pop %v4009
      %v4074 = vtanh.pop %v4010
      %v4075 = vtanh.pop %v4011
      %v4076 = vpack.c.bf16 %v4014, %v4012
      %v4077 = vpack.c.bf16 %v4015, %v4013
      %v4078 = vpack.c.bf16 %v4018, %v4016
      %v4079 = vpack.c.bf16 %v4019, %v4017
      %v4080 = vpack.c.bf16 %v4022, %v4020
      %v4081 = vpack.c.bf16 %v4023, %v4021
      %v4082 = vpack.c.bf16 %v4026, %v4024
      %v4083 = vpack.c.bf16 %v4027, %v4025
      %v4084 = vpack.c.bf16 %v4030, %v4028
      %v4085 = vpack.c.bf16 %v4031, %v4029
      %v4086 = vpack.c.bf16 %v4034, %v4032
      %v4087 = vpack.c.bf16 %v4035, %v4033
      %v4088 = vpack.c.bf16 %v4038, %v4036
      %v4089 = vpack.c.bf16 %v4039, %v4037
      %v4090 = vpack.c.bf16 %v4042, %v4040
      %v4091 = vpack.c.bf16 %v4043, %v4041
      %v4092 = vpack.c.bf16 %v4046, %v4044
      %v4093 = vpack.c.bf16 %v4047, %v4045
      %v4094 = vpack.c.bf16 %v4050, %v4048
      %v4095 = vpack.c.bf16 %v4051, %v4049
      %v4096 = vpack.c.bf16 %v4054, %v4052
      %v4097 = vpack.c.bf16 %v4055, %v4053
      %v4098 = vpack.c.bf16 %v4058, %v4056
      %v4099 = vpack.c.bf16 %v4059, %v4057
      %v4100 = vpack.c.bf16 %v4062, %v4060
      %v4101 = vpack.c.bf16 %v4063, %v4061
      %v4102 = vpack.c.bf16 %v4066, %v4064
      %v4103 = vpack.c.bf16 %v4067, %v4065
      %v4104 = vpack.c.bf16 %v4070, %v4068
      %v4105 = vpack.c.bf16 %v4071, %v4069
      %v4106 = vpack.c.bf16 %v4074, %v4072
      %v4107 = vpack.c.bf16 %v4075, %v4073
      %v4108 = vld [vmem:[#allocation9] sm:$0xf]
      %v4109 = vld [vmem:[#allocation9 + $0x4] sm:$0xf]
      %v4110 = vld [vmem:[#allocation9 + $0x8] sm:$0xf]
      %v4111 = vld [vmem:[#allocation9 + $0xc] sm:$0xf]
      %v4112 = vld [vmem:[#allocation9 + $0x10] sm:$0xf]
      %v4113 = vld [vmem:[#allocation9 + $0x14] sm:$0xf]
      %v4114 = vld [vmem:[#allocation9 + $0x18] sm:$0xf]
      %v4115 = vld [vmem:[#allocation9 + $0x1c] sm:$0xf]
      %v4116 = vld [vmem:[#allocation9 + $0x20] sm:$0xf]
      %v4117 = vld [vmem:[#allocation9 + $0x24] sm:$0xf]
      %v4118 = vld [vmem:[#allocation9 + $0x28] sm:$0xf]
      %v4119 = vld [vmem:[#allocation9 + $0x2c] sm:$0xf]
      %v4120 = vld [vmem:[#allocation9 + $0x30] sm:$0xf]
      %v4121 = vld [vmem:[#allocation9 + $0x34] sm:$0xf]
      %v4122 = vld [vmem:[#allocation9 + $0x38] sm:$0xf]
      %v4123 = vld [vmem:[#allocation9 + $0x3c] sm:$0xf]
      %v4124 = vld [vmem:[#allocation9 + $0x40] sm:$0xf]
      %v4125 = vld [vmem:[#allocation9 + $0x44] sm:$0xf]
      %v4126 = vld [vmem:[#allocation9 + $0x48] sm:$0xf]
      %v4127 = vld [vmem:[#allocation9 + $0x4c] sm:$0xf]
      %v4128 = vld [vmem:[#allocation9 + $0x50] sm:$0xf]
      %v4129 = vld [vmem:[#allocation9 + $0x54] sm:$0xf]
      %v4130 = vld [vmem:[#allocation9 + $0x58] sm:$0xf]
      %v4131 = vld [vmem:[#allocation9 + $0x5c] sm:$0xf]
      %v4132 = vld [vmem:[#allocation9 + $0x60] sm:$0xf]
      %v4133 = vld [vmem:[#allocation9 + $0x64] sm:$0xf]
      %v4134 = vld [vmem:[#allocation9 + $0x68] sm:$0xf]
      %v4135 = vld [vmem:[#allocation9 + $0x6c] sm:$0xf]
      %v4136 = vld [vmem:[#allocation9 + $0x70] sm:$0xf]
      %v4137 = vld [vmem:[#allocation9 + $0x74] sm:$0xf]
      %v4138 = vld [vmem:[#allocation9 + $0x78] sm:$0xf]
      %v4139 = vld [vmem:[#allocation9 + $0x7c] sm:$0xf]
      %v4140 = vld [vmem:[%s4] sm:$0x1]
      %v4142 = vlaneseq
      %v4143 = vshrl.u32 %v4142, 7
      %v4144 = vsub.s32 0, %v4143
      %v4145 = vrot.slane %v4140, %v4144
      %v4179 = vunpack.c.l.b16 %v4108
      %v4180 = vunpack.c.l.b16 %v4109
      %v4181 = vunpack.c.l.b16 %v4110
      %v4182 = vunpack.c.l.b16 %v4111
      %v4183 = vunpack.c.l.b16 %v4112
      %v4184 = vunpack.c.l.b16 %v4113
      %v4185 = vunpack.c.l.b16 %v4114
      %v4186 = vunpack.c.l.b16 %v4115
      %v4187 = vunpack.c.l.b16 %v4116
      %v4188 = vunpack.c.l.b16 %v4117
      %v4189 = vunpack.c.l.b16 %v4118
      %v4190 = vunpack.c.l.b16 %v4119
      %v4191 = vunpack.c.l.b16 %v4120
      %v4192 = vunpack.c.l.b16 %v4121
      %v4193 = vunpack.c.l.b16 %v4122
      %v4194 = vunpack.c.l.b16 %v4123
      %v4195 = vunpack.c.l.b16 %v4124
      %v4196 = vunpack.c.l.b16 %v4125
      %v4197 = vunpack.c.l.b16 %v4126
      %v4198 = vunpack.c.l.b16 %v4127
      %v4199 = vunpack.c.l.b16 %v4128
      %v4200 = vunpack.c.l.b16 %v4129
      %v4201 = vunpack.c.l.b16 %v4130
      %v4202 = vunpack.c.l.b16 %v4131
      %v4203 = vunpack.c.l.b16 %v4132
      %v4204 = vunpack.c.l.b16 %v4133
      %v4205 = vunpack.c.l.b16 %v4134
      %v4206 = vunpack.c.l.b16 %v4135
      %v4207 = vunpack.c.l.b16 %v4136
      %v4208 = vunpack.c.l.b16 %v4137
      %v4209 = vunpack.c.l.b16 %v4138
      %v4210 = vunpack.c.l.b16 %v4139
      %v4211 = vpack.c.b16 %v4180, %v4179
      %v4212 = vpack.c.b16 %v4182, %v4181
      %v4213 = vpack.c.b16 %v4184, %v4183
      %v4214 = vpack.c.b16 %v4186, %v4185
      %v4215 = vpack.c.b16 %v4188, %v4187
      %v4216 = vpack.c.b16 %v4190, %v4189
      %v4217 = vpack.c.b16 %v4192, %v4191
      %v4218 = vpack.c.b16 %v4194, %v4193
      %v4219 = vpack.c.b16 %v4196, %v4195
      %v4220 = vpack.c.b16 %v4198, %v4197
      %v4221 = vpack.c.b16 %v4200, %v4199
      %v4222 = vpack.c.b16 %v4202, %v4201
      %v4223 = vpack.c.b16 %v4204, %v4203
      %v4224 = vpack.c.b16 %v4206, %v4205
      %v4225 = vpack.c.b16 %v4208, %v4207
      %v4226 = vpack.c.b16 %v4210, %v4209
      %4243 = vmatprep.subr.bf16.mxu0 0
      %4244 = vmatpush1.bf16.msra.mxu0 %v4218
      %4245 = vmatprep.subr.bf16.mxu0 0
      %4246 = vmatpush1.bf16.msra.mxu0 %v4217
      %4247 = vmatprep.subr.bf16.mxu0 0
      %4248 = vmatpush1.bf16.msra.mxu0 %v4216
      %4249 = vmatprep.subr.bf16.mxu0 0
      %4250 = vmatpush1.bf16.msra.mxu0 %v4215
      %4251 = vmatprep.subr.bf16.mxu0 0
      %4252 = vmatpush1.bf16.msra.mxu0 %v4214
      %4253 = vmatprep.subr.bf16.mxu0 0
      %4254 = vmatpush1.bf16.msra.mxu0 %v4213
      %4255 = vmatprep.subr.bf16.mxu0 0
      %4256 = vmatpush1.bf16.msra.mxu0 %v4212
      %4257 = vmatprep.subr.bf16.mxu0 0
      %4258 = vmatpush1.bf16.msra.mxu0 %v4211
      %4259 = vmatprep.subr.bf16.mxu0 0
      %4260 = vmatpush2.bf16.msra.mxu0 %v4226
      %4261 = vmatprep.subr.bf16.mxu0 0
      %4262 = vmatpush2.bf16.msra.mxu0 %v4225
      %4263 = vmatprep.subr.bf16.mxu0 0
      %4264 = vmatpush2.bf16.msra.mxu0 %v4224
      %4265 = vmatprep.subr.bf16.mxu0 0
      %4266 = vmatpush2.bf16.msra.mxu0 %v4223
      %4267 = vmatprep.subr.bf16.mxu0 0
      %4268 = vmatpush2.bf16.msra.mxu0 %v4222
      %4269 = vmatprep.subr.bf16.mxu0 0
      %4270 = vmatpush2.bf16.msra.mxu0 %v4221
      %4271 = vmatprep.subr.bf16.mxu0 0
      %4272 = vmatpush2.bf16.msra.mxu0 %v4220
      %4273 = vmatprep.subr.bf16.mxu0 0
      %4274 = vmatpush2.bf16.msra.mxu0 %v4219
      %4275 = vmatprep.mubr.bf16.mxu0 %v4077
      %4276 = vmatmul.mubr.bf16.gmra.mxu0 %v4076
      %v4277 = vpop.f32.mrf.mxu0
      %v4278 = vadd.f32 %v4145, %v4277
      %v4279 = vpop.f32.mrf.mxu0
      %v4280 = vpop.f32.mrf.mxu0
      %v4281 = vadd.f32 %v4145, %v4280
      %v4282 = vpop.f32.mrf.mxu0
      %4283 = vmatprep.mubr.bf16.mxu0 %v4079
      %4284 = vmatmul.mubr.bf16.gmra.mxu0 %v4078
      %v4285 = vpop.f32.mrf.mxu0
      %v4286 = vadd.f32 %v4145, %v4285
      %v4287 = vpop.f32.mrf.mxu0
      %v4288 = vpop.f32.mrf.mxu0
      %v4289 = vadd.f32 %v4145, %v4288
      %v4290 = vpop.f32.mrf.mxu0
      %4291 = vmatprep.mubr.bf16.mxu0 %v4081
      %4292 = vmatmul.mubr.bf16.gmra.mxu0 %v4080
      %v4293 = vpop.f32.mrf.mxu0
      %v4294 = vadd.f32 %v4145, %v4293
      %v4295 = vpop.f32.mrf.mxu0
      %v4296 = vpop.f32.mrf.mxu0
      %v4297 = vadd.f32 %v4145, %v4296
      %v4298 = vpop.f32.mrf.mxu0
      %4299 = vmatprep.mubr.bf16.mxu0 %v4083
      %4300 = vmatmul.mubr.bf16.gmra.mxu0 %v4082
      %v4301 = vpop.f32.mrf.mxu0
      %v4302 = vadd.f32 %v4145, %v4301
      %v4303 = vpop.f32.mrf.mxu0
      %v4304 = vpop.f32.mrf.mxu0
      %v4305 = vadd.f32 %v4145, %v4304
      %v4306 = vpop.f32.mrf.mxu0
      %4307 = vmatprep.mubr.bf16.mxu0 %v4085
      %4308 = vmatmul.mubr.bf16.gmra.mxu0 %v4084
      %v4309 = vpop.f32.mrf.mxu0
      %v4310 = vadd.f32 %v4145, %v4309
      %v4311 = vpop.f32.mrf.mxu0
      %v4312 = vpop.f32.mrf.mxu0
      %v4313 = vadd.f32 %v4145, %v4312
      %v4314 = vpop.f32.mrf.mxu0
      %4315 = vmatprep.mubr.bf16.mxu0 %v4087
      %4316 = vmatmul.mubr.bf16.gmra.mxu0 %v4086
      %v4317 = vpop.f32.mrf.mxu0
      %v4318 = vadd.f32 %v4145, %v4317
      %v4319 = vpop.f32.mrf.mxu0
      %v4320 = vpop.f32.mrf.mxu0
      %v4321 = vadd.f32 %v4145, %v4320
      %v4322 = vpop.f32.mrf.mxu0
      %4323 = vmatprep.mubr.bf16.mxu0 %v4089
      %4324 = vmatmul.mubr.bf16.gmra.mxu0 %v4088
      %v4325 = vpop.f32.mrf.mxu0
      %v4326 = vadd.f32 %v4145, %v4325
      %v4327 = vpop.f32.mrf.mxu0
      %v4328 = vpop.f32.mrf.mxu0
      %v4329 = vadd.f32 %v4145, %v4328
      %v4330 = vpop.f32.mrf.mxu0
      %4331 = vmatprep.mubr.bf16.mxu0 %v4091
      %4332 = vmatmul.mubr.bf16.gmra.mxu0 %v4090
      %v4333 = vpop.f32.mrf.mxu0
      %v4334 = vadd.f32 %v4145, %v4333
      %v4335 = vpop.f32.mrf.mxu0
      %v4336 = vpop.f32.mrf.mxu0
      %v4337 = vadd.f32 %v4145, %v4336
      %v4338 = vpop.f32.mrf.mxu0
      %4339 = vmatprep.mubr.bf16.mxu0 %v4093
      %4340 = vmatmul.mubr.bf16.gmra.mxu0 %v4092
      %v4341 = vpop.f32.mrf.mxu0
      %v4342 = vadd.f32 %v4145, %v4341
      %v4343 = vpop.f32.mrf.mxu0
      %v4344 = vpop.f32.mrf.mxu0
      %v4345 = vadd.f32 %v4145, %v4344
      %v4346 = vpop.f32.mrf.mxu0
      %4347 = vmatprep.mubr.bf16.mxu0 %v4095
      %4348 = vmatmul.mubr.bf16.gmra.mxu0 %v4094
      %v4349 = vpop.f32.mrf.mxu0
      %v4350 = vadd.f32 %v4145, %v4349
      %v4351 = vpop.f32.mrf.mxu0
      %v4352 = vpop.f32.mrf.mxu0
      %v4353 = vadd.f32 %v4145, %v4352
      %v4354 = vpop.f32.mrf.mxu0
      %4355 = vmatprep.mubr.bf16.mxu0 %v4097
      %4356 = vmatmul.mubr.bf16.gmra.mxu0 %v4096
      %v4357 = vpop.f32.mrf.mxu0
      %v4358 = vadd.f32 %v4145, %v4357
      %v4359 = vpop.f32.mrf.mxu0
      %v4360 = vpop.f32.mrf.mxu0
      %v4361 = vadd.f32 %v4145, %v4360
      %v4362 = vpop.f32.mrf.mxu0
      %4363 = vmatprep.mubr.bf16.mxu0 %v4099
      %4364 = vmatmul.mubr.bf16.gmra.mxu0 %v4098
      %v4365 = vpop.f32.mrf.mxu0
      %v4366 = vadd.f32 %v4145, %v4365
      %v4367 = vpop.f32.mrf.mxu0
      %v4368 = vpop.f32.mrf.mxu0
      %v4369 = vadd.f32 %v4145, %v4368
      %v4370 = vpop.f32.mrf.mxu0
      %4371 = vmatprep.mubr.bf16.mxu0 %v4101
      %4372 = vmatmul.mubr.bf16.gmra.mxu0 %v4100
      %v4373 = vpop.f32.mrf.mxu0
      %v4374 = vadd.f32 %v4145, %v4373
      %v4375 = vpop.f32.mrf.mxu0
      %v4376 = vpop.f32.mrf.mxu0
      %v4377 = vadd.f32 %v4145, %v4376
      %v4378 = vpop.f32.mrf.mxu0
      %4379 = vmatprep.mubr.bf16.mxu0 %v4103
      %4380 = vmatmul.mubr.bf16.gmra.mxu0 %v4102
      %v4381 = vpop.f32.mrf.mxu0
      %v4382 = vadd.f32 %v4145, %v4381
      %v4383 = vpop.f32.mrf.mxu0
      %v4384 = vpop.f32.mrf.mxu0
      %v4385 = vadd.f32 %v4145, %v4384
      %v4386 = vpop.f32.mrf.mxu0
      %4387 = vmatprep.mubr.bf16.mxu0 %v4105
      %4388 = vmatmul.mubr.bf16.gmra.mxu0 %v4104
      %v4389 = vpop.f32.mrf.mxu0
      %v4390 = vadd.f32 %v4145, %v4389
      %v4391 = vpop.f32.mrf.mxu0
      %v4392 = vpop.f32.mrf.mxu0
      %v4393 = vadd.f32 %v4145, %v4392
      %v4394 = vpop.f32.mrf.mxu0
      %4395 = vmatprep.mubr.bf16.mxu0 %v4107
      %4396 = vmatmul.mubr.bf16.gmra.mxu0 %v4106
      %v4397 = vpop.f32.mrf.mxu0
      %v4398 = vadd.f32 %v4145, %v4397
      %v4399 = vpop.f32.mrf.mxu0
      %v4400 = vpop.f32.mrf.mxu0
      %v4401 = vadd.f32 %v4145, %v4400
      %v4402 = vpop.f32.mrf.mxu0
      %4403 = vdwg.mxu0
      %v4404 = vtanh.pop %v4278
      %v4405 = vtanh.pop %v4281
      %v4406 = vtanh.pop %v4286
      %v4407 = vtanh.pop %v4289
      %v4408 = vtanh.pop %v4294
      %v4409 = vtanh.pop %v4297
      %v4410 = vtanh.pop %v4302
      %v4411 = vtanh.pop %v4305
      %v4412 = vtanh.pop %v4310
      %v4413 = vtanh.pop %v4313
      %v4414 = vtanh.pop %v4318
      %v4415 = vtanh.pop %v4321
      %v4416 = vtanh.pop %v4326
      %v4417 = vtanh.pop %v4329
      %v4418 = vtanh.pop %v4334
      %v4419 = vtanh.pop %v4337
      %v4420 = vtanh.pop %v4342
      %v4421 = vtanh.pop %v4345
      %v4422 = vtanh.pop %v4350
      %v4423 = vtanh.pop %v4353
      %v4424 = vtanh.pop %v4358
      %v4425 = vtanh.pop %v4361
      %v4426 = vtanh.pop %v4366
      %v4427 = vtanh.pop %v4369
      %v4428 = vtanh.pop %v4374
      %v4429 = vtanh.pop %v4377
      %v4430 = vtanh.pop %v4382
      %v4431 = vtanh.pop %v4385
      %v4432 = vtanh.pop %v4390
      %v4433 = vtanh.pop %v4393
      %v4434 = vtanh.pop %v4398
      %v4435 = vtanh.pop %v4401
      %v4436 = vpack.c.bf16 %v4405, %v4404
      %v4437 = vpack.c.bf16 %v4407, %v4406
      %v4438 = vpack.c.bf16 %v4409, %v4408
      %v4439 = vpack.c.bf16 %v4411, %v4410
      %v4440 = vpack.c.bf16 %v4413, %v4412
      %v4441 = vpack.c.bf16 %v4415, %v4414
      %v4442 = vpack.c.bf16 %v4417, %v4416
      %v4443 = vpack.c.bf16 %v4419, %v4418
      %v4444 = vpack.c.bf16 %v4421, %v4420
      %v4445 = vpack.c.bf16 %v4423, %v4422
      %v4446 = vpack.c.bf16 %v4425, %v4424
      %v4447 = vpack.c.bf16 %v4427, %v4426
      %v4448 = vpack.c.bf16 %v4429, %v4428
      %v4449 = vpack.c.bf16 %v4431, %v4430
      %v4450 = vpack.c.bf16 %v4433, %v4432
      %v4451 = vpack.c.bf16 %v4435, %v4434
      %v4452 = vld [vmem:[#allocation10] sm:$0xff]
      %v4453 = vld [vmem:[#allocation10 + $0x8] sm:$0xff]
      %v4454 = vld [vmem:[#allocation10 + $0x10] sm:$0xff]
      %v4455 = vld [vmem:[#allocation10 + $0x18] sm:$0xff]
      %v4456 = vld [vmem:[#allocation10 + $0x20] sm:$0xff]
      %v4457 = vld [vmem:[#allocation10 + $0x28] sm:$0xff]
      %v4458 = vld [vmem:[#allocation10 + $0x30] sm:$0xff]
      %v4459 = vld [vmem:[#allocation10 + $0x38] sm:$0xff]
      %v4460 = vld [vmem:[#allocation10 + $0x40] sm:$0xff]
      %v4461 = vld [vmem:[#allocation10 + $0x48] sm:$0xff]
      %v4462 = vld [vmem:[#allocation10 + $0x50] sm:$0xff]
      %v4463 = vld [vmem:[#allocation10 + $0x58] sm:$0xff]
      %v4464 = vld [vmem:[#allocation10 + $0x60] sm:$0xff]
      %v4465 = vld [vmem:[#allocation10 + $0x68] sm:$0xff]
      %v4466 = vld [vmem:[#allocation10 + $0x70] sm:$0xff]
      %v4467 = vld [vmem:[#allocation10 + $0x78] sm:$0xff]
      %v4468 = vld [vmem:[%s6] sm:$0x3]
      %v4470 = vlaneseq
      %v4471 = vshrl.u32 %v4470, 7
      %v4472 = vsub.s32 0, %v4471
      %v4473 = vrot.slane %v4468, %v4472
      %v4474 = vlaneseq
      %v4475 = vshrl.u32 %v4474, 7
      %v4476 = vsub.s32 1, %v4475
      %v4477 = vrot.slane %v4468, %v4476
      %v4496 = vunpack.c.l.b16 %v4452
      %v4497 = vunpack.c.h.b16 %v4452
      %v4498 = vunpack.c.l.b16 %v4453
      %v4499 = vunpack.c.h.b16 %v4453
      %v4500 = vunpack.c.l.b16 %v4454
      %v4501 = vunpack.c.h.b16 %v4454
      %v4502 = vunpack.c.l.b16 %v4455
      %v4503 = vunpack.c.h.b16 %v4455
      %v4504 = vunpack.c.l.b16 %v4456
      %v4505 = vunpack.c.h.b16 %v4456
      %v4506 = vunpack.c.l.b16 %v4457
      %v4507 = vunpack.c.h.b16 %v4457
      %v4508 = vunpack.c.l.b16 %v4458
      %v4509 = vunpack.c.h.b16 %v4458
      %v4510 = vunpack.c.l.b16 %v4459
      %v4511 = vunpack.c.h.b16 %v4459
      %v4512 = vunpack.c.l.b16 %v4460
      %v4513 = vunpack.c.h.b16 %v4460
      %v4514 = vunpack.c.l.b16 %v4461
      %v4515 = vunpack.c.h.b16 %v4461
      %v4516 = vunpack.c.l.b16 %v4462
      %v4517 = vunpack.c.h.b16 %v4462
      %v4518 = vunpack.c.l.b16 %v4463
      %v4519 = vunpack.c.h.b16 %v4463
      %v4520 = vunpack.c.l.b16 %v4464
      %v4521 = vunpack.c.h.b16 %v4464
      %v4522 = vunpack.c.l.b16 %v4465
      %v4523 = vunpack.c.h.b16 %v4465
      %v4524 = vunpack.c.l.b16 %v4466
      %v4525 = vunpack.c.h.b16 %v4466
      %v4526 = vunpack.c.l.b16 %v4467
      %v4527 = vunpack.c.h.b16 %v4467
      %v4528 = vpack.c.b16 %v4498, %v4496
      %v4529 = vpack.c.b16 %v4499, %v4497
      %v4530 = vpack.c.b16 %v4502, %v4500
      %v4531 = vpack.c.b16 %v4503, %v4501
      %v4532 = vpack.c.b16 %v4506, %v4504
      %v4533 = vpack.c.b16 %v4507, %v4505
      %v4534 = vpack.c.b16 %v4510, %v4508
      %v4535 = vpack.c.b16 %v4511, %v4509
      %v4536 = vpack.c.b16 %v4514, %v4512
      %v4537 = vpack.c.b16 %v4515, %v4513
      %v4538 = vpack.c.b16 %v4518, %v4516
      %v4539 = vpack.c.b16 %v4519, %v4517
      %v4540 = vpack.c.b16 %v4522, %v4520
      %v4541 = vpack.c.b16 %v4523, %v4521
      %v4542 = vpack.c.b16 %v4526, %v4524
      %v4543 = vpack.c.b16 %v4527, %v4525
      %4560 = vmatprep.subr.bf16.mxu0 %v4543
      %4561 = vmatpush1.bf16.msra.mxu0 %v4542
      %4562 = vmatprep.subr.bf16.mxu0 %v4541
      %4563 = vmatpush1.bf16.msra.mxu0 %v4540
      %4564 = vmatprep.subr.bf16.mxu0 %v4539
      %4565 = vmatpush1.bf16.msra.mxu0 %v4538
      %4566 = vmatprep.subr.bf16.mxu0 %v4537
      %4567 = vmatpush1.bf16.msra.mxu0 %v4536
      %4568 = vmatprep.subr.bf16.mxu0 %v4535
      %4569 = vmatpush1.bf16.msra.mxu0 %v4534
      %4570 = vmatprep.subr.bf16.mxu0 %v4533
      %4571 = vmatpush1.bf16.msra.mxu0 %v4532
      %4572 = vmatprep.subr.bf16.mxu0 %v4531
      %4573 = vmatpush1.bf16.msra.mxu0 %v4530
      %4574 = vmatprep.subr.bf16.mxu0 %v4529
      %4575 = vmatpush1.bf16.msra.mxu0 %v4528
      %4576 = vmatprep.subr.bf16.mxu0 0
      %4577 = vmatpush2.bf16.msra.mxu0 0
      %4578 = vmatprep.subr.bf16.mxu0 0
      %4579 = vmatpush2.bf16.msra.mxu0 0
      %4580 = vmatprep.subr.bf16.mxu0 0
      %4581 = vmatpush2.bf16.msra.mxu0 0
      %4582 = vmatprep.subr.bf16.mxu0 0
      %4583 = vmatpush2.bf16.msra.mxu0 0
      %4584 = vmatprep.subr.bf16.mxu0 0
      %4585 = vmatpush2.bf16.msra.mxu0 0
      %4586 = vmatprep.subr.bf16.mxu0 0
      %4587 = vmatpush2.bf16.msra.mxu0 0
      %4588 = vmatprep.subr.bf16.mxu0 0
      %4589 = vmatpush2.bf16.msra.mxu0 0
      %4590 = vmatprep.subr.bf16.mxu0 0
      %4591 = vmatpush2.bf16.msra.mxu0 0
      %4592 = vmatprep.mubr.bf16.mxu0 0
      %4593 = vmatmul.mubr.bf16.gmra.mxu0 %v4436
      %v4594 = vpop.f32.mrf.mxu0
      %v4595 = vadd.f32 %v4473, %v4594
      %v4596 = vpop.f32.mrf.mxu0
      %v4597 = vadd.f32 %v4477, %v4596
      %v4598 = vpop.f32.mrf.mxu0
      %v4599 = vadd.f32 %v4473, %v4598
      %v4600 = vpop.f32.mrf.mxu0
      %v4601 = vadd.f32 %v4477, %v4600
      %4602 = vmatprep.mubr.bf16.mxu0 0
      %4603 = vmatmul.mubr.bf16.gmra.mxu0 %v4437
      %v4604 = vpop.f32.mrf.mxu0
      %v4605 = vadd.f32 %v4473, %v4604
      %v4606 = vpop.f32.mrf.mxu0
      %v4607 = vadd.f32 %v4477, %v4606
      %v4608 = vpop.f32.mrf.mxu0
      %v4609 = vadd.f32 %v4473, %v4608
      %v4610 = vpop.f32.mrf.mxu0
      %v4611 = vadd.f32 %v4477, %v4610
      %4612 = vmatprep.mubr.bf16.mxu0 0
      %4613 = vmatmul.mubr.bf16.gmra.mxu0 %v4438
      %v4614 = vpop.f32.mrf.mxu0
      %v4615 = vadd.f32 %v4473, %v4614
      %v4616 = vpop.f32.mrf.mxu0
      %v4617 = vadd.f32 %v4477, %v4616
      %v4618 = vpop.f32.mrf.mxu0
      %v4619 = vadd.f32 %v4473, %v4618
      %v4620 = vpop.f32.mrf.mxu0
      %v4621 = vadd.f32 %v4477, %v4620
      %4622 = vmatprep.mubr.bf16.mxu0 0
      %4623 = vmatmul.mubr.bf16.gmra.mxu0 %v4439
      %v4624 = vpop.f32.mrf.mxu0
      %v4625 = vadd.f32 %v4473, %v4624
      %v4626 = vpop.f32.mrf.mxu0
      %v4627 = vadd.f32 %v4477, %v4626
      %v4628 = vpop.f32.mrf.mxu0
      %v4629 = vadd.f32 %v4473, %v4628
      %v4630 = vpop.f32.mrf.mxu0
      %v4631 = vadd.f32 %v4477, %v4630
      %4632 = vmatprep.mubr.bf16.mxu0 0
      %4633 = vmatmul.mubr.bf16.gmra.mxu0 %v4440
      %v4634 = vpop.f32.mrf.mxu0
      %v4635 = vadd.f32 %v4473, %v4634
      %v4636 = vpop.f32.mrf.mxu0
      %v4637 = vadd.f32 %v4477, %v4636
      %v4638 = vpop.f32.mrf.mxu0
      %v4639 = vadd.f32 %v4473, %v4638
      %v4640 = vpop.f32.mrf.mxu0
      %v4641 = vadd.f32 %v4477, %v4640
      %4642 = vmatprep.mubr.bf16.mxu0 0
      %4643 = vmatmul.mubr.bf16.gmra.mxu0 %v4441
      %v4644 = vpop.f32.mrf.mxu0
      %v4645 = vadd.f32 %v4473, %v4644
      %v4646 = vpop.f32.mrf.mxu0
      %v4647 = vadd.f32 %v4477, %v4646
      %v4648 = vpop.f32.mrf.mxu0
      %v4649 = vadd.f32 %v4473, %v4648
      %v4650 = vpop.f32.mrf.mxu0
      %v4651 = vadd.f32 %v4477, %v4650
      %4652 = vmatprep.mubr.bf16.mxu0 0
      %4653 = vmatmul.mubr.bf16.gmra.mxu0 %v4442
      %v4654 = vpop.f32.mrf.mxu0
      %v4655 = vadd.f32 %v4473, %v4654
      %v4656 = vpop.f32.mrf.mxu0
      %v4657 = vadd.f32 %v4477, %v4656
      %v4658 = vpop.f32.mrf.mxu0
      %v4659 = vadd.f32 %v4473, %v4658
      %v4660 = vpop.f32.mrf.mxu0
      %v4661 = vadd.f32 %v4477, %v4660
      %4662 = vmatprep.mubr.bf16.mxu0 0
      %4663 = vmatmul.mubr.bf16.gmra.mxu0 %v4443
      %v4664 = vpop.f32.mrf.mxu0
      %v4665 = vadd.f32 %v4473, %v4664
      %v4666 = vpop.f32.mrf.mxu0
      %v4667 = vadd.f32 %v4477, %v4666
      %v4668 = vpop.f32.mrf.mxu0
      %v4669 = vadd.f32 %v4473, %v4668
      %v4670 = vpop.f32.mrf.mxu0
      %v4671 = vadd.f32 %v4477, %v4670
      %4672 = vmatprep.mubr.bf16.mxu0 0
      %4673 = vmatmul.mubr.bf16.gmra.mxu0 %v4444
      %v4674 = vpop.f32.mrf.mxu0
      %v4675 = vadd.f32 %v4473, %v4674
      %v4676 = vpop.f32.mrf.mxu0
      %v4677 = vadd.f32 %v4477, %v4676
      %v4678 = vpop.f32.mrf.mxu0
      %v4679 = vadd.f32 %v4473, %v4678
      %v4680 = vpop.f32.mrf.mxu0
      %v4681 = vadd.f32 %v4477, %v4680
      %4682 = vmatprep.mubr.bf16.mxu0 0
      %4683 = vmatmul.mubr.bf16.gmra.mxu0 %v4445
      %v4684 = vpop.f32.mrf.mxu0
      %v4685 = vadd.f32 %v4473, %v4684
      %v4686 = vpop.f32.mrf.mxu0
      %v4687 = vadd.f32 %v4477, %v4686
      %v4688 = vpop.f32.mrf.mxu0
      %v4689 = vadd.f32 %v4473, %v4688
      %v4690 = vpop.f32.mrf.mxu0
      %v4691 = vadd.f32 %v4477, %v4690
      %4692 = vmatprep.mubr.bf16.mxu0 0
      %4693 = vmatmul.mubr.bf16.gmra.mxu0 %v4446
      %v4694 = vpop.f32.mrf.mxu0
      %v4695 = vadd.f32 %v4473, %v4694
      %v4696 = vpop.f32.mrf.mxu0
      %v4697 = vadd.f32 %v4477, %v4696
      %v4698 = vpop.f32.mrf.mxu0
      %v4699 = vadd.f32 %v4473, %v4698
      %v4700 = vpop.f32.mrf.mxu0
      %v4701 = vadd.f32 %v4477, %v4700
      %4702 = vmatprep.mubr.bf16.mxu0 0
      %4703 = vmatmul.mubr.bf16.gmra.mxu0 %v4447
      %v4704 = vpop.f32.mrf.mxu0
      %v4705 = vadd.f32 %v4473, %v4704
      %v4706 = vpop.f32.mrf.mxu0
      %v4707 = vadd.f32 %v4477, %v4706
      %v4708 = vpop.f32.mrf.mxu0
      %v4709 = vadd.f32 %v4473, %v4708
      %v4710 = vpop.f32.mrf.mxu0
      %v4711 = vadd.f32 %v4477, %v4710
      %4712 = vmatprep.mubr.bf16.mxu0 0
      %4713 = vmatmul.mubr.bf16.gmra.mxu0 %v4448
      %v4714 = vpop.f32.mrf.mxu0
      %v4715 = vadd.f32 %v4473, %v4714
      %v4716 = vpop.f32.mrf.mxu0
      %v4717 = vadd.f32 %v4477, %v4716
      %v4718 = vpop.f32.mrf.mxu0
      %v4719 = vadd.f32 %v4473, %v4718
      %v4720 = vpop.f32.mrf.mxu0
      %v4721 = vadd.f32 %v4477, %v4720
      %4722 = vmatprep.mubr.bf16.mxu0 0
      %4723 = vmatmul.mubr.bf16.gmra.mxu0 %v4449
      %v4724 = vpop.f32.mrf.mxu0
      %v4725 = vadd.f32 %v4473, %v4724
      %v4726 = vpop.f32.mrf.mxu0
      %v4727 = vadd.f32 %v4477, %v4726
      %v4728 = vpop.f32.mrf.mxu0
      %v4729 = vadd.f32 %v4473, %v4728
      %v4730 = vpop.f32.mrf.mxu0
      %v4731 = vadd.f32 %v4477, %v4730
      %4732 = vmatprep.mubr.bf16.mxu0 0
      %4733 = vmatmul.mubr.bf16.gmra.mxu0 %v4450
      %v4734 = vpop.f32.mrf.mxu0
      %v4735 = vadd.f32 %v4473, %v4734
      %v4736 = vpop.f32.mrf.mxu0
      %v4737 = vadd.f32 %v4477, %v4736
      %v4738 = vpop.f32.mrf.mxu0
      %v4739 = vadd.f32 %v4473, %v4738
      %v4740 = vpop.f32.mrf.mxu0
      %v4741 = vadd.f32 %v4477, %v4740
      %4742 = vmatprep.mubr.bf16.mxu0 0
      %4743 = vmatmul.mubr.bf16.gmra.mxu0 %v4451
      %v4744 = vpop.f32.mrf.mxu0
      %v4745 = vadd.f32 %v4473, %v4744
      %v4746 = vpop.f32.mrf.mxu0
      %v4747 = vadd.f32 %v4477, %v4746
      %v4748 = vpop.f32.mrf.mxu0
      %v4749 = vadd.f32 %v4473, %v4748
      %v4750 = vpop.f32.mrf.mxu0
      %v4751 = vadd.f32 %v4477, %v4750
      %4752 = vdwg.mxu0
      %v4753 = vtanh.pop %v4595
      %v4754 = vtanh.pop %v4597
      %v4755 = vtanh.pop %v4599
      %v4756 = vtanh.pop %v4601
      %v4757 = vtanh.pop %v4605
      %v4758 = vtanh.pop %v4607
      %v4759 = vtanh.pop %v4609
      %v4760 = vtanh.pop %v4611
      %v4761 = vtanh.pop %v4615
      %v4762 = vtanh.pop %v4617
      %v4763 = vtanh.pop %v4619
      %v4764 = vtanh.pop %v4621
      %v4765 = vtanh.pop %v4625
      %v4766 = vtanh.pop %v4627
      %v4767 = vtanh.pop %v4629
      %v4768 = vtanh.pop %v4631
      %v4769 = vtanh.pop %v4635
      %v4770 = vtanh.pop %v4637
      %v4771 = vtanh.pop %v4639
      %v4772 = vtanh.pop %v4641
      %v4773 = vtanh.pop %v4645
      %v4774 = vtanh.pop %v4647
      %v4775 = vtanh.pop %v4649
      %v4776 = vtanh.pop %v4651
      %v4777 = vtanh.pop %v4655
      %v4778 = vtanh.pop %v4657
      %v4779 = vtanh.pop %v4659
      %v4780 = vtanh.pop %v4661
      %v4781 = vtanh.pop %v4665
      %v4782 = vtanh.pop %v4667
      %v4783 = vtanh.pop %v4669
      %v4784 = vtanh.pop %v4671
      %v4785 = vtanh.pop %v4675
      %v4786 = vtanh.pop %v4677
      %v4787 = vtanh.pop %v4679
      %v4788 = vtanh.pop %v4681
      %v4789 = vtanh.pop %v4685
      %v4790 = vtanh.pop %v4687
      %v4791 = vtanh.pop %v4689
      %v4792 = vtanh.pop %v4691
      %v4793 = vtanh.pop %v4695
      %v4794 = vtanh.pop %v4697
      %v4795 = vtanh.pop %v4699
      %v4796 = vtanh.pop %v4701
      %v4797 = vtanh.pop %v4705
      %v4798 = vtanh.pop %v4707
      %v4799 = vtanh.pop %v4709
      %v4800 = vtanh.pop %v4711
      %v4801 = vtanh.pop %v4715
      %v4802 = vtanh.pop %v4717
      %v4803 = vtanh.pop %v4719
      %v4804 = vtanh.pop %v4721
      %v4805 = vtanh.pop %v4725
      %v4806 = vtanh.pop %v4727
      %v4807 = vtanh.pop %v4729
      %v4808 = vtanh.pop %v4731
      %v4809 = vtanh.pop %v4735
      %v4810 = vtanh.pop %v4737
      %v4811 = vtanh.pop %v4739
      %v4812 = vtanh.pop %v4741
      %v4813 = vtanh.pop %v4745
      %v4814 = vtanh.pop %v4747
      %v4815 = vtanh.pop %v4749
      %v4816 = vtanh.pop %v4751
      %v4817 = vpack.c.bf16 %v4755, %v4753
      %v4818 = vpack.c.bf16 %v4756, %v4754
      %v4819 = vpack.c.bf16 %v4759, %v4757
      %v4820 = vpack.c.bf16 %v4760, %v4758
      %v4821 = vpack.c.bf16 %v4763, %v4761
      %v4822 = vpack.c.bf16 %v4764, %v4762
      %v4823 = vpack.c.bf16 %v4767, %v4765
      %v4824 = vpack.c.bf16 %v4768, %v4766
      %v4825 = vpack.c.bf16 %v4771, %v4769
      %v4826 = vpack.c.bf16 %v4772, %v4770
      %v4827 = vpack.c.bf16 %v4775, %v4773
      %v4828 = vpack.c.bf16 %v4776, %v4774
      %v4829 = vpack.c.bf16 %v4779, %v4777
      %v4830 = vpack.c.bf16 %v4780, %v4778
      %v4831 = vpack.c.bf16 %v4783, %v4781
      %v4832 = vpack.c.bf16 %v4784, %v4782
      %v4833 = vpack.c.bf16 %v4787, %v4785
      %v4834 = vpack.c.bf16 %v4788, %v4786
      %v4835 = vpack.c.bf16 %v4791, %v4789
      %v4836 = vpack.c.bf16 %v4792, %v4790
      %v4837 = vpack.c.bf16 %v4795, %v4793
      %v4838 = vpack.c.bf16 %v4796, %v4794
      %v4839 = vpack.c.bf16 %v4799, %v4797
      %v4840 = vpack.c.bf16 %v4800, %v4798
      %v4841 = vpack.c.bf16 %v4803, %v4801
      %v4842 = vpack.c.bf16 %v4804, %v4802
      %v4843 = vpack.c.bf16 %v4807, %v4805
      %v4844 = vpack.c.bf16 %v4808, %v4806
      %v4845 = vpack.c.bf16 %v4811, %v4809
      %v4846 = vpack.c.bf16 %v4812, %v4810
      %v4847 = vpack.c.bf16 %v4815, %v4813
      %v4848 = vpack.c.bf16 %v4816, %v4814
      %v4881 = vunpack.c.l.b16 %v4817
      %v4882 = vunpack.c.l.b16 %v4818
      %v4883 = vunpack.c.h.b16 %v4817
      %v4884 = vunpack.c.h.b16 %v4818
      %v4885 = vunpack.c.l.b16 %v4819
      %v4886 = vunpack.c.l.b16 %v4820
      %v4887 = vunpack.c.h.b16 %v4819
      %v4888 = vunpack.c.h.b16 %v4820
      %v4889 = vunpack.c.l.b16 %v4821
      %v4890 = vunpack.c.l.b16 %v4822
      %v4891 = vunpack.c.h.b16 %v4821
      %v4892 = vunpack.c.h.b16 %v4822
      %v4893 = vunpack.c.l.b16 %v4823
      %v4894 = vunpack.c.l.b16 %v4824
      %v4895 = vunpack.c.h.b16 %v4823
      %v4896 = vunpack.c.h.b16 %v4824
      %v4897 = vunpack.c.l.b16 %v4825
      %v4898 = vunpack.c.l.b16 %v4826
      %v4899 = vunpack.c.h.b16 %v4825
      %v4900 = vunpack.c.h.b16 %v4826
      %v4901 = vunpack.c.l.b16 %v4827
      %v4902 = vunpack.c.l.b16 %v4828
      %v4903 = vunpack.c.h.b16 %v4827
      %v4904 = vunpack.c.h.b16 %v4828
      %v4905 = vunpack.c.l.b16 %v4829
      %v4906 = vunpack.c.l.b16 %v4830
      %v4907 = vunpack.c.h.b16 %v4829
      %v4908 = vunpack.c.h.b16 %v4830
      %v4909 = vunpack.c.l.b16 %v4831
      %v4910 = vunpack.c.l.b16 %v4832
      %v4911 = vunpack.c.h.b16 %v4831
      %v4912 = vunpack.c.h.b16 %v4832
      %v4913 = vunpack.c.l.b16 %v4833
      %v4914 = vunpack.c.l.b16 %v4834
      %v4915 = vunpack.c.h.b16 %v4833
      %v4916 = vunpack.c.h.b16 %v4834
      %v4917 = vunpack.c.l.b16 %v4835
      %v4918 = vunpack.c.l.b16 %v4836
      %v4919 = vunpack.c.h.b16 %v4835
      %v4920 = vunpack.c.h.b16 %v4836
      %v4921 = vunpack.c.l.b16 %v4837
      %v4922 = vunpack.c.l.b16 %v4838
      %v4923 = vunpack.c.h.b16 %v4837
      %v4924 = vunpack.c.h.b16 %v4838
      %v4925 = vunpack.c.l.b16 %v4839
      %v4926 = vunpack.c.l.b16 %v4840
      %v4927 = vunpack.c.h.b16 %v4839
      %v4928 = vunpack.c.h.b16 %v4840
      %v4929 = vunpack.c.l.b16 %v4841
      %v4930 = vunpack.c.l.b16 %v4842
      %v4931 = vunpack.c.h.b16 %v4841
      %v4932 = vunpack.c.h.b16 %v4842
      %v4933 = vunpack.c.l.b16 %v4843
      %v4934 = vunpack.c.l.b16 %v4844
      %v4935 = vunpack.c.h.b16 %v4843
      %v4936 = vunpack.c.h.b16 %v4844
      %v4937 = vunpack.c.l.b16 %v4845
      %v4938 = vunpack.c.l.b16 %v4846
      %v4939 = vunpack.c.h.b16 %v4845
      %v4940 = vunpack.c.h.b16 %v4846
      %v4941 = vunpack.c.l.b16 %v4847
      %v4942 = vunpack.c.l.b16 %v4848
      %v4943 = vunpack.c.h.b16 %v4847
      %v4944 = vunpack.c.h.b16 %v4848
      %v4945 = vpack.c.b16 %v4882, %v4881
      %v4946 = vpack.c.b16 %v4884, %v4883
      %v4947 = vpack.c.b16 %v4886, %v4885
      %v4948 = vpack.c.b16 %v4888, %v4887
      %v4949 = vpack.c.b16 %v4890, %v4889
      %v4950 = vpack.c.b16 %v4892, %v4891
      %v4951 = vpack.c.b16 %v4894, %v4893
      %v4952 = vpack.c.b16 %v4896, %v4895
      %v4953 = vpack.c.b16 %v4898, %v4897
      %v4954 = vpack.c.b16 %v4900, %v4899
      %v4955 = vpack.c.b16 %v4902, %v4901
      %v4956 = vpack.c.b16 %v4904, %v4903
      %v4957 = vpack.c.b16 %v4906, %v4905
      %v4958 = vpack.c.b16 %v4908, %v4907
      %v4959 = vpack.c.b16 %v4910, %v4909
      %v4960 = vpack.c.b16 %v4912, %v4911
      %v4961 = vpack.c.b16 %v4914, %v4913
      %v4962 = vpack.c.b16 %v4916, %v4915
      %v4963 = vpack.c.b16 %v4918, %v4917
      %v4964 = vpack.c.b16 %v4920, %v4919
      %v4965 = vpack.c.b16 %v4922, %v4921
      %v4966 = vpack.c.b16 %v4924, %v4923
      %v4967 = vpack.c.b16 %v4926, %v4925
      %v4968 = vpack.c.b16 %v4928, %v4927
      %v4969 = vpack.c.b16 %v4930, %v4929
      %v4970 = vpack.c.b16 %v4932, %v4931
      %v4971 = vpack.c.b16 %v4934, %v4933
      %v4972 = vpack.c.b16 %v4936, %v4935
      %v4973 = vpack.c.b16 %v4938, %v4937
      %v4974 = vpack.c.b16 %v4940, %v4939
      %v4975 = vpack.c.b16 %v4942, %v4941
      %v4976 = vpack.c.b16 %v4944, %v4943
      %5009 = vst [vmem:[#allocation12] sm:$0xff] %v4945
      %5010 = vst [vmem:[#allocation12 + $0x8] sm:$0xff] %v4946
      %5011 = vst [vmem:[#allocation12 + $0x10] sm:$0xff] %v4947
      %5012 = vst [vmem:[#allocation12 + $0x18] sm:$0xff] %v4948
      %5013 = vst [vmem:[#allocation12 + $0x20] sm:$0xff] %v4949
      %5014 = vst [vmem:[#allocation12 + $0x28] sm:$0xff] %v4950
      %5015 = vst [vmem:[#allocation12 + $0x30] sm:$0xff] %v4951
      %5016 = vst [vmem:[#allocation12 + $0x38] sm:$0xff] %v4952
      %5017 = vst [vmem:[#allocation12 + $0x40] sm:$0xff] %v4953
      %5018 = vst [vmem:[#allocation12 + $0x48] sm:$0xff] %v4954
      %5019 = vst [vmem:[#allocation12 + $0x50] sm:$0xff] %v4955
      %5020 = vst [vmem:[#allocation12 + $0x58] sm:$0xff] %v4956
      %5021 = vst [vmem:[#allocation12 + $0x60] sm:$0xff] %v4957
      %5022 = vst [vmem:[#allocation12 + $0x68] sm:$0xff] %v4958
      %5023 = vst [vmem:[#allocation12 + $0x70] sm:$0xff] %v4959
      %5024 = vst [vmem:[#allocation12 + $0x78] sm:$0xff] %v4960
      %5025 = vst [vmem:[#allocation12 + $0x80] sm:$0xff] %v4961
      %5026 = vst [vmem:[#allocation12 + $0x88] sm:$0xff] %v4962
      %5027 = vst [vmem:[#allocation12 + $0x90] sm:$0xff] %v4963
      %5028 = vst [vmem:[#allocation12 + $0x98] sm:$0xff] %v4964
      %5029 = vst [vmem:[#allocation12 + $0xa0] sm:$0xff] %v4965
      %5030 = vst [vmem:[#allocation12 + $0xa8] sm:$0xff] %v4966
      %5031 = vst [vmem:[#allocation12 + $0xb0] sm:$0xff] %v4967
      %5032 = vst [vmem:[#allocation12 + $0xb8] sm:$0xff] %v4968
      %5033 = vst [vmem:[#allocation12 + $0xc0] sm:$0xff] %v4969
      %5034 = vst [vmem:[#allocation12 + $0xc8] sm:$0xff] %v4970
      %5035 = vst [vmem:[#allocation12 + $0xd0] sm:$0xff] %v4971
      %5036 = vst [vmem:[#allocation12 + $0xd8] sm:$0xff] %v4972
      %5037 = vst [vmem:[#allocation12 + $0xe0] sm:$0xff] %v4973
      %5038 = vst [vmem:[#allocation12 + $0xe8] sm:$0xff] %v4974
      %5039 = vst [vmem:[#allocation12 + $0xf0] sm:$0xff] %v4975
      %5040 = vst [vmem:[#allocation12 + $0xf8] sm:$0xff] %v4976
    $region53: #{tpu_custom_call.1} parent=1 // pred_fallthru
      _
    // Predicated region
    $region54: #{tpu_custom_call.1} parent=1 // pred_check
      _
    $region55: #{tpu_custom_call.1} parent=1 // pred_check_branch
      %5042 = sbr.rel (0) target = $region57
    $region56: #{tpu_custom_call.1} parent=1 // pred_region
      %s5044 = ssub.s32 4096, 4096
      %5045 = vsyncadd [#allocation6], %s5044
      %s5046 = sshll.u32 [#allocation12], 4
      %s5047 = int_to_ptr.vmem [resolvable:$true] %s5046
      %5052 = dma.vmem_to_hbm [thread:$0]  %s5047, 4096, %s7, [#allocation6], 128, 128, 8
    $region57: #{tpu_custom_call.1} parent=1 // pred_fallthru
      _
    // Predicated region
    $region58: #{tpu_custom_call.1} parent=1 // pred_check
      _
    $region59: #{tpu_custom_call.1} parent=1 // pred_check_branch
      %5054 = sbr.rel (0) target = $region61
    $region60: #{tpu_custom_call.1} parent=1 // pred_region
      %5055 = dma.done [#allocation6], 4096
    $region61: #{tpu_custom_call.1} parent=1 // pred_fallthru
      _
    %5056 = vsyncpa [#allocation5], 1
    %5057 = vsyncpa [#allocation8], 1
    %5058 = vsyncpa [#allocation11], 1
    %5059 = vsyncpa [#allocation6], 1

</llo_original>
